<compile_context>
chip_gen: v6e
topology: v6e:2x2x1
jax: 0.10.0
libtpu: 0.0.40
codegen_flags: <defaults>
</compile_context>

<pallas_src>
import jax
import jax.numpy as jnp
from jax import lax
from jax.experimental import pallas as pl
from jax.experimental.pallas import tpu as pltpu


def _lrelu(v):
    return jnp.where(v > 0, v, 0.01 * v)


# ----------------------------------------------------------------------------
# ONE fused Pallas kernel.
#
#   p_ref    : (S2*N, 9*9*Cin) bf16  conv1 patches, rows (s2, n),
#                                    cols (tap2, kh1, kw1, cin)
#   w1_ref   : (9*9*Cin, 9*C1) bf16  block-diag conv1 weight, b1_ref: (1, 9*C1)
#   w2_ref   : (9*C1, C2)      bf16  conv2 weight, rows (tap2, c1), b2: (1, C2)
#   rew_ref  : (N, R)          f32   rewards per (t, b)
#   wihf_ref : (S2*C2, 3H)     bf16  W_ih feature rows, lane order (s2, c2),
#                                    gates (r,z,n) fused along 3H
#   wihr_ref : (R, 3H)         f32   W_ih reward rows
#   bih_ref  : (1, 3H) f32, whh_ref: (H, 3H) f32, bhh_ref: (1, 3H) f32
#   h_ref    : (B, H)          f32   output: final GRU hidden state
#   h2t_ref  : (N, S2*C2)      f32   VMEM scratch for the one-time relayout
# ----------------------------------------------------------------------------
def _fused_kernel(p_ref, w1_ref, b1_ref, w2_ref, b2_ref, rew_ref,
                  wihf_ref, wihr_ref, bih_ref, whh_ref, bhh_ref,
                  h_ref, h2t_ref):
    n = rew_ref.shape[0]                 # T*B
    n_rew = rew_ref.shape[1]             # R
    c2 = w2_ref.shape[1]                 # conv2 out channels
    sc = wihf_ref.shape[0]               # S2*C2
    n_sp = sc // c2                      # S2 = OH2*OW2
    hidden = whh_ref.shape[0]            # H
    batch = h_ref.shape[0]               # B
    seq = n // batch                     # T

    # Conv1: single bf16 MXU dot; block-diag weight puts the 9 conv2 taps on
    # lanes -> h1 is (S2*N, 9*C1), lane-dense.  Bias + LeakyReLU in f32.
    h1 = jnp.dot(p_ref[...], w1_ref[...], preferred_element_type=jnp.float32)
    h1 = _lrelu(h1 + b1_ref[...]).astype(jnp.bfloat16)

    # Conv2: ONE K=9*C1 dot (accumulation stays inside the MXU).
    h2 = jnp.dot(h1, w2_ref[...], preferred_element_type=jnp.float32)
    h2 = _lrelu(h2 + b2_ref[...])                          # (S2*N, C2), f32

    # One-time (s2, n) x c2  ->  n x (s2, c2) relayout through VMEM:
    # 8-aligned sublane slices in, static-lane-offset stores out (~36 KB).
    for s in range(n_sp):
        h2t_ref[:, s * c2:(s + 1) * c2] = h2[s * n:(s + 1) * n, :]

    # GRU input projection, hoisted out of the recurrence: ONE K=S2*C2 dot.
    gi = jnp.dot(h2t_ref[...].astype(jnp.bfloat16), wihf_ref[...],
                 preferred_element_type=jnp.float32)       # (N, 3H)
    gi = gi + bih_ref[...]
    for r in range(n_rew):                                 # R is tiny (1)
        gi = gi + rew_ref[:, r:r + 1] * wihr_ref[r:r + 1, :]

    # Split gates once (lane offsets 0 / H / 2H inside one 128-lane tile).
    gi_r = gi[:, 0:hidden]
    gi_z = gi[:, hidden:2 * hidden]
    gi_n = gi[:, 2 * hidden:3 * hidden]

    # GRU recurrence (torch gate order r, z, n).  f32 throughout; exact
    # sigmoid so rounding error does not compound across timesteps.
    def sigmoid(v):
        return 1.0 / (1.0 + jnp.exp(-v))

    h = jnp.zeros((batch, hidden), jnp.float32)            # GRU h0 = 0
    for t in range(seq):                                   # static unroll, T=8
        gh = jnp.dot(h, whh_ref[...],
                     preferred_element_type=jnp.float32) + bhh_ref[...]
        lo, hi = t * batch, (t + 1) * batch
        r = sigmoid(gi_r[lo:hi, :] + gh[:, 0:hidden])
        z = sigmoid(gi_z[lo:hi, :] + gh[:, hidden:2 * hidden])
        cand = jnp.tanh(gi_n[lo:hi, :] + r * gh[:, 2 * hidden:3 * hidden])
        h = (1.0 - z) * cand + z * h
    h_ref[...] = h


# ----------------------------------------------------------------------------
# Plain-JAX glue: im2col patch extraction (layout plumbing only).
# ----------------------------------------------------------------------------
def _im2col(x, k, stride):
    """x: (N, H, W, C) -> (N, OH, OW, k*k*C), tap order (kh, kw, c)."""
    _, hh, ww, _ = x.shape
    oh = (hh - k) // stride + 1
    ow = (ww - k) // stride + 1
    cols = []
    for kh in range(k):
        for kw in range(k):
            cols.append(x[:, kh:kh + stride * (oh - 1) + 1:stride,
                             kw:kw + stride * (ow - 1) + 1:stride, :])
    return jnp.concatenate(cols, axis=-1), oh, ow


def _conv_patches(x_nhwc):
    """Conv1 im2col patches gathered in conv2 (3x3, stride 2) tap order.

    Returns (OH2*OW2*N, 9*9*Cin): rows ordered (oh2, ow2, n), cols ordered
    (tap2=(kh2,kw2), kh1, kw1, cin) so that conv1 with a block-diagonal weight
    yields h1 with conv2 taps concatenated along lanes."""
    n_img = x_nhwc.shape[0]
    p1, oh1, ow1 = _im2col(x_nhwc, 3, 1)               # (N, OH1, OW1, 9*Cin)
    oh2 = (oh1 - 3) // 2 + 1
    ow2 = (ow1 - 3) // 2 + 1
    taps = []
    for kh in range(3):
        for kw in range(3):
            taps.append(p1[:, kh:kh + 2 * (oh2 - 1) + 1:2,
                              kw:kw + 2 * (ow2 - 1) + 1:2, :])
    p = jnp.stack(taps, axis=0)                        # (9, N, OH2, OW2, 9*Cin)
    p = p.transpose(2, 3, 1, 0, 4)                     # (OH2, OW2, N, 9, 9*Cin)
    return p.reshape(oh2 * ow2 * n_img, 9 * p1.shape[-1]), oh2, ow2


def rollout_encoder_forward(state, reward, pp):
    """state: (T, B, C, H, W) f32; reward: (T, B, R) f32 -> (B, hidden) f32."""
    t, b, c, hh, ww = state.shape
    n = t * b
    x = state.reshape(n, c, hh, ww).transpose(0, 2, 3, 1)      # NCHW -> NHWC
    p, _, _ = _conv_patches(x)
    # Static slices inside the kernel assume 8-aligned row blocks.
    assert n % 8 == 0 and p.shape[0] % 8 == 0, (
        "pad T*B to a multiple of 8 (sublane alignment)", n, p.shape)
    rew = reward.reshape(n, -1)

    hidden = pp["whh"].shape[0]
    sc = pp["wih_feat"].shape[0]                               # S2*C2

    return pl.pallas_call(
        _fused_kernel,
        out_shape=jax.ShapeDtypeStruct((b, hidden), jnp.float32),
        in_specs=[pl.BlockSpec(memory_space=pltpu.MemorySpace.VMEM)] * 11,
        out_specs=pl.BlockSpec(memory_space=pltpu.MemorySpace.VMEM),
        scratch_shapes=[pltpu.VMEM((n, sc), jnp.float32)],
    )(p.astype(jnp.bfloat16), pp["w1e"], pp["b1e"], pp["w2f"], pp["b2"],
      rew, pp["wih_feat"], pp["wih_rew"], pp["bih"], pp["whh"], pp["bhh"])


# ----------------------------------------------------------------------------
# Parameters: torch-style synthetic init + a one-time Pallas-friendly re-layout.
# ----------------------------------------------------------------------------
def init_params(key, C, Hh, Ww, num_rewards, hidden_size):
    oh1, ow1 = Hh - 2, Ww - 2
    oh2, ow2 = (oh1 - 3) // 2 + 1, (ow1 - 3) // 2 + 1
    feat = 16 * oh2 * ow2
    D = feat + num_rewards
    ks = jax.random.split(key, 8)
    u = lambda k, shape, bound: jax.random.uniform(
        k, shape, jnp.float32, minval=-bound, maxval=bound)
    bc1 = 1.0 / (C * 9) ** 0.5
    bc2 = 1.0 / (16 * 9) ** 0.5
    bg = 1.0 / hidden_size ** 0.5
    return dict(
        w1=u(ks[0], (3, 3, C, 16), bc1), b1=u(ks[1], (16,), bc1),
        w2=u(ks[2], (3, 3, 16, 16), bc2), b2=u(ks[3], (16,), bc2),
        wih=u(ks[4], (3, D, hidden_size), bg),
        whh=u(ks[5], (3, hidden_size, hidden_size), bg),
        bih=u(ks[6], (3, 1, hidden_size), bg),
        bhh=u(ks[7], (3, 1, hidden_size), bg),
    )


def prepare_pallas_params(params, oh2, ow2):
    """One-time re-layout: block-diagonal conv1 weight (taps -> lanes), flat
    conv2 weight, GRU gates fused along 3H, and W_ih feature rows permuted
    from torch's NCHW flatten order (c2, oh2, ow2) to the kernel's (s2, c2)
    lane order.  Big MXU operands are stored in bf16."""
    cin = params["w1"].shape[2]
    c1 = params["w1"].shape[-1]
    c2 = params["w2"].shape[-1]
    n_sp = oh2 * ow2
    feat = c2 * n_sp
    fuse = lambda w: jnp.concatenate([w[g] for g in range(3)], axis=-1)

    w1f = params["w1"].reshape(9 * cin, c1)                 # (9*Cin, C1)
    w1e = jnp.kron(jnp.eye(9, dtype=w1f.dtype), w1f)        # block-diag (81Cin, 9C1)
    b1e = jnp.tile(params["b1"], 9).reshape(1, -1)          # (1, 9*C1)
    w2f = params["w2"].reshape(9 * c1, c2)                  # (9*C1, C2), rows (tap2, c1)

    wih = fuse(params["wih"])                               # (D, 3H)
    wih_feat = (wih[:feat].reshape(c2, n_sp, -1)
                .transpose(1, 0, 2).reshape(feat, -1))      # (S2*C2, 3H), rows (s2, c2)
    return dict(
        w1e=w1e.astype(jnp.bfloat16),
        b1e=b1e,
        w2f=w2f.astype(jnp.bfloat16),
        b2=params["b2"].reshape(1, -1),
        wih_feat=wih_feat.astype(jnp.bfloat16),
        wih_rew=wih[feat:],                                 # (R, 3H) f32
        bih=fuse(params["bih"]),                            # (1, 3H)
        whh=fuse(params["whh"]),                            # (H, 3H)
        bhh=fuse(params["bhh"]),                            # (1, 3H)
    )


# ----------------------------------------------------------------------------
# Pure-JAX reference (torch semantics) for a sanity check of the Pallas path.
# ----------------------------------------------------------------------------
def reference_forward(state, reward, params):
    T, B, C, Hh, Ww = state.shape
    x = state.reshape(T * B, C, Hh, Ww).transpose(0, 2, 3, 1)
    lrelu = lambda v: jnp.where(v > 0, v, 0.01 * v)
    dn = ("NHWC", "HWIO", "NHWC")
    h1 = lrelu(lax.conv_general_dilated(
        x, params["w1"], (1, 1), "VALID", dimension_numbers=dn) + params["b1"])
    h2 = lrelu(lax.conv_general_dilated(
        h1, params["w2"], (2, 2), "VALID", dimension_numbers=dn) + params["b2"])
    feat = jnp.transpose(h2, (0, 3, 1, 2)).reshape(T, B, -1)
    rnn_in = jnp.concatenate([feat, reward], axis=2)

    H = params["whh"].shape[-1]
    sig = lambda v: 1.0 / (1.0 + jnp.exp(-v))

    def step(h, x_t):
        gi = [x_t @ params["wih"][g] + params["bih"][g] for g in range(3)]
        gh = [h @ params["whh"][g] + params["bhh"][g] for g in range(3)]
        r = sig(gi[0] + gh[0])
        z = sig(gi[1] + gh[1])
        n = jnp.tanh(gi[2] + r * gh[2])
        return (1.0 - z) * n + z * h, None

    h0 = jnp.zeros((B, H), jnp.float32)
    h_final, _ = lax.scan(step, h0, rnn_in)
    return h_final


if __name__ == "__main__":
    T, B = 8, 2                 # num_steps, batch
    C, Hh, Ww = 4, 16, 16       # in_shape = (4, 16, 16)
    num_rewards = 1
    hidden_size = 32

    key = jax.random.PRNGKey(0)
    k_state, k_reward, k_params = jax.random.split(key, 3)
    state = jax.random.normal(k_state, (T, B, C, Hh, Ww), dtype=jnp.float32)
    reward = jax.random.normal(k_reward, (T, B, num_rewards), dtype=jnp.float32)

    params = init_params(k_params, C, Hh, Ww, num_rewards, hidden_size)
    oh1, ow1 = Hh - 2, Ww - 2
    oh2, ow2 = (oh1 - 3) // 2 + 1, (ow1 - 3) // 2 + 1
    pparams = prepare_pallas_params(params, oh2, ow2)

    fwd = jax.jit(rollout_encoder_forward)
    out = jax.block_until_ready(fwd(state, reward, pparams))
    assert out.shape == (B, hidden_size), out.shape

    ref = jax.block_until_ready(reference_forward(state, reward, params))
    assert jnp.allclose(out, ref, rtol=1e-2, atol=1e-2), (
        "mismatch", float(jnp.max(jnp.abs(out - ref))))

    print("KERNEL_OK")
</pallas_src>

<mosaic_0001>
module attributes {stable_mosaic.version = 11 : i64} {
  func.func @_fused_kernel(%arg0: memref<576x324xbf16, #tpu.memory_space<vmem>>, %arg1: memref<324x144xbf16, #tpu.memory_space<vmem>>, %arg2: memref<1x144xf32, #tpu.memory_space<vmem>>, %arg3: memref<144x16xbf16, #tpu.memory_space<vmem>>, %arg4: memref<1x16xf32, #tpu.memory_space<vmem>>, %arg5: memref<16x1xf32, #tpu.memory_space<vmem>>, %arg6: memref<576x96xbf16, #tpu.memory_space<vmem>>, %arg7: memref<1x96xf32, #tpu.memory_space<vmem>>, %arg8: memref<1x96xf32, #tpu.memory_space<vmem>>, %arg9: memref<32x96xf32, #tpu.memory_space<vmem>>, %arg10: memref<1x96xf32, #tpu.memory_space<vmem>>, %arg11: memref<2x32xf32, #tpu.memory_space<vmem>>, %arg12: memref<16x576xf32, #tpu.memory_space<vmem>>) attributes {dimension_semantics = [], scalar_prefetch = 0 : i64, scratch_operands = 1 : i64, tpu.core_type = #tpu.core_type<tc>} {
    %c0 = arith.constant 0 : index
    %c0_0 = arith.constant 0 : index
    %0 = vector.load %arg0[%c0, %c0_0] : memref<576x324xbf16, #tpu.memory_space<vmem>>, vector<576x324xbf16>
    %c0_1 = arith.constant 0 : index
    %c0_2 = arith.constant 0 : index
    %1 = vector.load %arg1[%c0_1, %c0_2] : memref<324x144xbf16, #tpu.memory_space<vmem>>, vector<324x144xbf16>
    %cst = arith.constant dense<0.000000e+00> : vector<576x144xf32>
    %2 = tpu.matmul %0, %1, %cst {dimension_numbers = #tpu.dot_dimension_numbers<[1], [0], [0], [1], [0, 0, 1, 1], [], []>} : vector<576x324xbf16>, vector<324x144xbf16>, vector<576x144xf32> -> vector<576x144xf32>
    %c0_3 = arith.constant 0 : index
    %c0_4 = arith.constant 0 : index
    %3 = vector.load %arg2[%c0_3, %c0_4] : memref<1x144xf32, #tpu.memory_space<vmem>>, vector<1x144xf32>
    %4 = vector.broadcast %3 : vector<1x144xf32> to vector<576x144xf32>
    %5 = arith.addf %2, %4 : vector<576x144xf32>
    %cst_5 = arith.constant 0.000000e+00 : f32
    %6 = vector.broadcast %cst_5 : f32 to vector<576x144xf32>
    %7 = arith.cmpf ogt, %5, %6 : vector<576x144xf32>
    %cst_6 = arith.constant 0.00999999977 : f32
    %8 = vector.broadcast %cst_6 : f32 to vector<576x144xf32>
    %9 = arith.mulf %8, %5 : vector<576x144xf32>
    %10 = arith.select %7, %5, %9 : vector<576x144xi1>, vector<576x144xf32>
    %11 = arith.truncf %10 : vector<576x144xf32> to vector<576x144xbf16>
    %c0_7 = arith.constant 0 : index
    %c0_8 = arith.constant 0 : index
    %12 = vector.load %arg3[%c0_7, %c0_8] : memref<144x16xbf16, #tpu.memory_space<vmem>>, vector<144x16xbf16>
    %cst_9 = arith.constant dense<0.000000e+00> : vector<576x16xf32>
    %13 = tpu.matmul %11, %12, %cst_9 {dimension_numbers = #tpu.dot_dimension_numbers<[1], [0], [0], [1], [0, 0, 1, 1], [], []>} : vector<576x144xbf16>, vector<144x16xbf16>, vector<576x16xf32> -> vector<576x16xf32>
    %c0_10 = arith.constant 0 : index
    %c0_11 = arith.constant 0 : index
    %14 = vector.load %arg4[%c0_10, %c0_11] : memref<1x16xf32, #tpu.memory_space<vmem>>, vector<1x16xf32>
    %15 = vector.broadcast %14 : vector<1x16xf32> to vector<576x16xf32>
    %16 = arith.addf %13, %15 : vector<576x16xf32>
    %cst_12 = arith.constant 0.000000e+00 : f32
    %17 = vector.broadcast %cst_12 : f32 to vector<576x16xf32>
    %18 = arith.cmpf ogt, %16, %17 : vector<576x16xf32>
    %cst_13 = arith.constant 0.00999999977 : f32
    %19 = vector.broadcast %cst_13 : f32 to vector<576x16xf32>
    %20 = arith.mulf %19, %16 : vector<576x16xf32>
    %21 = arith.select %18, %16, %20 : vector<576x16xi1>, vector<576x16xf32>
    %22 = vector.extract_strided_slice %21 {offsets = [0, 0], sizes = [16, 16], strides = [1, 1]} : vector<576x16xf32> to vector<16x16xf32>
    %c0_14 = arith.constant 0 : index
    %c0_15 = arith.constant 0 : index
    %23 = vector.load %arg12[%c0_14, %c0_15] : memref<16x576xf32, #tpu.memory_space<vmem>>, vector<16x16xf32>
    tpu.vector_store %arg12[%c0_14, %c0_15], %22 {strides = array<i32>} : memref<16x576xf32, #tpu.memory_space<vmem>>, vector<16x16xf32>,
    %24 = vector.extract_strided_slice %21 {offsets = [16, 0], sizes = [16, 16], strides = [1, 1]} : vector<576x16xf32> to vector<16x16xf32>
    %c0_16 = arith.constant 0 : index
    %c16 = arith.constant 16 : index
    %25 = vector.load %arg12[%c0_16, %c16] : memref<16x576xf32, #tpu.memory_space<vmem>>, vector<16x16xf32>
    tpu.vector_store %arg12[%c0_16, %c16], %24 {strides = array<i32>} : memref<16x576xf32, #tpu.memory_space<vmem>>, vector<16x16xf32>,
    %26 = vector.extract_strided_slice %21 {offsets = [32, 0], sizes = [16, 16], strides = [1, 1]} : vector<576x16xf32> to vector<16x16xf32>
    %c0_17 = arith.constant 0 : index
    %c32 = arith.constant 32 : index
    %27 = vector.load %arg12[%c0_17, %c32] : memref<16x576xf32, #tpu.memory_space<vmem>>, vector<16x16xf32>
    tpu.vector_store %arg12[%c0_17, %c32], %26 {strides = array<i32>} : memref<16x576xf32, #tpu.memory_space<vmem>>, vector<16x16xf32>,
    %28 = vector.extract_strided_slice %21 {offsets = [48, 0], sizes = [16, 16], strides = [1, 1]} : vector<576x16xf32> to vector<16x16xf32>
    %c0_18 = arith.constant 0 : index
    %c48 = arith.constant 48 : index
    %29 = vector.load %arg12[%c0_18, %c48] : memref<16x576xf32, #tpu.memory_space<vmem>>, vector<16x16xf32>
    tpu.vector_store %arg12[%c0_18, %c48], %28 {strides = array<i32>} : memref<16x576xf32, #tpu.memory_space<vmem>>, vector<16x16xf32>,
    %30 = vector.extract_strided_slice %21 {offsets = [64, 0], sizes = [16, 16], strides = [1, 1]} : vector<576x16xf32> to vector<16x16xf32>
    %c0_19 = arith.constant 0 : index
    %c64 = arith.constant 64 : index
    %31 = vector.load %arg12[%c0_19, %c64] : memref<16x576xf32, #tpu.memory_space<vmem>>, vector<16x16xf32>
    tpu.vector_store %arg12[%c0_19, %c64], %30 {strides = array<i32>} : memref<16x576xf32, #tpu.memory_space<vmem>>, vector<16x16xf32>,
    %32 = vector.extract_strided_slice %21 {offsets = [80, 0], sizes = [16, 16], strides = [1, 1]} : vector<576x16xf32> to vector<16x16xf32>
    %c0_20 = arith.constant 0 : index
    %c80 = arith.constant 80 : index
    %33 = vector.load %arg12[%c0_20, %c80] : memref<16x576xf32, #tpu.memory_space<vmem>>, vector<16x16xf32>
    tpu.vector_store %arg12[%c0_20, %c80], %32 {strides = array<i32>} : memref<16x576xf32, #tpu.memory_space<vmem>>, vector<16x16xf32>,
    %34 = vector.extract_strided_slice %21 {offsets = [96, 0], sizes = [16, 16], strides = [1, 1]} : vector<576x16xf32> to vector<16x16xf32>
    %c0_21 = arith.constant 0 : index
    %c96 = arith.constant 96 : index
    %35 = vector.load %arg12[%c0_21, %c96] : memref<16x576xf32, #tpu.memory_space<vmem>>, vector<16x16xf32>
    tpu.vector_store %arg12[%c0_21, %c96], %34 {strides = array<i32>} : memref<16x576xf32, #tpu.memory_space<vmem>>, vector<16x16xf32>,
    %36 = vector.extract_strided_slice %21 {offsets = [112, 0], sizes = [16, 16], strides = [1, 1]} : vector<576x16xf32> to vector<16x16xf32>
    %c0_22 = arith.constant 0 : index
    %c112 = arith.constant 112 : index
    %37 = vector.load %arg12[%c0_22, %c112] : memref<16x576xf32, #tpu.memory_space<vmem>>, vector<16x16xf32>
    tpu.vector_store %arg12[%c0_22, %c112], %36 {strides = array<i32>} : memref<16x576xf32, #tpu.memory_space<vmem>>, vector<16x16xf32>,
    %38 = vector.extract_strided_slice %21 {offsets = [128, 0], sizes = [16, 16], strides = [1, 1]} : vector<576x16xf32> to vector<16x16xf32>
    %c0_23 = arith.constant 0 : index
    %c128 = arith.constant 128 : index
    %39 = vector.load %arg12[%c0_23, %c128] : memref<16x576xf32, #tpu.memory_space<vmem>>, vector<16x16xf32>
    tpu.vector_store %arg12[%c0_23, %c128], %38 {strides = array<i32>} : memref<16x576xf32, #tpu.memory_space<vmem>>, vector<16x16xf32>,
    %40 = vector.extract_strided_slice %21 {offsets = [144, 0], sizes = [16, 16], strides = [1, 1]} : vector<576x16xf32> to vector<16x16xf32>
    %c0_24 = arith.constant 0 : index
    %c144 = arith.constant 144 : index
    %41 = vector.load %arg12[%c0_24, %c144] : memref<16x576xf32, #tpu.memory_space<vmem>>, vector<16x16xf32>
    tpu.vector_store %arg12[%c0_24, %c144], %40 {strides = array<i32>} : memref<16x576xf32, #tpu.memory_space<vmem>>, vector<16x16xf32>,
    %42 = vector.extract_strided_slice %21 {offsets = [160, 0], sizes = [16, 16], strides = [1, 1]} : vector<576x16xf32> to vector<16x16xf32>
    %c0_25 = arith.constant 0 : index
    %c160 = arith.constant 160 : index
    %43 = vector.load %arg12[%c0_25, %c160] : memref<16x576xf32, #tpu.memory_space<vmem>>, vector<16x16xf32>
    tpu.vector_store %arg12[%c0_25, %c160], %42 {strides = array<i32>} : memref<16x576xf32, #tpu.memory_space<vmem>>, vector<16x16xf32>,
    %44 = vector.extract_strided_slice %21 {offsets = [176, 0], sizes = [16, 16], strides = [1, 1]} : vector<576x16xf32> to vector<16x16xf32>
    %c0_26 = arith.constant 0 : index
    %c176 = arith.constant 176 : index
    %45 = vector.load %arg12[%c0_26, %c176] : memref<16x576xf32, #tpu.memory_space<vmem>>, vector<16x16xf32>
    tpu.vector_store %arg12[%c0_26, %c176], %44 {strides = array<i32>} : memref<16x576xf32, #tpu.memory_space<vmem>>, vector<16x16xf32>,
    %46 = vector.extract_strided_slice %21 {offsets = [192, 0], sizes = [16, 16], strides = [1, 1]} : vector<576x16xf32> to vector<16x16xf32>
    %c0_27 = arith.constant 0 : index
    %c192 = arith.constant 192 : index
    %47 = vector.load %arg12[%c0_27, %c192] : memref<16x576xf32, #tpu.memory_space<vmem>>, vector<16x16xf32>
    tpu.vector_store %arg12[%c0_27, %c192], %46 {strides = array<i32>} : memref<16x576xf32, #tpu.memory_space<vmem>>, vector<16x16xf32>,
    %48 = vector.extract_strided_slice %21 {offsets = [208, 0], sizes = [16, 16], strides = [1, 1]} : vector<576x16xf32> to vector<16x16xf32>
    %c0_28 = arith.constant 0 : index
    %c208 = arith.constant 208 : index
    %49 = vector.load %arg12[%c0_28, %c208] : memref<16x576xf32, #tpu.memory_space<vmem>>, vector<16x16xf32>
    tpu.vector_store %arg12[%c0_28, %c208], %48 {strides = array<i32>} : memref<16x576xf32, #tpu.memory_space<vmem>>, vector<16x16xf32>,
    %50 = vector.extract_strided_slice %21 {offsets = [224, 0], sizes = [16, 16], strides = [1, 1]} : vector<576x16xf32> to vector<16x16xf32>
    %c0_29 = arith.constant 0 : index
    %c224 = arith.constant 224 : index
    %51 = vector.load %arg12[%c0_29, %c224] : memref<16x576xf32, #tpu.memory_space<vmem>>, vector<16x16xf32>
    tpu.vector_store %arg12[%c0_29, %c224], %50 {strides = array<i32>} : memref<16x576xf32, #tpu.memory_space<vmem>>, vector<16x16xf32>,
    %52 = vector.extract_strided_slice %21 {offsets = [240, 0], sizes = [16, 16], strides = [1, 1]} : vector<576x16xf32> to vector<16x16xf32>
    %c0_30 = arith.constant 0 : index
    %c240 = arith.constant 240 : index
    %53 = vector.load %arg12[%c0_30, %c240] : memref<16x576xf32, #tpu.memory_space<vmem>>, vector<16x16xf32>
    tpu.vector_store %arg12[%c0_30, %c240], %52 {strides = array<i32>} : memref<16x576xf32, #tpu.memory_space<vmem>>, vector<16x16xf32>,
    %54 = vector.extract_strided_slice %21 {offsets = [256, 0], sizes = [16, 16], strides = [1, 1]} : vector<576x16xf32> to vector<16x16xf32>
    %c0_31 = arith.constant 0 : index
    %c256 = arith.constant 256 : index
    %55 = vector.load %arg12[%c0_31, %c256] : memref<16x576xf32, #tpu.memory_space<vmem>>, vector<16x16xf32>
    tpu.vector_store %arg12[%c0_31, %c256], %54 {strides = array<i32>} : memref<16x576xf32, #tpu.memory_space<vmem>>, vector<16x16xf32>,
    %56 = vector.extract_strided_slice %21 {offsets = [272, 0], sizes = [16, 16], strides = [1, 1]} : vector<576x16xf32> to vector<16x16xf32>
    %c0_32 = arith.constant 0 : index
    %c272 = arith.constant 272 : index
    %57 = vector.load %arg12[%c0_32, %c272] : memref<16x576xf32, #tpu.memory_space<vmem>>, vector<16x16xf32>
    tpu.vector_store %arg12[%c0_32, %c272], %56 {strides = array<i32>} : memref<16x576xf32, #tpu.memory_space<vmem>>, vector<16x16xf32>,
    %58 = vector.extract_strided_slice %21 {offsets = [288, 0], sizes = [16, 16], strides = [1, 1]} : vector<576x16xf32> to vector<16x16xf32>
    %c0_33 = arith.constant 0 : index
    %c288 = arith.constant 288 : index
    %59 = vector.load %arg12[%c0_33, %c288] : memref<16x576xf32, #tpu.memory_space<vmem>>, vector<16x16xf32>
    tpu.vector_store %arg12[%c0_33, %c288], %58 {strides = array<i32>} : memref<16x576xf32, #tpu.memory_space<vmem>>, vector<16x16xf32>,
    %60 = vector.extract_strided_slice %21 {offsets = [304, 0], sizes = [16, 16], strides = [1, 1]} : vector<576x16xf32> to vector<16x16xf32>
    %c0_34 = arith.constant 0 : index
    %c304 = arith.constant 304 : index
    %61 = vector.load %arg12[%c0_34, %c304] : memref<16x576xf32, #tpu.memory_space<vmem>>, vector<16x16xf32>
    tpu.vector_store %arg12[%c0_34, %c304], %60 {strides = array<i32>} : memref<16x576xf32, #tpu.memory_space<vmem>>, vector<16x16xf32>,
    %62 = vector.extract_strided_slice %21 {offsets = [320, 0], sizes = [16, 16], strides = [1, 1]} : vector<576x16xf32> to vector<16x16xf32>
    %c0_35 = arith.constant 0 : index
    %c320 = arith.constant 320 : index
    %63 = vector.load %arg12[%c0_35, %c320] : memref<16x576xf32, #tpu.memory_space<vmem>>, vector<16x16xf32>
    tpu.vector_store %arg12[%c0_35, %c320], %62 {strides = array<i32>} : memref<16x576xf32, #tpu.memory_space<vmem>>, vector<16x16xf32>,
    %64 = vector.extract_strided_slice %21 {offsets = [336, 0], sizes = [16, 16], strides = [1, 1]} : vector<576x16xf32> to vector<16x16xf32>
    %c0_36 = arith.constant 0 : index
    %c336 = arith.constant 336 : index
    %65 = vector.load %arg12[%c0_36, %c336] : memref<16x576xf32, #tpu.memory_space<vmem>>, vector<16x16xf32>
    tpu.vector_store %arg12[%c0_36, %c336], %64 {strides = array<i32>} : memref<16x576xf32, #tpu.memory_space<vmem>>, vector<16x16xf32>,
    %66 = vector.extract_strided_slice %21 {offsets = [352, 0], sizes = [16, 16], strides = [1, 1]} : vector<576x16xf32> to vector<16x16xf32>
    %c0_37 = arith.constant 0 : index
    %c352 = arith.constant 352 : index
    %67 = vector.load %arg12[%c0_37, %c352] : memref<16x576xf32, #tpu.memory_space<vmem>>, vector<16x16xf32>
    tpu.vector_store %arg12[%c0_37, %c352], %66 {strides = array<i32>} : memref<16x576xf32, #tpu.memory_space<vmem>>, vector<16x16xf32>,
    %68 = vector.extract_strided_slice %21 {offsets = [368, 0], sizes = [16, 16], strides = [1, 1]} : vector<576x16xf32> to vector<16x16xf32>
    %c0_38 = arith.constant 0 : index
    %c368 = arith.constant 368 : index
    %69 = vector.load %arg12[%c0_38, %c368] : memref<16x576xf32, #tpu.memory_space<vmem>>, vector<16x16xf32>
    tpu.vector_store %arg12[%c0_38, %c368], %68 {strides = array<i32>} : memref<16x576xf32, #tpu.memory_space<vmem>>, vector<16x16xf32>,
    %70 = vector.extract_strided_slice %21 {offsets = [384, 0], sizes = [16, 16], strides = [1, 1]} : vector<576x16xf32> to vector<16x16xf32>
    %c0_39 = arith.constant 0 : index
    %c384 = arith.constant 384 : index
    %71 = vector.load %arg12[%c0_39, %c384] : memref<16x576xf32, #tpu.memory_space<vmem>>, vector<16x16xf32>
    tpu.vector_store %arg12[%c0_39, %c384], %70 {strides = array<i32>} : memref<16x576xf32, #tpu.memory_space<vmem>>, vector<16x16xf32>,
    %72 = vector.extract_strided_slice %21 {offsets = [400, 0], sizes = [16, 16], strides = [1, 1]} : vector<576x16xf32> to vector<16x16xf32>
    %c0_40 = arith.constant 0 : index
    %c400 = arith.constant 400 : index
    %73 = vector.load %arg12[%c0_40, %c400] : memref<16x576xf32, #tpu.memory_space<vmem>>, vector<16x16xf32>
    tpu.vector_store %arg12[%c0_40, %c400], %72 {strides = array<i32>} : memref<16x576xf32, #tpu.memory_space<vmem>>, vector<16x16xf32>,
    %74 = vector.extract_strided_slice %21 {offsets = [416, 0], sizes = [16, 16], strides = [1, 1]} : vector<576x16xf32> to vector<16x16xf32>
    %c0_41 = arith.constant 0 : index
    %c416 = arith.constant 416 : index
    %75 = vector.load %arg12[%c0_41, %c416] : memref<16x576xf32, #tpu.memory_space<vmem>>, vector<16x16xf32>
    tpu.vector_store %arg12[%c0_41, %c416], %74 {strides = array<i32>} : memref<16x576xf32, #tpu.memory_space<vmem>>, vector<16x16xf32>,
    %76 = vector.extract_strided_slice %21 {offsets = [432, 0], sizes = [16, 16], strides = [1, 1]} : vector<576x16xf32> to vector<16x16xf32>
    %c0_42 = arith.constant 0 : index
    %c432 = arith.constant 432 : index
    %77 = vector.load %arg12[%c0_42, %c432] : memref<16x576xf32, #tpu.memory_space<vmem>>, vector<16x16xf32>
    tpu.vector_store %arg12[%c0_42, %c432], %76 {strides = array<i32>} : memref<16x576xf32, #tpu.memory_space<vmem>>, vector<16x16xf32>,
    %78 = vector.extract_strided_slice %21 {offsets = [448, 0], sizes = [16, 16], strides = [1, 1]} : vector<576x16xf32> to vector<16x16xf32>
    %c0_43 = arith.constant 0 : index
    %c448 = arith.constant 448 : index
    %79 = vector.load %arg12[%c0_43, %c448] : memref<16x576xf32, #tpu.memory_space<vmem>>, vector<16x16xf32>
    tpu.vector_store %arg12[%c0_43, %c448], %78 {strides = array<i32>} : memref<16x576xf32, #tpu.memory_space<vmem>>, vector<16x16xf32>,
    %80 = vector.extract_strided_slice %21 {offsets = [464, 0], sizes = [16, 16], strides = [1, 1]} : vector<576x16xf32> to vector<16x16xf32>
    %c0_44 = arith.constant 0 : index
    %c464 = arith.constant 464 : index
    %81 = vector.load %arg12[%c0_44, %c464] : memref<16x576xf32, #tpu.memory_space<vmem>>, vector<16x16xf32>
    tpu.vector_store %arg12[%c0_44, %c464], %80 {strides = array<i32>} : memref<16x576xf32, #tpu.memory_space<vmem>>, vector<16x16xf32>,
    %82 = vector.extract_strided_slice %21 {offsets = [480, 0], sizes = [16, 16], strides = [1, 1]} : vector<576x16xf32> to vector<16x16xf32>
    %c0_45 = arith.constant 0 : index
    %c480 = arith.constant 480 : index
    %83 = vector.load %arg12[%c0_45, %c480] : memref<16x576xf32, #tpu.memory_space<vmem>>, vector<16x16xf32>
    tpu.vector_store %arg12[%c0_45, %c480], %82 {strides = array<i32>} : memref<16x576xf32, #tpu.memory_space<vmem>>, vector<16x16xf32>,
    %84 = vector.extract_strided_slice %21 {offsets = [496, 0], sizes = [16, 16], strides = [1, 1]} : vector<576x16xf32> to vector<16x16xf32>
    %c0_46 = arith.constant 0 : index
    %c496 = arith.constant 496 : index
    %85 = vector.load %arg12[%c0_46, %c496] : memref<16x576xf32, #tpu.memory_space<vmem>>, vector<16x16xf32>
    tpu.vector_store %arg12[%c0_46, %c496], %84 {strides = array<i32>} : memref<16x576xf32, #tpu.memory_space<vmem>>, vector<16x16xf32>,
    %86 = vector.extract_strided_slice %21 {offsets = [512, 0], sizes = [16, 16], strides = [1, 1]} : vector<576x16xf32> to vector<16x16xf32>
    %c0_47 = arith.constant 0 : index
    %c512 = arith.constant 512 : index
    %87 = vector.load %arg12[%c0_47, %c512] : memref<16x576xf32, #tpu.memory_space<vmem>>, vector<16x16xf32>
    tpu.vector_store %arg12[%c0_47, %c512], %86 {strides = array<i32>} : memref<16x576xf32, #tpu.memory_space<vmem>>, vector<16x16xf32>,
    %88 = vector.extract_strided_slice %21 {offsets = [528, 0], sizes = [16, 16], strides = [1, 1]} : vector<576x16xf32> to vector<16x16xf32>
    %c0_48 = arith.constant 0 : index
    %c528 = arith.constant 528 : index
    %89 = vector.load %arg12[%c0_48, %c528] : memref<16x576xf32, #tpu.memory_space<vmem>>, vector<16x16xf32>
    tpu.vector_store %arg12[%c0_48, %c528], %88 {strides = array<i32>} : memref<16x576xf32, #tpu.memory_space<vmem>>, vector<16x16xf32>,
    %90 = vector.extract_strided_slice %21 {offsets = [544, 0], sizes = [16, 16], strides = [1, 1]} : vector<576x16xf32> to vector<16x16xf32>
    %c0_49 = arith.constant 0 : index
    %c544 = arith.constant 544 : index
    %91 = vector.load %arg12[%c0_49, %c544] : memref<16x576xf32, #tpu.memory_space<vmem>>, vector<16x16xf32>
    tpu.vector_store %arg12[%c0_49, %c544], %90 {strides = array<i32>} : memref<16x576xf32, #tpu.memory_space<vmem>>, vector<16x16xf32>,
    %92 = vector.extract_strided_slice %21 {offsets = [560, 0], sizes = [16, 16], strides = [1, 1]} : vector<576x16xf32> to vector<16x16xf32>
    %c0_50 = arith.constant 0 : index
    %c560 = arith.constant 560 : index
    %93 = vector.load %arg12[%c0_50, %c560] : memref<16x576xf32, #tpu.memory_space<vmem>>, vector<16x16xf32>
    tpu.vector_store %arg12[%c0_50, %c560], %92 {strides = array<i32>} : memref<16x576xf32, #tpu.memory_space<vmem>>, vector<16x16xf32>,
    %c0_51 = arith.constant 0 : index
    %c0_52 = arith.constant 0 : index
    %94 = vector.load %arg12[%c0_51, %c0_52] : memref<16x576xf32, #tpu.memory_space<vmem>>, vector<16x576xf32>
    %95 = arith.truncf %94 : vector<16x576xf32> to vector<16x576xbf16>
    %c0_53 = arith.constant 0 : index
    %c0_54 = arith.constant 0 : index
    %96 = vector.load %arg6[%c0_53, %c0_54] : memref<576x96xbf16, #tpu.memory_space<vmem>>, vector<576x96xbf16>
    %cst_55 = arith.constant dense<0.000000e+00> : vector<16x96xf32>
    %97 = tpu.matmul %95, %96, %cst_55 {dimension_numbers = #tpu.dot_dimension_numbers<[1], [0], [0], [1], [0, 0, 1, 1], [], []>} : vector<16x576xbf16>, vector<576x96xbf16>, vector<16x96xf32> -> vector<16x96xf32>
    %c0_56 = arith.constant 0 : index
    %c0_57 = arith.constant 0 : index
    %98 = vector.load %arg8[%c0_56, %c0_57] : memref<1x96xf32, #tpu.memory_space<vmem>>, vector<1x96xf32>
    %99 = vector.broadcast %98 : vector<1x96xf32> to vector<16x96xf32>
    %100 = arith.addf %97, %99 : vector<16x96xf32>
    %c0_58 = arith.constant 0 : index
    %c0_59 = arith.constant 0 : index
    %101 = vector.load %arg5[%c0_58, %c0_59] : memref<16x1xf32, #tpu.memory_space<vmem>>, vector<16x1xf32>
    %c0_60 = arith.constant 0 : index
    %c0_61 = arith.constant 0 : index
    %102 = vector.load %arg7[%c0_60, %c0_61] : memref<1x96xf32, #tpu.memory_space<vmem>>, vector<1x96xf32>
    %103 = vector.broadcast %101 : vector<16x1xf32> to vector<16x96xf32>
    %104 = vector.broadcast %102 : vector<1x96xf32> to vector<16x96xf32>
    %105 = arith.mulf %103, %104 : vector<16x96xf32>
    %106 = arith.addf %100, %105 : vector<16x96xf32>
    %107 = vector.extract_strided_slice %106 {offsets = [0, 0], sizes = [16, 32], strides = [1, 1]} : vector<16x96xf32> to vector<16x32xf32>
    %108 = vector.extract_strided_slice %106 {offsets = [0, 32], sizes = [16, 32], strides = [1, 1]} : vector<16x96xf32> to vector<16x32xf32>
    %109 = vector.extract_strided_slice %106 {offsets = [0, 64], sizes = [16, 32], strides = [1, 1]} : vector<16x96xf32> to vector<16x32xf32>
    %cst_62 = arith.constant 0.000000e+00 : f32
    %110 = vector.broadcast %cst_62 : f32 to vector<2x32xf32>
    %c0_63 = arith.constant 0 : index
    %c0_64 = arith.constant 0 : index
    %111 = vector.load %arg9[%c0_63, %c0_64] : memref<32x96xf32, #tpu.memory_space<vmem>>, vector<32x96xf32>
    %cst_65 = arith.constant dense<0.000000e+00> : vector<2x96xf32>
    %112 = tpu.matmul %110, %111, %cst_65 {dimension_numbers = #tpu.dot_dimension_numbers<[1], [0], [0], [1], [0, 0, 1, 1], [], []>} : vector<2x32xf32>, vector<32x96xf32>, vector<2x96xf32> -> vector<2x96xf32>
    %c0_66 = arith.constant 0 : index
    %c0_67 = arith.constant 0 : index
    %113 = vector.load %arg10[%c0_66, %c0_67] : memref<1x96xf32, #tpu.memory_space<vmem>>, vector<1x96xf32>
    %114 = vector.broadcast %113 : vector<1x96xf32> to vector<2x96xf32>
    %115 = arith.addf %112, %114 : vector<2x96xf32>
    %116 = vector.extract_strided_slice %107 {offsets = [0, 0], sizes = [2, 32], strides = [1, 1]} : vector<16x32xf32> to vector<2x32xf32>
    %117 = vector.extract_strided_slice %115 {offsets = [0, 0], sizes = [2, 32], strides = [1, 1]} : vector<2x96xf32> to vector<2x32xf32>
    %118 = arith.addf %116, %117 : vector<2x32xf32>
    %cst_68 = arith.constant 0.000000e+00 : f32
    %119 = vector.broadcast %cst_68 : f32 to vector<2x32xf32>
    %120 = arith.subf %119, %118 : vector<2x32xf32>
    %121 = math.exp %120 : vector<2x32xf32>
    %cst_69 = arith.constant 1.000000e+00 : f32
    %122 = vector.broadcast %cst_69 : f32 to vector<2x32xf32>
    %123 = arith.addf %122, %121 : vector<2x32xf32>
    %cst_70 = arith.constant 1.000000e+00 : f32
    %124 = vector.broadcast %cst_70 : f32 to vector<2x32xf32>
    %125 = arith.divf %124, %123 : vector<2x32xf32>
    %126 = vector.extract_strided_slice %108 {offsets = [0, 0], sizes = [2, 32], strides = [1, 1]} : vector<16x32xf32> to vector<2x32xf32>
    %127 = vector.extract_strided_slice %115 {offsets = [0, 32], sizes = [2, 32], strides = [1, 1]} : vector<2x96xf32> to vector<2x32xf32>
    %128 = arith.addf %126, %127 : vector<2x32xf32>
    %cst_71 = arith.constant 0.000000e+00 : f32
    %129 = vector.broadcast %cst_71 : f32 to vector<2x32xf32>
    %130 = arith.subf %129, %128 : vector<2x32xf32>
    %131 = math.exp %130 : vector<2x32xf32>
    %cst_72 = arith.constant 1.000000e+00 : f32
    %132 = vector.broadcast %cst_72 : f32 to vector<2x32xf32>
    %133 = arith.addf %132, %131 : vector<2x32xf32>
    %cst_73 = arith.constant 1.000000e+00 : f32
    %134 = vector.broadcast %cst_73 : f32 to vector<2x32xf32>
    %135 = arith.divf %134, %133 : vector<2x32xf32>
    %136 = vector.extract_strided_slice %109 {offsets = [0, 0], sizes = [2, 32], strides = [1, 1]} : vector<16x32xf32> to vector<2x32xf32>
    %137 = vector.extract_strided_slice %115 {offsets = [0, 64], sizes = [2, 32], strides = [1, 1]} : vector<2x96xf32> to vector<2x32xf32>
    %138 = arith.mulf %125, %137 : vector<2x32xf32>
    %139 = arith.addf %136, %138 : vector<2x32xf32>
    %140 = math.tanh %139 : vector<2x32xf32>
    %cst_74 = arith.constant 1.000000e+00 : f32
    %141 = vector.broadcast %cst_74 : f32 to vector<2x32xf32>
    %142 = arith.subf %141, %135 : vector<2x32xf32>
    %143 = arith.mulf %142, %140 : vector<2x32xf32>
    %144 = arith.mulf %135, %110 : vector<2x32xf32>
    %145 = arith.addf %143, %144 : vector<2x32xf32>
    %c0_75 = arith.constant 0 : index
    %c0_76 = arith.constant 0 : index
    %146 = vector.load %arg9[%c0_75, %c0_76] : memref<32x96xf32, #tpu.memory_space<vmem>>, vector<32x96xf32>
    %cst_77 = arith.constant dense<0.000000e+00> : vector<2x96xf32>
    %147 = tpu.matmul %145, %146, %cst_77 {dimension_numbers = #tpu.dot_dimension_numbers<[1], [0], [0], [1], [0, 0, 1, 1], [], []>} : vector<2x32xf32>, vector<32x96xf32>, vector<2x96xf32> -> vector<2x96xf32>
    %c0_78 = arith.constant 0 : index
    %c0_79 = arith.constant 0 : index
    %148 = vector.load %arg10[%c0_78, %c0_79] : memref<1x96xf32, #tpu.memory_space<vmem>>, vector<1x96xf32>
    %149 = vector.broadcast %148 : vector<1x96xf32> to vector<2x96xf32>
    %150 = arith.addf %147, %149 : vector<2x96xf32>
    %151 = vector.extract_strided_slice %107 {offsets = [2, 0], sizes = [2, 32], strides = [1, 1]} : vector<16x32xf32> to vector<2x32xf32>
    %152 = vector.extract_strided_slice %150 {offsets = [0, 0], sizes = [2, 32], strides = [1, 1]} : vector<2x96xf32> to vector<2x32xf32>
    %153 = arith.addf %151, %152 : vector<2x32xf32>
    %cst_80 = arith.constant 0.000000e+00 : f32
    %154 = vector.broadcast %cst_80 : f32 to vector<2x32xf32>
    %155 = arith.subf %154, %153 : vector<2x32xf32>
    %156 = math.exp %155 : vector<2x32xf32>
    %cst_81 = arith.constant 1.000000e+00 : f32
    %157 = vector.broadcast %cst_81 : f32 to vector<2x32xf32>
    %158 = arith.addf %157, %156 : vector<2x32xf32>
    %cst_82 = arith.constant 1.000000e+00 : f32
    %159 = vector.broadcast %cst_82 : f32 to vector<2x32xf32>
    %160 = arith.divf %159, %158 : vector<2x32xf32>
    %161 = vector.extract_strided_slice %108 {offsets = [2, 0], sizes = [2, 32], strides = [1, 1]} : vector<16x32xf32> to vector<2x32xf32>
    %162 = vector.extract_strided_slice %150 {offsets = [0, 32], sizes = [2, 32], strides = [1, 1]} : vector<2x96xf32> to vector<2x32xf32>
    %163 = arith.addf %161, %162 : vector<2x32xf32>
    %cst_83 = arith.constant 0.000000e+00 : f32
    %164 = vector.broadcast %cst_83 : f32 to vector<2x32xf32>
    %165 = arith.subf %164, %163 : vector<2x32xf32>
    %166 = math.exp %165 : vector<2x32xf32>
    %cst_84 = arith.constant 1.000000e+00 : f32
    %167 = vector.broadcast %cst_84 : f32 to vector<2x32xf32>
    %168 = arith.addf %167, %166 : vector<2x32xf32>
    %cst_85 = arith.constant 1.000000e+00 : f32
    %169 = vector.broadcast %cst_85 : f32 to vector<2x32xf32>
    %170 = arith.divf %169, %168 : vector<2x32xf32>
    %171 = vector.extract_strided_slice %109 {offsets = [2, 0], sizes = [2, 32], strides = [1, 1]} : vector<16x32xf32> to vector<2x32xf32>
    %172 = vector.extract_strided_slice %150 {offsets = [0, 64], sizes = [2, 32], strides = [1, 1]} : vector<2x96xf32> to vector<2x32xf32>
    %173 = arith.mulf %160, %172 : vector<2x32xf32>
    %174 = arith.addf %171, %173 : vector<2x32xf32>
    %175 = math.tanh %174 : vector<2x32xf32>
    %cst_86 = arith.constant 1.000000e+00 : f32
    %176 = vector.broadcast %cst_86 : f32 to vector<2x32xf32>
    %177 = arith.subf %176, %170 : vector<2x32xf32>
    %178 = arith.mulf %177, %175 : vector<2x32xf32>
    %179 = arith.mulf %170, %145 : vector<2x32xf32>
    %180 = arith.addf %178, %179 : vector<2x32xf32>
    %c0_87 = arith.constant 0 : index
    %c0_88 = arith.constant 0 : index
    %181 = vector.load %arg9[%c0_87, %c0_88] : memref<32x96xf32, #tpu.memory_space<vmem>>, vector<32x96xf32>
    %cst_89 = arith.constant dense<0.000000e+00> : vector<2x96xf32>
    %182 = tpu.matmul %180, %181, %cst_89 {dimension_numbers = #tpu.dot_dimension_numbers<[1], [0], [0], [1], [0, 0, 1, 1], [], []>} : vector<2x32xf32>, vector<32x96xf32>, vector<2x96xf32> -> vector<2x96xf32>
    %c0_90 = arith.constant 0 : index
    %c0_91 = arith.constant 0 : index
    %183 = vector.load %arg10[%c0_90, %c0_91] : memref<1x96xf32, #tpu.memory_space<vmem>>, vector<1x96xf32>
    %184 = vector.broadcast %183 : vector<1x96xf32> to vector<2x96xf32>
    %185 = arith.addf %182, %184 : vector<2x96xf32>
    %186 = vector.extract_strided_slice %107 {offsets = [4, 0], sizes = [2, 32], strides = [1, 1]} : vector<16x32xf32> to vector<2x32xf32>
    %187 = vector.extract_strided_slice %185 {offsets = [0, 0], sizes = [2, 32], strides = [1, 1]} : vector<2x96xf32> to vector<2x32xf32>
    %188 = arith.addf %186, %187 : vector<2x32xf32>
    %cst_92 = arith.constant 0.000000e+00 : f32
    %189 = vector.broadcast %cst_92 : f32 to vector<2x32xf32>
    %190 = arith.subf %189, %188 : vector<2x32xf32>
    %191 = math.exp %190 : vector<2x32xf32>
    %cst_93 = arith.constant 1.000000e+00 : f32
    %192 = vector.broadcast %cst_93 : f32 to vector<2x32xf32>
    %193 = arith.addf %192, %191 : vector<2x32xf32>
    %cst_94 = arith.constant 1.000000e+00 : f32
    %194 = vector.broadcast %cst_94 : f32 to vector<2x32xf32>
    %195 = arith.divf %194, %193 : vector<2x32xf32>
    %196 = vector.extract_strided_slice %108 {offsets = [4, 0], sizes = [2, 32], strides = [1, 1]} : vector<16x32xf32> to vector<2x32xf32>
    %197 = vector.extract_strided_slice %185 {offsets = [0, 32], sizes = [2, 32], strides = [1, 1]} : vector<2x96xf32> to vector<2x32xf32>
    %198 = arith.addf %196, %197 : vector<2x32xf32>
    %cst_95 = arith.constant 0.000000e+00 : f32
    %199 = vector.broadcast %cst_95 : f32 to vector<2x32xf32>
    %200 = arith.subf %199, %198 : vector<2x32xf32>
    %201 = math.exp %200 : vector<2x32xf32>
    %cst_96 = arith.constant 1.000000e+00 : f32
    %202 = vector.broadcast %cst_96 : f32 to vector<2x32xf32>
    %203 = arith.addf %202, %201 : vector<2x32xf32>
    %cst_97 = arith.constant 1.000000e+00 : f32
    %204 = vector.broadcast %cst_97 : f32 to vector<2x32xf32>
    %205 = arith.divf %204, %203 : vector<2x32xf32>
    %206 = vector.extract_strided_slice %109 {offsets = [4, 0], sizes = [2, 32], strides = [1, 1]} : vector<16x32xf32> to vector<2x32xf32>
    %207 = vector.extract_strided_slice %185 {offsets = [0, 64], sizes = [2, 32], strides = [1, 1]} : vector<2x96xf32> to vector<2x32xf32>
    %208 = arith.mulf %195, %207 : vector<2x32xf32>
    %209 = arith.addf %206, %208 : vector<2x32xf32>
    %210 = math.tanh %209 : vector<2x32xf32>
    %cst_98 = arith.constant 1.000000e+00 : f32
    %211 = vector.broadcast %cst_98 : f32 to vector<2x32xf32>
    %212 = arith.subf %211, %205 : vector<2x32xf32>
    %213 = arith.mulf %212, %210 : vector<2x32xf32>
    %214 = arith.mulf %205, %180 : vector<2x32xf32>
    %215 = arith.addf %213, %214 : vector<2x32xf32>
    %c0_99 = arith.constant 0 : index
    %c0_100 = arith.constant 0 : index
    %216 = vector.load %arg9[%c0_99, %c0_100] : memref<32x96xf32, #tpu.memory_space<vmem>>, vector<32x96xf32>
    %cst_101 = arith.constant dense<0.000000e+00> : vector<2x96xf32>
    %217 = tpu.matmul %215, %216, %cst_101 {dimension_numbers = #tpu.dot_dimension_numbers<[1], [0], [0], [1], [0, 0, 1, 1], [], []>} : vector<2x32xf32>, vector<32x96xf32>, vector<2x96xf32> -> vector<2x96xf32>
    %c0_102 = arith.constant 0 : index
    %c0_103 = arith.constant 0 : index
    %218 = vector.load %arg10[%c0_102, %c0_103] : memref<1x96xf32, #tpu.memory_space<vmem>>, vector<1x96xf32>
    %219 = vector.broadcast %218 : vector<1x96xf32> to vector<2x96xf32>
    %220 = arith.addf %217, %219 : vector<2x96xf32>
    %221 = vector.extract_strided_slice %107 {offsets = [6, 0], sizes = [2, 32], strides = [1, 1]} : vector<16x32xf32> to vector<2x32xf32>
    %222 = vector.extract_strided_slice %220 {offsets = [0, 0], sizes = [2, 32], strides = [1, 1]} : vector<2x96xf32> to vector<2x32xf32>
    %223 = arith.addf %221, %222 : vector<2x32xf32>
    %cst_104 = arith.constant 0.000000e+00 : f32
    %224 = vector.broadcast %cst_104 : f32 to vector<2x32xf32>
    %225 = arith.subf %224, %223 : vector<2x32xf32>
    %226 = math.exp %225 : vector<2x32xf32>
    %cst_105 = arith.constant 1.000000e+00 : f32
    %227 = vector.broadcast %cst_105 : f32 to vector<2x32xf32>
    %228 = arith.addf %227, %226 : vector<2x32xf32>
    %cst_106 = arith.constant 1.000000e+00 : f32
    %229 = vector.broadcast %cst_106 : f32 to vector<2x32xf32>
    %230 = arith.divf %229, %228 : vector<2x32xf32>
    %231 = vector.extract_strided_slice %108 {offsets = [6, 0], sizes = [2, 32], strides = [1, 1]} : vector<16x32xf32> to vector<2x32xf32>
    %232 = vector.extract_strided_slice %220 {offsets = [0, 32], sizes = [2, 32], strides = [1, 1]} : vector<2x96xf32> to vector<2x32xf32>
    %233 = arith.addf %231, %232 : vector<2x32xf32>
    %cst_107 = arith.constant 0.000000e+00 : f32
    %234 = vector.broadcast %cst_107 : f32 to vector<2x32xf32>
    %235 = arith.subf %234, %233 : vector<2x32xf32>
    %236 = math.exp %235 : vector<2x32xf32>
    %cst_108 = arith.constant 1.000000e+00 : f32
    %237 = vector.broadcast %cst_108 : f32 to vector<2x32xf32>
    %238 = arith.addf %237, %236 : vector<2x32xf32>
    %cst_109 = arith.constant 1.000000e+00 : f32
    %239 = vector.broadcast %cst_109 : f32 to vector<2x32xf32>
    %240 = arith.divf %239, %238 : vector<2x32xf32>
    %241 = vector.extract_strided_slice %109 {offsets = [6, 0], sizes = [2, 32], strides = [1, 1]} : vector<16x32xf32> to vector<2x32xf32>
    %242 = vector.extract_strided_slice %220 {offsets = [0, 64], sizes = [2, 32], strides = [1, 1]} : vector<2x96xf32> to vector<2x32xf32>
    %243 = arith.mulf %230, %242 : vector<2x32xf32>
    %244 = arith.addf %241, %243 : vector<2x32xf32>
    %245 = math.tanh %244 : vector<2x32xf32>
    %cst_110 = arith.constant 1.000000e+00 : f32
    %246 = vector.broadcast %cst_110 : f32 to vector<2x32xf32>
    %247 = arith.subf %246, %240 : vector<2x32xf32>
    %248 = arith.mulf %247, %245 : vector<2x32xf32>
    %249 = arith.mulf %240, %215 : vector<2x32xf32>
    %250 = arith.addf %248, %249 : vector<2x32xf32>
    %c0_111 = arith.constant 0 : index
    %c0_112 = arith.constant 0 : index
    %251 = vector.load %arg9[%c0_111, %c0_112] : memref<32x96xf32, #tpu.memory_space<vmem>>, vector<32x96xf32>
    %cst_113 = arith.constant dense<0.000000e+00> : vector<2x96xf32>
    %252 = tpu.matmul %250, %251, %cst_113 {dimension_numbers = #tpu.dot_dimension_numbers<[1], [0], [0], [1], [0, 0, 1, 1], [], []>} : vector<2x32xf32>, vector<32x96xf32>, vector<2x96xf32> -> vector<2x96xf32>
    %c0_114 = arith.constant 0 : index
    %c0_115 = arith.constant 0 : index
    %253 = vector.load %arg10[%c0_114, %c0_115] : memref<1x96xf32, #tpu.memory_space<vmem>>, vector<1x96xf32>
    %254 = vector.broadcast %253 : vector<1x96xf32> to vector<2x96xf32>
    %255 = arith.addf %252, %254 : vector<2x96xf32>
    %256 = vector.extract_strided_slice %107 {offsets = [8, 0], sizes = [2, 32], strides = [1, 1]} : vector<16x32xf32> to vector<2x32xf32>
    %257 = vector.extract_strided_slice %255 {offsets = [0, 0], sizes = [2, 32], strides = [1, 1]} : vector<2x96xf32> to vector<2x32xf32>
    %258 = arith.addf %256, %257 : vector<2x32xf32>
    %cst_116 = arith.constant 0.000000e+00 : f32
    %259 = vector.broadcast %cst_116 : f32 to vector<2x32xf32>
    %260 = arith.subf %259, %258 : vector<2x32xf32>
    %261 = math.exp %260 : vector<2x32xf32>
    %cst_117 = arith.constant 1.000000e+00 : f32
    %262 = vector.broadcast %cst_117 : f32 to vector<2x32xf32>
    %263 = arith.addf %262, %261 : vector<2x32xf32>
    %cst_118 = arith.constant 1.000000e+00 : f32
    %264 = vector.broadcast %cst_118 : f32 to vector<2x32xf32>
    %265 = arith.divf %264, %263 : vector<2x32xf32>
    %266 = vector.extract_strided_slice %108 {offsets = [8, 0], sizes = [2, 32], strides = [1, 1]} : vector<16x32xf32> to vector<2x32xf32>
    %267 = vector.extract_strided_slice %255 {offsets = [0, 32], sizes = [2, 32], strides = [1, 1]} : vector<2x96xf32> to vector<2x32xf32>
    %268 = arith.addf %266, %267 : vector<2x32xf32>
    %cst_119 = arith.constant 0.000000e+00 : f32
    %269 = vector.broadcast %cst_119 : f32 to vector<2x32xf32>
    %270 = arith.subf %269, %268 : vector<2x32xf32>
    %271 = math.exp %270 : vector<2x32xf32>
    %cst_120 = arith.constant 1.000000e+00 : f32
    %272 = vector.broadcast %cst_120 : f32 to vector<2x32xf32>
    %273 = arith.addf %272, %271 : vector<2x32xf32>
    %cst_121 = arith.constant 1.000000e+00 : f32
    %274 = vector.broadcast %cst_121 : f32 to vector<2x32xf32>
    %275 = arith.divf %274, %273 : vector<2x32xf32>
    %276 = vector.extract_strided_slice %109 {offsets = [8, 0], sizes = [2, 32], strides = [1, 1]} : vector<16x32xf32> to vector<2x32xf32>
    %277 = vector.extract_strided_slice %255 {offsets = [0, 64], sizes = [2, 32], strides = [1, 1]} : vector<2x96xf32> to vector<2x32xf32>
    %278 = arith.mulf %265, %277 : vector<2x32xf32>
    %279 = arith.addf %276, %278 : vector<2x32xf32>
    %280 = math.tanh %279 : vector<2x32xf32>
    %cst_122 = arith.constant 1.000000e+00 : f32
    %281 = vector.broadcast %cst_122 : f32 to vector<2x32xf32>
    %282 = arith.subf %281, %275 : vector<2x32xf32>
    %283 = arith.mulf %282, %280 : vector<2x32xf32>
    %284 = arith.mulf %275, %250 : vector<2x32xf32>
    %285 = arith.addf %283, %284 : vector<2x32xf32>
    %c0_123 = arith.constant 0 : index
    %c0_124 = arith.constant 0 : index
    %286 = vector.load %arg9[%c0_123, %c0_124] : memref<32x96xf32, #tpu.memory_space<vmem>>, vector<32x96xf32>
    %cst_125 = arith.constant dense<0.000000e+00> : vector<2x96xf32>
    %287 = tpu.matmul %285, %286, %cst_125 {dimension_numbers = #tpu.dot_dimension_numbers<[1], [0], [0], [1], [0, 0, 1, 1], [], []>} : vector<2x32xf32>, vector<32x96xf32>, vector<2x96xf32> -> vector<2x96xf32>
    %c0_126 = arith.constant 0 : index
    %c0_127 = arith.constant 0 : index
    %288 = vector.load %arg10[%c0_126, %c0_127] : memref<1x96xf32, #tpu.memory_space<vmem>>, vector<1x96xf32>
    %289 = vector.broadcast %288 : vector<1x96xf32> to vector<2x96xf32>
    %290 = arith.addf %287, %289 : vector<2x96xf32>
    %291 = vector.extract_strided_slice %107 {offsets = [10, 0], sizes = [2, 32], strides = [1, 1]} : vector<16x32xf32> to vector<2x32xf32>
    %292 = vector.extract_strided_slice %290 {offsets = [0, 0], sizes = [2, 32], strides = [1, 1]} : vector<2x96xf32> to vector<2x32xf32>
    %293 = arith.addf %291, %292 : vector<2x32xf32>
    %cst_128 = arith.constant 0.000000e+00 : f32
    %294 = vector.broadcast %cst_128 : f32 to vector<2x32xf32>
    %295 = arith.subf %294, %293 : vector<2x32xf32>
    %296 = math.exp %295 : vector<2x32xf32>
    %cst_129 = arith.constant 1.000000e+00 : f32
    %297 = vector.broadcast %cst_129 : f32 to vector<2x32xf32>
    %298 = arith.addf %297, %296 : vector<2x32xf32>
    %cst_130 = arith.constant 1.000000e+00 : f32
    %299 = vector.broadcast %cst_130 : f32 to vector<2x32xf32>
    %300 = arith.divf %299, %298 : vector<2x32xf32>
    %301 = vector.extract_strided_slice %108 {offsets = [10, 0], sizes = [2, 32], strides = [1, 1]} : vector<16x32xf32> to vector<2x32xf32>
    %302 = vector.extract_strided_slice %290 {offsets = [0, 32], sizes = [2, 32], strides = [1, 1]} : vector<2x96xf32> to vector<2x32xf32>
    %303 = arith.addf %301, %302 : vector<2x32xf32>
    %cst_131 = arith.constant 0.000000e+00 : f32
    %304 = vector.broadcast %cst_131 : f32 to vector<2x32xf32>
    %305 = arith.subf %304, %303 : vector<2x32xf32>
    %306 = math.exp %305 : vector<2x32xf32>
    %cst_132 = arith.constant 1.000000e+00 : f32
    %307 = vector.broadcast %cst_132 : f32 to vector<2x32xf32>
    %308 = arith.addf %307, %306 : vector<2x32xf32>
    %cst_133 = arith.constant 1.000000e+00 : f32
    %309 = vector.broadcast %cst_133 : f32 to vector<2x32xf32>
    %310 = arith.divf %309, %308 : vector<2x32xf32>
    %311 = vector.extract_strided_slice %109 {offsets = [10, 0], sizes = [2, 32], strides = [1, 1]} : vector<16x32xf32> to vector<2x32xf32>
    %312 = vector.extract_strided_slice %290 {offsets = [0, 64], sizes = [2, 32], strides = [1, 1]} : vector<2x96xf32> to vector<2x32xf32>
    %313 = arith.mulf %300, %312 : vector<2x32xf32>
    %314 = arith.addf %311, %313 : vector<2x32xf32>
    %315 = math.tanh %314 : vector<2x32xf32>
    %cst_134 = arith.constant 1.000000e+00 : f32
    %316 = vector.broadcast %cst_134 : f32 to vector<2x32xf32>
    %317 = arith.subf %316, %310 : vector<2x32xf32>
    %318 = arith.mulf %317, %315 : vector<2x32xf32>
    %319 = arith.mulf %310, %285 : vector<2x32xf32>
    %320 = arith.addf %318, %319 : vector<2x32xf32>
    %c0_135 = arith.constant 0 : index
    %c0_136 = arith.constant 0 : index
    %321 = vector.load %arg9[%c0_135, %c0_136] : memref<32x96xf32, #tpu.memory_space<vmem>>, vector<32x96xf32>
    %cst_137 = arith.constant dense<0.000000e+00> : vector<2x96xf32>
    %322 = tpu.matmul %320, %321, %cst_137 {dimension_numbers = #tpu.dot_dimension_numbers<[1], [0], [0], [1], [0, 0, 1, 1], [], []>} : vector<2x32xf32>, vector<32x96xf32>, vector<2x96xf32> -> vector<2x96xf32>
    %c0_138 = arith.constant 0 : index
    %c0_139 = arith.constant 0 : index
    %323 = vector.load %arg10[%c0_138, %c0_139] : memref<1x96xf32, #tpu.memory_space<vmem>>, vector<1x96xf32>
    %324 = vector.broadcast %323 : vector<1x96xf32> to vector<2x96xf32>
    %325 = arith.addf %322, %324 : vector<2x96xf32>
    %326 = vector.extract_strided_slice %107 {offsets = [12, 0], sizes = [2, 32], strides = [1, 1]} : vector<16x32xf32> to vector<2x32xf32>
    %327 = vector.extract_strided_slice %325 {offsets = [0, 0], sizes = [2, 32], strides = [1, 1]} : vector<2x96xf32> to vector<2x32xf32>
    %328 = arith.addf %326, %327 : vector<2x32xf32>
    %cst_140 = arith.constant 0.000000e+00 : f32
    %329 = vector.broadcast %cst_140 : f32 to vector<2x32xf32>
    %330 = arith.subf %329, %328 : vector<2x32xf32>
    %331 = math.exp %330 : vector<2x32xf32>
    %cst_141 = arith.constant 1.000000e+00 : f32
    %332 = vector.broadcast %cst_141 : f32 to vector<2x32xf32>
    %333 = arith.addf %332, %331 : vector<2x32xf32>
    %cst_142 = arith.constant 1.000000e+00 : f32
    %334 = vector.broadcast %cst_142 : f32 to vector<2x32xf32>
    %335 = arith.divf %334, %333 : vector<2x32xf32>
    %336 = vector.extract_strided_slice %108 {offsets = [12, 0], sizes = [2, 32], strides = [1, 1]} : vector<16x32xf32> to vector<2x32xf32>
    %337 = vector.extract_strided_slice %325 {offsets = [0, 32], sizes = [2, 32], strides = [1, 1]} : vector<2x96xf32> to vector<2x32xf32>
    %338 = arith.addf %336, %337 : vector<2x32xf32>
    %cst_143 = arith.constant 0.000000e+00 : f32
    %339 = vector.broadcast %cst_143 : f32 to vector<2x32xf32>
    %340 = arith.subf %339, %338 : vector<2x32xf32>
    %341 = math.exp %340 : vector<2x32xf32>
    %cst_144 = arith.constant 1.000000e+00 : f32
    %342 = vector.broadcast %cst_144 : f32 to vector<2x32xf32>
    %343 = arith.addf %342, %341 : vector<2x32xf32>
    %cst_145 = arith.constant 1.000000e+00 : f32
    %344 = vector.broadcast %cst_145 : f32 to vector<2x32xf32>
    %345 = arith.divf %344, %343 : vector<2x32xf32>
    %346 = vector.extract_strided_slice %109 {offsets = [12, 0], sizes = [2, 32], strides = [1, 1]} : vector<16x32xf32> to vector<2x32xf32>
    %347 = vector.extract_strided_slice %325 {offsets = [0, 64], sizes = [2, 32], strides = [1, 1]} : vector<2x96xf32> to vector<2x32xf32>
    %348 = arith.mulf %335, %347 : vector<2x32xf32>
    %349 = arith.addf %346, %348 : vector<2x32xf32>
    %350 = math.tanh %349 : vector<2x32xf32>
    %cst_146 = arith.constant 1.000000e+00 : f32
    %351 = vector.broadcast %cst_146 : f32 to vector<2x32xf32>
    %352 = arith.subf %351, %345 : vector<2x32xf32>
    %353 = arith.mulf %352, %350 : vector<2x32xf32>
    %354 = arith.mulf %345, %320 : vector<2x32xf32>
    %355 = arith.addf %353, %354 : vector<2x32xf32>
    %c0_147 = arith.constant 0 : index
    %c0_148 = arith.constant 0 : index
    %356 = vector.load %arg9[%c0_147, %c0_148] : memref<32x96xf32, #tpu.memory_space<vmem>>, vector<32x96xf32>
    %cst_149 = arith.constant dense<0.000000e+00> : vector<2x96xf32>
    %357 = tpu.matmul %355, %356, %cst_149 {dimension_numbers = #tpu.dot_dimension_numbers<[1], [0], [0], [1], [0, 0, 1, 1], [], []>} : vector<2x32xf32>, vector<32x96xf32>, vector<2x96xf32> -> vector<2x96xf32>
    %c0_150 = arith.constant 0 : index
    %c0_151 = arith.constant 0 : index
    %358 = vector.load %arg10[%c0_150, %c0_151] : memref<1x96xf32, #tpu.memory_space<vmem>>, vector<1x96xf32>
    %359 = vector.broadcast %358 : vector<1x96xf32> to vector<2x96xf32>
    %360 = arith.addf %357, %359 : vector<2x96xf32>
    %361 = vector.extract_strided_slice %107 {offsets = [14, 0], sizes = [2, 32], strides = [1, 1]} : vector<16x32xf32> to vector<2x32xf32>
    %362 = vector.extract_strided_slice %360 {offsets = [0, 0], sizes = [2, 32], strides = [1, 1]} : vector<2x96xf32> to vector<2x32xf32>
    %363 = arith.addf %361, %362 : vector<2x32xf32>
    %cst_152 = arith.constant 0.000000e+00 : f32
    %364 = vector.broadcast %cst_152 : f32 to vector<2x32xf32>
    %365 = arith.subf %364, %363 : vector<2x32xf32>
    %366 = math.exp %365 : vector<2x32xf32>
    %cst_153 = arith.constant 1.000000e+00 : f32
    %367 = vector.broadcast %cst_153 : f32 to vector<2x32xf32>
    %368 = arith.addf %367, %366 : vector<2x32xf32>
    %cst_154 = arith.constant 1.000000e+00 : f32
    %369 = vector.broadcast %cst_154 : f32 to vector<2x32xf32>
    %370 = arith.divf %369, %368 : vector<2x32xf32>
    %371 = vector.extract_strided_slice %108 {offsets = [14, 0], sizes = [2, 32], strides = [1, 1]} : vector<16x32xf32> to vector<2x32xf32>
    %372 = vector.extract_strided_slice %360 {offsets = [0, 32], sizes = [2, 32], strides = [1, 1]} : vector<2x96xf32> to vector<2x32xf32>
    %373 = arith.addf %371, %372 : vector<2x32xf32>
    %cst_155 = arith.constant 0.000000e+00 : f32
    %374 = vector.broadcast %cst_155 : f32 to vector<2x32xf32>
    %375 = arith.subf %374, %373 : vector<2x32xf32>
    %376 = math.exp %375 : vector<2x32xf32>
    %cst_156 = arith.constant 1.000000e+00 : f32
    %377 = vector.broadcast %cst_156 : f32 to vector<2x32xf32>
    %378 = arith.addf %377, %376 : vector<2x32xf32>
    %cst_157 = arith.constant 1.000000e+00 : f32
    %379 = vector.broadcast %cst_157 : f32 to vector<2x32xf32>
    %380 = arith.divf %379, %378 : vector<2x32xf32>
    %381 = vector.extract_strided_slice %109 {offsets = [14, 0], sizes = [2, 32], strides = [1, 1]} : vector<16x32xf32> to vector<2x32xf32>
    %382 = vector.extract_strided_slice %360 {offsets = [0, 64], sizes = [2, 32], strides = [1, 1]} : vector<2x96xf32> to vector<2x32xf32>
    %383 = arith.mulf %370, %382 : vector<2x32xf32>
    %384 = arith.addf %381, %383 : vector<2x32xf32>
    %385 = math.tanh %384 : vector<2x32xf32>
    %cst_158 = arith.constant 1.000000e+00 : f32
    %386 = vector.broadcast %cst_158 : f32 to vector<2x32xf32>
    %387 = arith.subf %386, %380 : vector<2x32xf32>
    %388 = arith.mulf %387, %385 : vector<2x32xf32>
    %389 = arith.mulf %380, %355 : vector<2x32xf32>
    %390 = arith.addf %388, %389 : vector<2x32xf32>
    %c0_159 = arith.constant 0 : index
    %c0_160 = arith.constant 0 : index
    %391 = vector.load %arg11[%c0_159, %c0_160] : memref<2x32xf32, #tpu.memory_space<vmem>>, vector<2x32xf32>
    tpu.vector_store %arg11[%c0_159, %c0_160], %390 {strides = array<i32>} : memref<2x32xf32, #tpu.memory_space<vmem>>, vector<2x32xf32>,
    return
  }
}

</mosaic_0001>

<llo_original>
// kernel: rollout_encoder_forward.1
$region0: #{rollout_encoder_forward.1}
  #allocation0 [shape = 'u32[]', space=smem, size = 0x4, offset = 0x4, fixed_abs, tag = 'smem constant byte address 0x4 - core index']
  #allocation1 [shape = 'u32[144,128]{1,0:T(1,128)}', space=vmem, size = 0x12000, scoped, tag = 'internal scratch']
  #allocation2 [shape = 'f32[16,576]{1,0:T(8,128)}', space=vmem, size = 0xa000, scoped, tag = 'scratch operand']
  %s0 = inlined_call_operand.vmem [shape: bf16[576,324], index: 0, kind: input, shape index: {}]
  %s1 = inlined_call_operand.vmem [shape: bf16[324,144], index: 1, kind: input, shape index: {}]
  %s2 = inlined_call_operand.vmem [shape: f32[1,144], index: 2, kind: input, shape index: {}]
  %s3 = inlined_call_operand.vmem [shape: bf16[144,16], index: 3, kind: input, shape index: {}]
  %s4 = inlined_call_operand.vmem [shape: f32[1,16], index: 4, kind: input, shape index: {}]
  %s5 = inlined_call_operand.vmem [shape: f32[16,1], index: 5, kind: input, shape index: {}]
  %s6 = inlined_call_operand.vmem [shape: bf16[576,96], index: 6, kind: input, shape index: {}]
  %s7 = inlined_call_operand.vmem [shape: f32[1,96], index: 7, kind: input, shape index: {}]
  %s8 = inlined_call_operand.vmem [shape: f32[1,96], index: 8, kind: input, shape index: {}]
  %s9 = inlined_call_operand.vmem [shape: f32[32,96], index: 9, kind: input, shape index: {}]
  %s10 = inlined_call_operand.vmem [shape: f32[1,96], index: 10, kind: input, shape index: {}]
  %s11 = inlined_call_operand.hbm [shape: f32[2,32], index: 11, kind: output, shape index: {}]
  %s12 = sld [smem:[#allocation0]]
  $region54: #{rollout_encoder_forward.1} parent=0
    _
  %s14 = ssub.s32 1, %s12
  %s15 = scalar_select 0, %s14, %s12
  $region1: #{rollout_encoder_forward.1} parent=0
    #allocation3 [shape = 'u8[1024]{0}', space=vmem, size = 0x400, scoped, tag = 'output window, operand 0, single buffered']
    #allocation4 [shape = 's32[1]{0}', space=sflag, size = 0x4, scoped, tag = 'scoped memory for rollout_encoder_forward.1']
    %16 = vsyncpa [#allocation4], 0
    // Predicated region
    $region2: #{rollout_encoder_forward.1} parent=1 // pred_check
      _
    $region3: #{rollout_encoder_forward.1} parent=1 // pred_check_branch
      %18 = sbr.rel (0) target = $region5
    $region4: #{rollout_encoder_forward.1} parent=1 // pred_region
      _
    $region5: #{rollout_encoder_forward.1} parent=1 // pred_fallthru
      _
    // Predicated region
    $region6: #{rollout_encoder_forward.1} parent=1 // pred_check
      _
    $region7: #{rollout_encoder_forward.1} parent=1 // pred_check_branch
      %20 = sbr.rel (0) target = $region9
    $region8: #{rollout_encoder_forward.1} parent=1 // pred_region
      _
    $region9: #{rollout_encoder_forward.1} parent=1 // pred_fallthru
      _
    // Predicated region
    $region10: #{rollout_encoder_forward.1} parent=1 // pred_check
      _
    $region11: #{rollout_encoder_forward.1} parent=1 // pred_check_branch
      %22 = sbr.rel (0) target = $region13
    $region12: #{rollout_encoder_forward.1} parent=1 // pred_region
      _
    $region13: #{rollout_encoder_forward.1} parent=1 // pred_fallthru
      _
    // Predicated region
    $region14: #{rollout_encoder_forward.1} parent=1 // pred_check
      _
    $region15: #{rollout_encoder_forward.1} parent=1 // pred_check_branch
      %24 = sbr.rel (0) target = $region17
    $region16: #{rollout_encoder_forward.1} parent=1 // pred_region
      _
    $region17: #{rollout_encoder_forward.1} parent=1 // pred_fallthru
      _
    // Predicated region
    $region18: #{rollout_encoder_forward.1} parent=1 // pred_check
      _
    $region19: #{rollout_encoder_forward.1} parent=1 // pred_check_branch
      %26 = sbr.rel (0) target = $region21
    $region20: #{rollout_encoder_forward.1} parent=1 // pred_region
      _
    $region21: #{rollout_encoder_forward.1} parent=1 // pred_fallthru
      _
    // Predicated region
    $region22: #{rollout_encoder_forward.1} parent=1 // pred_check
      _
    $region23: #{rollout_encoder_forward.1} parent=1 // pred_check_branch
      %28 = sbr.rel (0) target = $region25
    $region24: #{rollout_encoder_forward.1} parent=1 // pred_region
      _
    $region25: #{rollout_encoder_forward.1} parent=1 // pred_fallthru
      _
    // Predicated region
    $region26: #{rollout_encoder_forward.1} parent=1 // pred_check
      _
    $region27: #{rollout_encoder_forward.1} parent=1 // pred_check_branch
      %30 = sbr.rel (0) target = $region29
    $region28: #{rollout_encoder_forward.1} parent=1 // pred_region
      _
    $region29: #{rollout_encoder_forward.1} parent=1 // pred_fallthru
      _
    // Predicated region
    $region30: #{rollout_encoder_forward.1} parent=1 // pred_check
      _
    $region31: #{rollout_encoder_forward.1} parent=1 // pred_check_branch
      %32 = sbr.rel (0) target = $region33
    $region32: #{rollout_encoder_forward.1} parent=1 // pred_region
      _
    $region33: #{rollout_encoder_forward.1} parent=1 // pred_fallthru
      _
    // Predicated region
    $region34: #{rollout_encoder_forward.1} parent=1 // pred_check
      _
    $region35: #{rollout_encoder_forward.1} parent=1 // pred_check_branch
      %34 = sbr.rel (0) target = $region37
    $region36: #{rollout_encoder_forward.1} parent=1 // pred_region
      _
    $region37: #{rollout_encoder_forward.1} parent=1 // pred_fallthru
      _
    // Predicated region
    $region38: #{rollout_encoder_forward.1} parent=1 // pred_check
      _
    $region39: #{rollout_encoder_forward.1} parent=1 // pred_check_branch
      %36 = sbr.rel (0) target = $region41
    $region40: #{rollout_encoder_forward.1} parent=1 // pred_region
      _
    $region41: #{rollout_encoder_forward.1} parent=1 // pred_fallthru
      _
    // Predicated region
    $region42: #{rollout_encoder_forward.1} parent=1 // pred_check
      _
    $region43: #{rollout_encoder_forward.1} parent=1 // pred_check_branch
      %38 = sbr.rel (0) target = $region45
    $region44: #{rollout_encoder_forward.1} parent=1 // pred_region
      _
    $region45: #{rollout_encoder_forward.1} parent=1 // pred_fallthru
      _
    %v40 = vld [vmem:[%s0] sm:$0xff]
    %v41 = vld [vmem:[%s0 + $0x8] sm:$0xf]
    %v42 = vld [vmem:[%s0 + $0xc] sm:$0xff]
    %v43 = vld [vmem:[%s0 + $0x14] sm:$0xf]
    %v44 = vld [vmem:[%s0 + $0x18] sm:$0xff]
    %v45 = vld [vmem:[%s0 + $0x20] sm:$0xf]
    %v46 = vld [vmem:[%s0 + $0x24] sm:$0xff]
    %v47 = vld [vmem:[%s0 + $0x2c] sm:$0xf]
    %v48 = vld [vmem:[%s0 + $0x30] sm:$0xff]
    %v49 = vld [vmem:[%s0 + $0x38] sm:$0xf]
    %v50 = vld [vmem:[%s0 + $0x3c] sm:$0xff]
    %v51 = vld [vmem:[%s0 + $0x44] sm:$0xf]
    %v52 = vld [vmem:[%s0 + $0x48] sm:$0xff]
    %v53 = vld [vmem:[%s0 + $0x50] sm:$0xf]
    %v54 = vld [vmem:[%s0 + $0x54] sm:$0xff]
    %v55 = vld [vmem:[%s0 + $0x5c] sm:$0xf]
    %v56 = vld [vmem:[%s0 + $0x60] sm:$0xff]
    %v57 = vld [vmem:[%s0 + $0x68] sm:$0xf]
    %v58 = vld [vmem:[%s0 + $0x6c] sm:$0xff]
    %v59 = vld [vmem:[%s0 + $0x74] sm:$0xf]
    %v60 = vld [vmem:[%s0 + $0x78] sm:$0xff]
    %v61 = vld [vmem:[%s0 + $0x80] sm:$0xf]
    %v62 = vld [vmem:[%s0 + $0x84] sm:$0xff]
    %v63 = vld [vmem:[%s0 + $0x8c] sm:$0xf]
    %v64 = vld [vmem:[%s0 + $0x90] sm:$0xff]
    %v65 = vld [vmem:[%s0 + $0x98] sm:$0xf]
    %v66 = vld [vmem:[%s0 + $0x9c] sm:$0xff]
    %v67 = vld [vmem:[%s0 + $0xa4] sm:$0xf]
    %v68 = vld [vmem:[%s0 + $0xa8] sm:$0xff]
    %v69 = vld [vmem:[%s0 + $0xb0] sm:$0xf]
    %v70 = vld [vmem:[%s0 + $0xb4] sm:$0xff]
    %v71 = vld [vmem:[%s0 + $0xbc] sm:$0xf]
    %v72 = vld [vmem:[%s0 + $0xc0] sm:$0xff]
    %v73 = vld [vmem:[%s0 + $0xc8] sm:$0xf]
    %v74 = vld [vmem:[%s0 + $0xcc] sm:$0xff]
    %v75 = vld [vmem:[%s0 + $0xd4] sm:$0xf]
    %v76 = vld [vmem:[%s0 + $0xd8] sm:$0xff]
    %v77 = vld [vmem:[%s0 + $0xe0] sm:$0xf]
    %v78 = vld [vmem:[%s0 + $0xe4] sm:$0xff]
    %v79 = vld [vmem:[%s0 + $0xec] sm:$0xf]
    %v80 = vld [vmem:[%s0 + $0xf0] sm:$0xff]
    %v81 = vld [vmem:[%s0 + $0xf8] sm:$0xf]
    %v82 = vld [vmem:[%s0 + $0xfc] sm:$0xff]
    %v83 = vld [vmem:[%s0 + $0x104] sm:$0xf]
    %v84 = vld [vmem:[%s0 + $0x108] sm:$0xff]
    %v85 = vld [vmem:[%s0 + $0x110] sm:$0xf]
    %v86 = vld [vmem:[%s0 + $0x114] sm:$0xff]
    %v87 = vld [vmem:[%s0 + $0x11c] sm:$0xf]
    %v88 = vld [vmem:[%s0 + $0x120] sm:$0xff]
    %v89 = vld [vmem:[%s0 + $0x128] sm:$0xf]
    %v90 = vld [vmem:[%s0 + $0x12c] sm:$0xff]
    %v91 = vld [vmem:[%s0 + $0x134] sm:$0xf]
    %v92 = vld [vmem:[%s0 + $0x138] sm:$0xff]
    %v93 = vld [vmem:[%s0 + $0x140] sm:$0xf]
    %v94 = vld [vmem:[%s0 + $0x144] sm:$0xff]
    %v95 = vld [vmem:[%s0 + $0x14c] sm:$0xf]
    %v96 = vld [vmem:[%s0 + $0x150] sm:$0xff]
    %v97 = vld [vmem:[%s0 + $0x158] sm:$0xf]
    %v98 = vld [vmem:[%s0 + $0x15c] sm:$0xff]
    %v99 = vld [vmem:[%s0 + $0x164] sm:$0xf]
    %v100 = vld [vmem:[%s0 + $0x168] sm:$0xff]
    %v101 = vld [vmem:[%s0 + $0x170] sm:$0xf]
    %v102 = vld [vmem:[%s0 + $0x174] sm:$0xff]
    %v103 = vld [vmem:[%s0 + $0x17c] sm:$0xf]
    %v104 = vld [vmem:[%s0 + $0x180] sm:$0xff]
    %v105 = vld [vmem:[%s0 + $0x188] sm:$0xf]
    %v106 = vld [vmem:[%s0 + $0x18c] sm:$0xff]
    %v107 = vld [vmem:[%s0 + $0x194] sm:$0xf]
    %v108 = vld [vmem:[%s0 + $0x198] sm:$0xff]
    %v109 = vld [vmem:[%s0 + $0x1a0] sm:$0xf]
    %v110 = vld [vmem:[%s0 + $0x1a4] sm:$0xff]
    %v111 = vld [vmem:[%s0 + $0x1ac] sm:$0xf]
    %v112 = vld [vmem:[%s0 + $0x1b0] sm:$0xff]
    %v113 = vld [vmem:[%s0 + $0x1b8] sm:$0xf]
    %v114 = vld [vmem:[%s0 + $0x1bc] sm:$0xff]
    %v115 = vld [vmem:[%s0 + $0x1c4] sm:$0xf]
    %v116 = vld [vmem:[%s0 + $0x1c8] sm:$0xff]
    %v117 = vld [vmem:[%s0 + $0x1d0] sm:$0xf]
    %v118 = vld [vmem:[%s0 + $0x1d4] sm:$0xff]
    %v119 = vld [vmem:[%s0 + $0x1dc] sm:$0xf]
    %v120 = vld [vmem:[%s0 + $0x1e0] sm:$0xff]
    %v121 = vld [vmem:[%s0 + $0x1e8] sm:$0xf]
    %v122 = vld [vmem:[%s0 + $0x1ec] sm:$0xff]
    %v123 = vld [vmem:[%s0 + $0x1f4] sm:$0xf]
    %v124 = vld [vmem:[%s0 + $0x1f8] sm:$0xff]
    %v125 = vld [vmem:[%s0 + $0x200] sm:$0xf]
    %v126 = vld [vmem:[%s0 + $0x204] sm:$0xff]
    %v127 = vld [vmem:[%s0 + $0x20c] sm:$0xf]
    %v128 = vld [vmem:[%s0 + $0x210] sm:$0xff]
    %v129 = vld [vmem:[%s0 + $0x218] sm:$0xf]
    %v130 = vld [vmem:[%s0 + $0x21c] sm:$0xff]
    %v131 = vld [vmem:[%s0 + $0x224] sm:$0xf]
    %v132 = vld [vmem:[%s0 + $0x228] sm:$0xff]
    %v133 = vld [vmem:[%s0 + $0x230] sm:$0xf]
    %v134 = vld [vmem:[%s0 + $0x234] sm:$0xff]
    %v135 = vld [vmem:[%s0 + $0x23c] sm:$0xf]
    %v136 = vld [vmem:[%s0 + $0x240] sm:$0xff]
    %v137 = vld [vmem:[%s0 + $0x248] sm:$0xf]
    %v138 = vld [vmem:[%s0 + $0x24c] sm:$0xff]
    %v139 = vld [vmem:[%s0 + $0x254] sm:$0xf]
    %v140 = vld [vmem:[%s0 + $0x258] sm:$0xff]
    %v141 = vld [vmem:[%s0 + $0x260] sm:$0xf]
    %v142 = vld [vmem:[%s0 + $0x264] sm:$0xff]
    %v143 = vld [vmem:[%s0 + $0x26c] sm:$0xf]
    %v144 = vld [vmem:[%s0 + $0x270] sm:$0xff]
    %v145 = vld [vmem:[%s0 + $0x278] sm:$0xf]
    %v146 = vld [vmem:[%s0 + $0x27c] sm:$0xff]
    %v147 = vld [vmem:[%s0 + $0x284] sm:$0xf]
    %v148 = vld [vmem:[%s0 + $0x288] sm:$0xff]
    %v149 = vld [vmem:[%s0 + $0x290] sm:$0xf]
    %v150 = vld [vmem:[%s0 + $0x294] sm:$0xff]
    %v151 = vld [vmem:[%s0 + $0x29c] sm:$0xf]
    %v152 = vld [vmem:[%s0 + $0x2a0] sm:$0xff]
    %v153 = vld [vmem:[%s0 + $0x2a8] sm:$0xf]
    %v154 = vld [vmem:[%s0 + $0x2ac] sm:$0xff]
    %v155 = vld [vmem:[%s0 + $0x2b4] sm:$0xf]
    %v156 = vld [vmem:[%s0 + $0x2b8] sm:$0xff]
    %v157 = vld [vmem:[%s0 + $0x2c0] sm:$0xf]
    %v158 = vld [vmem:[%s0 + $0x2c4] sm:$0xff]
    %v159 = vld [vmem:[%s0 + $0x2cc] sm:$0xf]
    %v160 = vld [vmem:[%s0 + $0x2d0] sm:$0xff]
    %v161 = vld [vmem:[%s0 + $0x2d8] sm:$0xf]
    %v162 = vld [vmem:[%s0 + $0x2dc] sm:$0xff]
    %v163 = vld [vmem:[%s0 + $0x2e4] sm:$0xf]
    %v164 = vld [vmem:[%s0 + $0x2e8] sm:$0xff]
    %v165 = vld [vmem:[%s0 + $0x2f0] sm:$0xf]
    %v166 = vld [vmem:[%s0 + $0x2f4] sm:$0xff]
    %v167 = vld [vmem:[%s0 + $0x2fc] sm:$0xf]
    %v168 = vld [vmem:[%s0 + $0x300] sm:$0xff]
    %v169 = vld [vmem:[%s0 + $0x308] sm:$0xf]
    %v170 = vld [vmem:[%s0 + $0x30c] sm:$0xff]
    %v171 = vld [vmem:[%s0 + $0x314] sm:$0xf]
    %v172 = vld [vmem:[%s0 + $0x318] sm:$0xff]
    %v173 = vld [vmem:[%s0 + $0x320] sm:$0xf]
    %v174 = vld [vmem:[%s0 + $0x324] sm:$0xff]
    %v175 = vld [vmem:[%s0 + $0x32c] sm:$0xf]
    %v176 = vld [vmem:[%s0 + $0x330] sm:$0xff]
    %v177 = vld [vmem:[%s0 + $0x338] sm:$0xf]
    %v178 = vld [vmem:[%s0 + $0x33c] sm:$0xff]
    %v179 = vld [vmem:[%s0 + $0x344] sm:$0xf]
    %v180 = vld [vmem:[%s0 + $0x348] sm:$0xff]
    %v181 = vld [vmem:[%s0 + $0x350] sm:$0xf]
    %v182 = vld [vmem:[%s0 + $0x354] sm:$0xff]
    %v183 = vld [vmem:[%s0 + $0x35c] sm:$0xf]
    %v184 = vld [vmem:[%s1] sm:$0xff]
    %v185 = vld [vmem:[%s1 + $0x8] sm:$0xff]
    %v186 = vld [vmem:[%s1 + $0x10] sm:$0xff]
    %v187 = vld [vmem:[%s1 + $0x18] sm:$0xff]
    %v188 = vld [vmem:[%s1 + $0x20] sm:$0xff]
    %v189 = vld [vmem:[%s1 + $0x28] sm:$0xff]
    %v190 = vld [vmem:[%s1 + $0x30] sm:$0xff]
    %v191 = vld [vmem:[%s1 + $0x38] sm:$0xff]
    %v192 = vld [vmem:[%s1 + $0x40] sm:$0xff]
    %v193 = vld [vmem:[%s1 + $0x48] sm:$0xff]
    %v194 = vld [vmem:[%s1 + $0x50] sm:$0xff]
    %v195 = vld [vmem:[%s1 + $0x58] sm:$0xff]
    %v196 = vld [vmem:[%s1 + $0x60] sm:$0xff]
    %v197 = vld [vmem:[%s1 + $0x68] sm:$0xff]
    %v198 = vld [vmem:[%s1 + $0x70] sm:$0xff]
    %v199 = vld [vmem:[%s1 + $0x78] sm:$0xff]
    %v200 = vld [vmem:[%s1 + $0x80] sm:$0xff]
    %v201 = vld [vmem:[%s1 + $0x88] sm:$0xff]
    %v202 = vld [vmem:[%s1 + $0x90] sm:$0xff]
    %v203 = vld [vmem:[%s1 + $0x98] sm:$0xff]
    %v204 = vld [vmem:[%s1 + $0xa0] sm:$0xff]
    %v205 = vld [vmem:[%s1 + $0xa8] sm:$0xff]
    %v206 = vld [vmem:[%s1 + $0xb0] sm:$0xff]
    %v207 = vld [vmem:[%s1 + $0xb8] sm:$0xff]
    %v208 = vld [vmem:[%s1 + $0xc0] sm:$0xff]
    %v209 = vld [vmem:[%s1 + $0xc8] sm:$0xff]
    %v210 = vld [vmem:[%s1 + $0xd0] sm:$0xff]
    %v211 = vld [vmem:[%s1 + $0xd8] sm:$0xff]
    %v212 = vld [vmem:[%s1 + $0xe0] sm:$0xff]
    %v213 = vld [vmem:[%s1 + $0xe8] sm:$0xff]
    %v214 = vld [vmem:[%s1 + $0xf0] sm:$0xff]
    %v215 = vld [vmem:[%s1 + $0xf8] sm:$0xff]
    %v216 = vld [vmem:[%s1 + $0x100] sm:$0xff]
    %v217 = vld [vmem:[%s1 + $0x108] sm:$0xff]
    %v218 = vld [vmem:[%s1 + $0x110] sm:$0xff]
    %v219 = vld [vmem:[%s1 + $0x118] sm:$0xff]
    %v220 = vld [vmem:[%s1 + $0x120] sm:$0xff]
    %v221 = vld [vmem:[%s1 + $0x128] sm:$0xff]
    %v222 = vld [vmem:[%s1 + $0x130] sm:$0xff]
    %v223 = vld [vmem:[%s1 + $0x138] sm:$0xff]
    %v224 = vld [vmem:[%s1 + $0x140] sm:$0x33]
    %v225 = vld [vmem:[%s2] sm:$0x3]
    %v227 = vlaneseq
    %v228 = vshrl.u32 %v227, 7
    %v229 = vsub.s32 0, %v228
    %v230 = vrot.slane %v225, %v229
    %v231 = vlaneseq
    %v232 = vshrl.u32 %v231, 7
    %v233 = vsub.s32 1, %v232
    %v234 = vrot.slane %v225, %v233
    %v381 = vunpack.c.l.b16 %v40
    %v382 = vunpack.c.h.b16 %v40
    %v383 = vunpack.c.l.b16 %v41
    %v384 = vunpack.c.l.b16 %v42
    %v385 = vunpack.c.h.b16 %v42
    %v386 = vunpack.c.l.b16 %v43
    %v387 = vunpack.c.l.b16 %v44
    %v388 = vunpack.c.h.b16 %v44
    %v389 = vunpack.c.l.b16 %v45
    %v390 = vunpack.c.l.b16 %v46
    %v391 = vunpack.c.h.b16 %v46
    %v392 = vunpack.c.l.b16 %v47
    %v393 = vunpack.c.l.b16 %v48
    %v394 = vunpack.c.h.b16 %v48
    %v395 = vunpack.c.l.b16 %v49
    %v396 = vunpack.c.l.b16 %v50
    %v397 = vunpack.c.h.b16 %v50
    %v398 = vunpack.c.l.b16 %v51
    %v399 = vunpack.c.l.b16 %v52
    %v400 = vunpack.c.h.b16 %v52
    %v401 = vunpack.c.l.b16 %v53
    %v402 = vunpack.c.l.b16 %v54
    %v403 = vunpack.c.h.b16 %v54
    %v404 = vunpack.c.l.b16 %v55
    %v405 = vunpack.c.l.b16 %v56
    %v406 = vunpack.c.h.b16 %v56
    %v407 = vunpack.c.l.b16 %v57
    %v408 = vunpack.c.l.b16 %v58
    %v409 = vunpack.c.h.b16 %v58
    %v410 = vunpack.c.l.b16 %v59
    %v411 = vunpack.c.l.b16 %v60
    %v412 = vunpack.c.h.b16 %v60
    %v413 = vunpack.c.l.b16 %v61
    %v414 = vunpack.c.l.b16 %v62
    %v415 = vunpack.c.h.b16 %v62
    %v416 = vunpack.c.l.b16 %v63
    %v417 = vunpack.c.l.b16 %v64
    %v418 = vunpack.c.h.b16 %v64
    %v419 = vunpack.c.l.b16 %v65
    %v420 = vunpack.c.l.b16 %v66
    %v421 = vunpack.c.h.b16 %v66
    %v422 = vunpack.c.l.b16 %v67
    %v423 = vunpack.c.l.b16 %v68
    %v424 = vunpack.c.h.b16 %v68
    %v425 = vunpack.c.l.b16 %v69
    %v426 = vunpack.c.l.b16 %v70
    %v427 = vunpack.c.h.b16 %v70
    %v428 = vunpack.c.l.b16 %v71
    %v429 = vunpack.c.l.b16 %v72
    %v430 = vunpack.c.h.b16 %v72
    %v431 = vunpack.c.l.b16 %v73
    %v432 = vunpack.c.l.b16 %v74
    %v433 = vunpack.c.h.b16 %v74
    %v434 = vunpack.c.l.b16 %v75
    %v435 = vunpack.c.l.b16 %v76
    %v436 = vunpack.c.h.b16 %v76
    %v437 = vunpack.c.l.b16 %v77
    %v438 = vunpack.c.l.b16 %v78
    %v439 = vunpack.c.h.b16 %v78
    %v440 = vunpack.c.l.b16 %v79
    %v441 = vunpack.c.l.b16 %v80
    %v442 = vunpack.c.h.b16 %v80
    %v443 = vunpack.c.l.b16 %v81
    %v444 = vunpack.c.l.b16 %v82
    %v445 = vunpack.c.h.b16 %v82
    %v446 = vunpack.c.l.b16 %v83
    %v447 = vunpack.c.l.b16 %v84
    %v448 = vunpack.c.h.b16 %v84
    %v449 = vunpack.c.l.b16 %v85
    %v450 = vunpack.c.l.b16 %v86
    %v451 = vunpack.c.h.b16 %v86
    %v452 = vunpack.c.l.b16 %v87
    %v453 = vunpack.c.l.b16 %v88
    %v454 = vunpack.c.h.b16 %v88
    %v455 = vunpack.c.l.b16 %v89
    %v456 = vunpack.c.l.b16 %v90
    %v457 = vunpack.c.h.b16 %v90
    %v458 = vunpack.c.l.b16 %v91
    %v459 = vunpack.c.l.b16 %v92
    %v460 = vunpack.c.h.b16 %v92
    %v461 = vunpack.c.l.b16 %v93
    %v462 = vunpack.c.l.b16 %v94
    %v463 = vunpack.c.h.b16 %v94
    %v464 = vunpack.c.l.b16 %v95
    %v465 = vunpack.c.l.b16 %v96
    %v466 = vunpack.c.h.b16 %v96
    %v467 = vunpack.c.l.b16 %v97
    %v468 = vunpack.c.l.b16 %v98
    %v469 = vunpack.c.h.b16 %v98
    %v470 = vunpack.c.l.b16 %v99
    %v471 = vunpack.c.l.b16 %v100
    %v472 = vunpack.c.h.b16 %v100
    %v473 = vunpack.c.l.b16 %v101
    %v474 = vunpack.c.l.b16 %v102
    %v475 = vunpack.c.h.b16 %v102
    %v476 = vunpack.c.l.b16 %v103
    %v477 = vunpack.c.l.b16 %v104
    %v478 = vunpack.c.h.b16 %v104
    %v479 = vunpack.c.l.b16 %v105
    %v480 = vunpack.c.l.b16 %v106
    %v481 = vunpack.c.h.b16 %v106
    %v482 = vunpack.c.l.b16 %v107
    %v483 = vunpack.c.l.b16 %v108
    %v484 = vunpack.c.h.b16 %v108
    %v485 = vunpack.c.l.b16 %v109
    %v486 = vunpack.c.l.b16 %v110
    %v487 = vunpack.c.h.b16 %v110
    %v488 = vunpack.c.l.b16 %v111
    %v489 = vunpack.c.l.b16 %v112
    %v490 = vunpack.c.h.b16 %v112
    %v491 = vunpack.c.l.b16 %v113
    %v492 = vunpack.c.l.b16 %v114
    %v493 = vunpack.c.h.b16 %v114
    %v494 = vunpack.c.l.b16 %v115
    %v495 = vunpack.c.l.b16 %v116
    %v496 = vunpack.c.h.b16 %v116
    %v497 = vunpack.c.l.b16 %v117
    %v498 = vunpack.c.l.b16 %v118
    %v499 = vunpack.c.h.b16 %v118
    %v500 = vunpack.c.l.b16 %v119
    %v501 = vunpack.c.l.b16 %v120
    %v502 = vunpack.c.h.b16 %v120
    %v503 = vunpack.c.l.b16 %v121
    %v504 = vunpack.c.l.b16 %v122
    %v505 = vunpack.c.h.b16 %v122
    %v506 = vunpack.c.l.b16 %v123
    %v507 = vunpack.c.l.b16 %v124
    %v508 = vunpack.c.h.b16 %v124
    %v509 = vunpack.c.l.b16 %v125
    %v510 = vunpack.c.l.b16 %v126
    %v511 = vunpack.c.h.b16 %v126
    %v512 = vunpack.c.l.b16 %v127
    %v513 = vunpack.c.l.b16 %v128
    %v514 = vunpack.c.h.b16 %v128
    %v515 = vunpack.c.l.b16 %v129
    %v516 = vunpack.c.l.b16 %v130
    %v517 = vunpack.c.h.b16 %v130
    %v518 = vunpack.c.l.b16 %v131
    %v519 = vunpack.c.l.b16 %v132
    %v520 = vunpack.c.h.b16 %v132
    %v521 = vunpack.c.l.b16 %v133
    %v522 = vunpack.c.l.b16 %v134
    %v523 = vunpack.c.h.b16 %v134
    %v524 = vunpack.c.l.b16 %v135
    %v525 = vunpack.c.l.b16 %v136
    %v526 = vunpack.c.h.b16 %v136
    %v527 = vunpack.c.l.b16 %v137
    %v528 = vunpack.c.l.b16 %v138
    %v529 = vunpack.c.h.b16 %v138
    %v530 = vunpack.c.l.b16 %v139
    %v531 = vunpack.c.l.b16 %v140
    %v532 = vunpack.c.h.b16 %v140
    %v533 = vunpack.c.l.b16 %v141
    %v534 = vunpack.c.l.b16 %v142
    %v535 = vunpack.c.h.b16 %v142
    %v536 = vunpack.c.l.b16 %v143
    %v537 = vunpack.c.l.b16 %v144
    %v538 = vunpack.c.h.b16 %v144
    %v539 = vunpack.c.l.b16 %v145
    %v540 = vunpack.c.l.b16 %v146
    %v541 = vunpack.c.h.b16 %v146
    %v542 = vunpack.c.l.b16 %v147
    %v543 = vunpack.c.l.b16 %v148
    %v544 = vunpack.c.h.b16 %v148
    %v545 = vunpack.c.l.b16 %v149
    %v546 = vunpack.c.l.b16 %v150
    %v547 = vunpack.c.h.b16 %v150
    %v548 = vunpack.c.l.b16 %v151
    %v549 = vunpack.c.l.b16 %v152
    %v550 = vunpack.c.h.b16 %v152
    %v551 = vunpack.c.l.b16 %v153
    %v552 = vunpack.c.l.b16 %v154
    %v553 = vunpack.c.h.b16 %v154
    %v554 = vunpack.c.l.b16 %v155
    %v555 = vunpack.c.l.b16 %v156
    %v556 = vunpack.c.h.b16 %v156
    %v557 = vunpack.c.l.b16 %v157
    %v558 = vunpack.c.l.b16 %v158
    %v559 = vunpack.c.h.b16 %v158
    %v560 = vunpack.c.l.b16 %v159
    %v561 = vunpack.c.l.b16 %v160
    %v562 = vunpack.c.h.b16 %v160
    %v563 = vunpack.c.l.b16 %v161
    %v564 = vunpack.c.l.b16 %v162
    %v565 = vunpack.c.h.b16 %v162
    %v566 = vunpack.c.l.b16 %v163
    %v567 = vunpack.c.l.b16 %v164
    %v568 = vunpack.c.h.b16 %v164
    %v569 = vunpack.c.l.b16 %v165
    %v570 = vunpack.c.l.b16 %v166
    %v571 = vunpack.c.h.b16 %v166
    %v572 = vunpack.c.l.b16 %v167
    %v573 = vunpack.c.l.b16 %v168
    %v574 = vunpack.c.h.b16 %v168
    %v575 = vunpack.c.l.b16 %v169
    %v576 = vunpack.c.l.b16 %v170
    %v577 = vunpack.c.h.b16 %v170
    %v578 = vunpack.c.l.b16 %v171
    %v579 = vunpack.c.l.b16 %v172
    %v580 = vunpack.c.h.b16 %v172
    %v581 = vunpack.c.l.b16 %v173
    %v582 = vunpack.c.l.b16 %v174
    %v583 = vunpack.c.h.b16 %v174
    %v584 = vunpack.c.l.b16 %v175
    %v585 = vunpack.c.l.b16 %v176
    %v586 = vunpack.c.h.b16 %v176
    %v587 = vunpack.c.l.b16 %v177
    %v588 = vunpack.c.l.b16 %v178
    %v589 = vunpack.c.h.b16 %v178
    %v590 = vunpack.c.l.b16 %v179
    %v591 = vunpack.c.l.b16 %v180
    %v592 = vunpack.c.h.b16 %v180
    %v593 = vunpack.c.l.b16 %v181
    %v594 = vunpack.c.l.b16 %v182
    %v595 = vunpack.c.h.b16 %v182
    %v596 = vunpack.c.l.b16 %v183
    %v597 = vpack.c.b16 %v384, %v381
    %v598 = vpack.c.b16 %v385, %v382
    %v599 = vpack.c.b16 %v386, %v383
    %v600 = vpack.c.b16 %v390, %v387
    %v601 = vpack.c.b16 %v391, %v388
    %v602 = vpack.c.b16 %v392, %v389
    %v603 = vpack.c.b16 %v396, %v393
    %v604 = vpack.c.b16 %v397, %v394
    %v605 = vpack.c.b16 %v398, %v395
    %v606 = vpack.c.b16 %v402, %v399
    %v607 = vpack.c.b16 %v403, %v400
    %v608 = vpack.c.b16 %v404, %v401
    %v609 = vpack.c.b16 %v408, %v405
    %v610 = vpack.c.b16 %v409, %v406
    %v611 = vpack.c.b16 %v410, %v407
    %v612 = vpack.c.b16 %v414, %v411
    %v613 = vpack.c.b16 %v415, %v412
    %v614 = vpack.c.b16 %v416, %v413
    %v615 = vpack.c.b16 %v420, %v417
    %v616 = vpack.c.b16 %v421, %v418
    %v617 = vpack.c.b16 %v422, %v419
    %v618 = vpack.c.b16 %v426, %v423
    %v619 = vpack.c.b16 %v427, %v424
    %v620 = vpack.c.b16 %v428, %v425
    %v621 = vpack.c.b16 %v432, %v429
    %v622 = vpack.c.b16 %v433, %v430
    %v623 = vpack.c.b16 %v434, %v431
    %v624 = vpack.c.b16 %v438, %v435
    %v625 = vpack.c.b16 %v439, %v436
    %v626 = vpack.c.b16 %v440, %v437
    %v627 = vpack.c.b16 %v444, %v441
    %v628 = vpack.c.b16 %v445, %v442
    %v629 = vpack.c.b16 %v446, %v443
    %v630 = vpack.c.b16 %v450, %v447
    %v631 = vpack.c.b16 %v451, %v448
    %v632 = vpack.c.b16 %v452, %v449
    %v633 = vpack.c.b16 %v456, %v453
    %v634 = vpack.c.b16 %v457, %v454
    %v635 = vpack.c.b16 %v458, %v455
    %v636 = vpack.c.b16 %v462, %v459
    %v637 = vpack.c.b16 %v463, %v460
    %v638 = vpack.c.b16 %v464, %v461
    %v639 = vpack.c.b16 %v468, %v465
    %v640 = vpack.c.b16 %v469, %v466
    %v641 = vpack.c.b16 %v470, %v467
    %v642 = vpack.c.b16 %v474, %v471
    %v643 = vpack.c.b16 %v475, %v472
    %v644 = vpack.c.b16 %v476, %v473
    %v645 = vpack.c.b16 %v480, %v477
    %v646 = vpack.c.b16 %v481, %v478
    %v647 = vpack.c.b16 %v482, %v479
    %v648 = vpack.c.b16 %v486, %v483
    %v649 = vpack.c.b16 %v487, %v484
    %v650 = vpack.c.b16 %v488, %v485
    %v651 = vpack.c.b16 %v492, %v489
    %v652 = vpack.c.b16 %v493, %v490
    %v653 = vpack.c.b16 %v494, %v491
    %v654 = vpack.c.b16 %v498, %v495
    %v655 = vpack.c.b16 %v499, %v496
    %v656 = vpack.c.b16 %v500, %v497
    %v657 = vpack.c.b16 %v504, %v501
    %v658 = vpack.c.b16 %v505, %v502
    %v659 = vpack.c.b16 %v506, %v503
    %v660 = vpack.c.b16 %v510, %v507
    %v661 = vpack.c.b16 %v511, %v508
    %v662 = vpack.c.b16 %v512, %v509
    %v663 = vpack.c.b16 %v516, %v513
    %v664 = vpack.c.b16 %v517, %v514
    %v665 = vpack.c.b16 %v518, %v515
    %v666 = vpack.c.b16 %v522, %v519
    %v667 = vpack.c.b16 %v523, %v520
    %v668 = vpack.c.b16 %v524, %v521
    %v669 = vpack.c.b16 %v528, %v525
    %v670 = vpack.c.b16 %v529, %v526
    %v671 = vpack.c.b16 %v530, %v527
    %v672 = vpack.c.b16 %v534, %v531
    %v673 = vpack.c.b16 %v535, %v532
    %v674 = vpack.c.b16 %v536, %v533
    %v675 = vpack.c.b16 %v540, %v537
    %v676 = vpack.c.b16 %v541, %v538
    %v677 = vpack.c.b16 %v542, %v539
    %v678 = vpack.c.b16 %v546, %v543
    %v679 = vpack.c.b16 %v547, %v544
    %v680 = vpack.c.b16 %v548, %v545
    %v681 = vpack.c.b16 %v552, %v549
    %v682 = vpack.c.b16 %v553, %v550
    %v683 = vpack.c.b16 %v554, %v551
    %v684 = vpack.c.b16 %v558, %v555
    %v685 = vpack.c.b16 %v559, %v556
    %v686 = vpack.c.b16 %v560, %v557
    %v687 = vpack.c.b16 %v564, %v561
    %v688 = vpack.c.b16 %v565, %v562
    %v689 = vpack.c.b16 %v566, %v563
    %v690 = vpack.c.b16 %v570, %v567
    %v691 = vpack.c.b16 %v571, %v568
    %v692 = vpack.c.b16 %v572, %v569
    %v693 = vpack.c.b16 %v576, %v573
    %v694 = vpack.c.b16 %v577, %v574
    %v695 = vpack.c.b16 %v578, %v575
    %v696 = vpack.c.b16 %v582, %v579
    %v697 = vpack.c.b16 %v583, %v580
    %v698 = vpack.c.b16 %v584, %v581
    %v699 = vpack.c.b16 %v588, %v585
    %v700 = vpack.c.b16 %v589, %v586
    %v701 = vpack.c.b16 %v590, %v587
    %v702 = vpack.c.b16 %v594, %v591
    %v703 = vpack.c.b16 %v595, %v592
    %v704 = vpack.c.b16 %v596, %v593
    %v818 = vunpack.c.l.b16 %v184
    %v819 = vunpack.c.h.b16 %v184
    %v820 = vunpack.c.l.b16 %v185
    %v821 = vunpack.c.h.b16 %v185
    %v822 = vunpack.c.l.b16 %v186
    %v823 = vunpack.c.h.b16 %v186
    %v824 = vunpack.c.l.b16 %v187
    %v825 = vunpack.c.h.b16 %v187
    %v826 = vunpack.c.l.b16 %v188
    %v827 = vunpack.c.h.b16 %v188
    %v828 = vunpack.c.l.b16 %v189
    %v829 = vunpack.c.h.b16 %v189
    %v830 = vunpack.c.l.b16 %v190
    %v831 = vunpack.c.h.b16 %v190
    %v832 = vunpack.c.l.b16 %v191
    %v833 = vunpack.c.h.b16 %v191
    %v834 = vunpack.c.l.b16 %v192
    %v835 = vunpack.c.h.b16 %v192
    %v836 = vunpack.c.l.b16 %v193
    %v837 = vunpack.c.h.b16 %v193
    %v838 = vunpack.c.l.b16 %v194
    %v839 = vunpack.c.h.b16 %v194
    %v840 = vunpack.c.l.b16 %v195
    %v841 = vunpack.c.h.b16 %v195
    %v842 = vunpack.c.l.b16 %v196
    %v843 = vunpack.c.h.b16 %v196
    %v844 = vunpack.c.l.b16 %v197
    %v845 = vunpack.c.h.b16 %v197
    %v846 = vunpack.c.l.b16 %v198
    %v847 = vunpack.c.h.b16 %v198
    %v848 = vunpack.c.l.b16 %v199
    %v849 = vunpack.c.h.b16 %v199
    %v850 = vunpack.c.l.b16 %v200
    %v851 = vunpack.c.h.b16 %v200
    %v852 = vunpack.c.l.b16 %v201
    %v853 = vunpack.c.h.b16 %v201
    %v854 = vunpack.c.l.b16 %v202
    %v855 = vunpack.c.h.b16 %v202
    %v856 = vunpack.c.l.b16 %v203
    %v857 = vunpack.c.h.b16 %v203
    %v858 = vunpack.c.l.b16 %v204
    %v859 = vunpack.c.h.b16 %v204
    %v860 = vunpack.c.l.b16 %v205
    %v861 = vunpack.c.h.b16 %v205
    %v862 = vunpack.c.l.b16 %v206
    %v863 = vunpack.c.h.b16 %v206
    %v864 = vunpack.c.l.b16 %v207
    %v865 = vunpack.c.h.b16 %v207
    %v866 = vunpack.c.l.b16 %v208
    %v867 = vunpack.c.h.b16 %v208
    %v868 = vunpack.c.l.b16 %v209
    %v869 = vunpack.c.h.b16 %v209
    %v870 = vunpack.c.l.b16 %v210
    %v871 = vunpack.c.h.b16 %v210
    %v872 = vunpack.c.l.b16 %v211
    %v873 = vunpack.c.h.b16 %v211
    %v874 = vunpack.c.l.b16 %v212
    %v875 = vunpack.c.h.b16 %v212
    %v876 = vunpack.c.l.b16 %v213
    %v877 = vunpack.c.h.b16 %v213
    %v878 = vunpack.c.l.b16 %v214
    %v879 = vunpack.c.h.b16 %v214
    %v880 = vunpack.c.l.b16 %v215
    %v881 = vunpack.c.h.b16 %v215
    %v882 = vunpack.c.l.b16 %v216
    %v883 = vunpack.c.h.b16 %v216
    %v884 = vunpack.c.l.b16 %v217
    %v885 = vunpack.c.h.b16 %v217
    %v886 = vunpack.c.l.b16 %v218
    %v887 = vunpack.c.h.b16 %v218
    %v888 = vunpack.c.l.b16 %v219
    %v889 = vunpack.c.h.b16 %v219
    %v890 = vunpack.c.l.b16 %v220
    %v891 = vunpack.c.h.b16 %v220
    %v892 = vunpack.c.l.b16 %v221
    %v893 = vunpack.c.h.b16 %v221
    %v894 = vunpack.c.l.b16 %v222
    %v895 = vunpack.c.h.b16 %v222
    %v896 = vunpack.c.l.b16 %v223
    %v897 = vunpack.c.h.b16 %v223
    %v898 = vunpack.c.l.b16 %v224
    %v899 = vunpack.c.h.b16 %v224
    %v900 = vpack.c.b16 %v820, %v818
    %v901 = vpack.c.b16 %v821, %v819
    %v902 = vpack.c.b16 %v824, %v822
    %v903 = vpack.c.b16 %v825, %v823
    %v904 = vpack.c.b16 %v828, %v826
    %v905 = vpack.c.b16 %v829, %v827
    %v906 = vpack.c.b16 %v832, %v830
    %v907 = vpack.c.b16 %v833, %v831
    %v908 = vpack.c.b16 %v836, %v834
    %v909 = vpack.c.b16 %v837, %v835
    %v910 = vpack.c.b16 %v840, %v838
    %v911 = vpack.c.b16 %v841, %v839
    %v912 = vpack.c.b16 %v844, %v842
    %v913 = vpack.c.b16 %v845, %v843
    %v914 = vpack.c.b16 %v848, %v846
    %v915 = vpack.c.b16 %v849, %v847
    %v916 = vpack.c.b16 %v852, %v850
    %v917 = vpack.c.b16 %v853, %v851
    %v918 = vpack.c.b16 %v856, %v854
    %v919 = vpack.c.b16 %v857, %v855
    %v920 = vpack.c.b16 %v860, %v858
    %v921 = vpack.c.b16 %v861, %v859
    %v922 = vpack.c.b16 %v864, %v862
    %v923 = vpack.c.b16 %v865, %v863
    %v924 = vpack.c.b16 %v868, %v866
    %v925 = vpack.c.b16 %v869, %v867
    %v926 = vpack.c.b16 %v872, %v870
    %v927 = vpack.c.b16 %v873, %v871
    %v928 = vpack.c.b16 %v876, %v874
    %v929 = vpack.c.b16 %v877, %v875
    %v930 = vpack.c.b16 %v880, %v878
    %v931 = vpack.c.b16 %v881, %v879
    %v932 = vpack.c.b16 %v884, %v882
    %v933 = vpack.c.b16 %v885, %v883
    %v934 = vpack.c.b16 %v888, %v886
    %v935 = vpack.c.b16 %v889, %v887
    %v936 = vpack.c.b16 %v892, %v890
    %v937 = vpack.c.b16 %v893, %v891
    %v938 = vpack.c.b16 %v896, %v894
    %v939 = vpack.c.b16 %v897, %v895
    %v940 = vpack.c.b16 %v898, %v898
    %v941 = vpack.c.b16 %v899, %v899
    %vm982 = vcmask 556032
    %v984 = vsel %vm982, %v599, 0
    %v987 = vsel %vm982, %v602, 0
    %v990 = vsel %vm982, %v605, 0
    %v993 = vsel %vm982, %v608, 0
    %v996 = vsel %vm982, %v611, 0
    %v999 = vsel %vm982, %v614, 0
    %v1002 = vsel %vm982, %v617, 0
    %v1005 = vsel %vm982, %v620, 0
    %v1008 = vsel %vm982, %v623, 0
    %v1011 = vsel %vm982, %v626, 0
    %v1014 = vsel %vm982, %v629, 0
    %v1017 = vsel %vm982, %v632, 0
    %v1020 = vsel %vm982, %v635, 0
    %v1023 = vsel %vm982, %v638, 0
    %v1026 = vsel %vm982, %v641, 0
    %v1029 = vsel %vm982, %v644, 0
    %v1032 = vsel %vm982, %v647, 0
    %v1035 = vsel %vm982, %v650, 0
    %v1038 = vsel %vm982, %v653, 0
    %v1041 = vsel %vm982, %v656, 0
    %v1044 = vsel %vm982, %v659, 0
    %v1047 = vsel %vm982, %v662, 0
    %v1050 = vsel %vm982, %v665, 0
    %v1053 = vsel %vm982, %v668, 0
    %v1056 = vsel %vm982, %v671, 0
    %v1059 = vsel %vm982, %v674, 0
    %v1062 = vsel %vm982, %v677, 0
    %v1065 = vsel %vm982, %v680, 0
    %v1068 = vsel %vm982, %v683, 0
    %v1071 = vsel %vm982, %v686, 0
    %v1074 = vsel %vm982, %v689, 0
    %v1077 = vsel %vm982, %v692, 0
    %v1080 = vsel %vm982, %v695, 0
    %v1083 = vsel %vm982, %v698, 0
    %v1086 = vsel %vm982, %v701, 0
    %v1089 = vsel %vm982, %v704, 0
    %vm1091 = vcmask 1041408
    %v1093 = vsel %vm1091, %v940, 0
    %v1096 = vsel %vm1091, %v941, 0
    %1098 = vmatprep.subr.bf16.mxu0 %v915
    %1099 = vmatpush1.bf16.msra.mxu0 %v914
    %1100 = vmatprep.subr.bf16.mxu0 %v913
    %1101 = vmatpush1.bf16.msra.mxu0 %v912
    %1102 = vmatprep.subr.bf16.mxu0 %v911
    %1103 = vmatpush1.bf16.msra.mxu0 %v910
    %1104 = vmatprep.subr.bf16.mxu0 %v909
    %1105 = vmatpush1.bf16.msra.mxu0 %v908
    %1106 = vmatprep.subr.bf16.mxu0 %v907
    %1107 = vmatpush1.bf16.msra.mxu0 %v906
    %1108 = vmatprep.subr.bf16.mxu0 %v905
    %1109 = vmatpush1.bf16.msra.mxu0 %v904
    %1110 = vmatprep.subr.bf16.mxu0 %v903
    %1111 = vmatpush1.bf16.msra.mxu0 %v902
    %1112 = vmatprep.subr.bf16.mxu0 %v901
    %1113 = vmatpush1.bf16.msra.mxu0 %v900
    %1114 = vmatprep.subr.bf16.mxu0 %v931
    %1115 = vmatpush2.bf16.msra.mxu0 %v930
    %1116 = vmatprep.subr.bf16.mxu0 %v929
    %1117 = vmatpush2.bf16.msra.mxu0 %v928
    %1118 = vmatprep.subr.bf16.mxu0 %v927
    %1119 = vmatpush2.bf16.msra.mxu0 %v926
    %1120 = vmatprep.subr.bf16.mxu0 %v925
    %1121 = vmatpush2.bf16.msra.mxu0 %v924
    %1122 = vmatprep.subr.bf16.mxu0 %v923
    %1123 = vmatpush2.bf16.msra.mxu0 %v922
    %1124 = vmatprep.subr.bf16.mxu0 %v921
    %1125 = vmatpush2.bf16.msra.mxu0 %v920
    %1126 = vmatprep.subr.bf16.mxu0 %v919
    %1127 = vmatpush2.bf16.msra.mxu0 %v918
    %1128 = vmatprep.subr.bf16.mxu0 %v917
    %1129 = vmatpush2.bf16.msra.mxu0 %v916
    %1130 = vmatprep.mubr.bf16.mxu0 %v598
    %1131 = vmatmul.mubr.bf16.gmra.mxu0 %v597
    %v1132 = vpop.f32.mrf.mxu0
    %v1133 = vadd.f32 %v230, %v1132
    %v1134 = vpop.f32.mrf.mxu0
    %v1135 = vadd.f32 %v234, %v1134
    %v1136 = vpop.f32.mrf.mxu0
    %v1137 = vadd.f32 %v230, %v1136
    %v1138 = vpop.f32.mrf.mxu0
    %v1139 = vadd.f32 %v234, %v1138
    %1140 = vmatprep.mubr.bf16.mxu0 %v601
    %1141 = vmatmul.mubr.bf16.gmra.mxu0 %v600
    %v1142 = vpop.f32.mrf.mxu0
    %v1143 = vadd.f32 %v230, %v1142
    %v1144 = vpop.f32.mrf.mxu0
    %v1145 = vadd.f32 %v234, %v1144
    %v1146 = vpop.f32.mrf.mxu0
    %v1147 = vadd.f32 %v230, %v1146
    %v1148 = vpop.f32.mrf.mxu0
    %v1149 = vadd.f32 %v234, %v1148
    %1150 = vmatprep.mubr.bf16.mxu0 %v604
    %1151 = vmatmul.mubr.bf16.gmra.mxu0 %v603
    %v1152 = vpop.f32.mrf.mxu0
    %v1153 = vadd.f32 %v230, %v1152
    %v1154 = vpop.f32.mrf.mxu0
    %v1155 = vadd.f32 %v234, %v1154
    %v1156 = vpop.f32.mrf.mxu0
    %v1157 = vadd.f32 %v230, %v1156
    %v1158 = vpop.f32.mrf.mxu0
    %v1159 = vadd.f32 %v234, %v1158
    %1160 = vmatprep.mubr.bf16.mxu0 %v607
    %1161 = vmatmul.mubr.bf16.gmra.mxu0 %v606
    %v1162 = vpop.f32.mrf.mxu0
    %v1163 = vadd.f32 %v230, %v1162
    %v1164 = vpop.f32.mrf.mxu0
    %v1165 = vadd.f32 %v234, %v1164
    %v1166 = vpop.f32.mrf.mxu0
    %v1167 = vadd.f32 %v230, %v1166
    %v1168 = vpop.f32.mrf.mxu0
    %v1169 = vadd.f32 %v234, %v1168
    %1170 = vmatprep.mubr.bf16.mxu0 %v610
    %1171 = vmatmul.mubr.bf16.gmra.mxu0 %v609
    %v1172 = vpop.f32.mrf.mxu0
    %v1173 = vadd.f32 %v230, %v1172
    %v1174 = vpop.f32.mrf.mxu0
    %v1175 = vadd.f32 %v234, %v1174
    %v1176 = vpop.f32.mrf.mxu0
    %v1177 = vadd.f32 %v230, %v1176
    %v1178 = vpop.f32.mrf.mxu0
    %v1179 = vadd.f32 %v234, %v1178
    %1180 = vmatprep.mubr.bf16.mxu0 %v613
    %1181 = vmatmul.mubr.bf16.gmra.mxu0 %v612
    %v1182 = vpop.f32.mrf.mxu0
    %v1183 = vadd.f32 %v230, %v1182
    %v1184 = vpop.f32.mrf.mxu0
    %v1185 = vadd.f32 %v234, %v1184
    %v1186 = vpop.f32.mrf.mxu0
    %v1187 = vadd.f32 %v230, %v1186
    %v1188 = vpop.f32.mrf.mxu0
    %v1189 = vadd.f32 %v234, %v1188
    %1190 = vmatprep.mubr.bf16.mxu0 %v616
    %1191 = vmatmul.mubr.bf16.gmra.mxu0 %v615
    %v1192 = vpop.f32.mrf.mxu0
    %v1193 = vadd.f32 %v230, %v1192
    %v1194 = vpop.f32.mrf.mxu0
    %v1195 = vadd.f32 %v234, %v1194
    %v1196 = vpop.f32.mrf.mxu0
    %v1197 = vadd.f32 %v230, %v1196
    %v1198 = vpop.f32.mrf.mxu0
    %v1199 = vadd.f32 %v234, %v1198
    %1200 = vmatprep.mubr.bf16.mxu0 %v619
    %1201 = vmatmul.mubr.bf16.gmra.mxu0 %v618
    %v1202 = vpop.f32.mrf.mxu0
    %v1203 = vadd.f32 %v230, %v1202
    %v1204 = vpop.f32.mrf.mxu0
    %v1205 = vadd.f32 %v234, %v1204
    %v1206 = vpop.f32.mrf.mxu0
    %v1207 = vadd.f32 %v230, %v1206
    %v1208 = vpop.f32.mrf.mxu0
    %v1209 = vadd.f32 %v234, %v1208
    %1210 = vmatprep.mubr.bf16.mxu0 %v622
    %1211 = vmatmul.mubr.bf16.gmra.mxu0 %v621
    %v1212 = vpop.f32.mrf.mxu0
    %v1213 = vadd.f32 %v230, %v1212
    %v1214 = vpop.f32.mrf.mxu0
    %v1215 = vadd.f32 %v234, %v1214
    %v1216 = vpop.f32.mrf.mxu0
    %v1217 = vadd.f32 %v230, %v1216
    %v1218 = vpop.f32.mrf.mxu0
    %v1219 = vadd.f32 %v234, %v1218
    %1220 = vmatprep.mubr.bf16.mxu0 %v625
    %1221 = vmatmul.mubr.bf16.gmra.mxu0 %v624
    %v1222 = vpop.f32.mrf.mxu0
    %v1223 = vadd.f32 %v230, %v1222
    %v1224 = vpop.f32.mrf.mxu0
    %v1225 = vadd.f32 %v234, %v1224
    %v1226 = vpop.f32.mrf.mxu0
    %v1227 = vadd.f32 %v230, %v1226
    %v1228 = vpop.f32.mrf.mxu0
    %v1229 = vadd.f32 %v234, %v1228
    %1230 = vmatprep.mubr.bf16.mxu0 %v628
    %1231 = vmatmul.mubr.bf16.gmra.mxu0 %v627
    %v1232 = vpop.f32.mrf.mxu0
    %v1233 = vadd.f32 %v230, %v1232
    %v1234 = vpop.f32.mrf.mxu0
    %v1235 = vadd.f32 %v234, %v1234
    %v1236 = vpop.f32.mrf.mxu0
    %v1237 = vadd.f32 %v230, %v1236
    %v1238 = vpop.f32.mrf.mxu0
    %v1239 = vadd.f32 %v234, %v1238
    %1240 = vmatprep.mubr.bf16.mxu0 %v631
    %1241 = vmatmul.mubr.bf16.gmra.mxu0 %v630
    %v1242 = vpop.f32.mrf.mxu0
    %v1243 = vadd.f32 %v230, %v1242
    %v1244 = vpop.f32.mrf.mxu0
    %v1245 = vadd.f32 %v234, %v1244
    %v1246 = vpop.f32.mrf.mxu0
    %v1247 = vadd.f32 %v230, %v1246
    %v1248 = vpop.f32.mrf.mxu0
    %v1249 = vadd.f32 %v234, %v1248
    %1250 = vmatprep.mubr.bf16.mxu0 %v634
    %1251 = vmatmul.mubr.bf16.gmra.mxu0 %v633
    %v1252 = vpop.f32.mrf.mxu0
    %v1253 = vadd.f32 %v230, %v1252
    %v1254 = vpop.f32.mrf.mxu0
    %v1255 = vadd.f32 %v234, %v1254
    %v1256 = vpop.f32.mrf.mxu0
    %v1257 = vadd.f32 %v230, %v1256
    %v1258 = vpop.f32.mrf.mxu0
    %v1259 = vadd.f32 %v234, %v1258
    %1260 = vmatprep.mubr.bf16.mxu0 %v637
    %1261 = vmatmul.mubr.bf16.gmra.mxu0 %v636
    %v1262 = vpop.f32.mrf.mxu0
    %v1263 = vadd.f32 %v230, %v1262
    %v1264 = vpop.f32.mrf.mxu0
    %v1265 = vadd.f32 %v234, %v1264
    %v1266 = vpop.f32.mrf.mxu0
    %v1267 = vadd.f32 %v230, %v1266
    %v1268 = vpop.f32.mrf.mxu0
    %v1269 = vadd.f32 %v234, %v1268
    %1270 = vmatprep.mubr.bf16.mxu0 %v640
    %1271 = vmatmul.mubr.bf16.gmra.mxu0 %v639
    %v1272 = vpop.f32.mrf.mxu0
    %v1273 = vadd.f32 %v230, %v1272
    %v1274 = vpop.f32.mrf.mxu0
    %v1275 = vadd.f32 %v234, %v1274
    %v1276 = vpop.f32.mrf.mxu0
    %v1277 = vadd.f32 %v230, %v1276
    %v1278 = vpop.f32.mrf.mxu0
    %v1279 = vadd.f32 %v234, %v1278
    %1280 = vmatprep.mubr.bf16.mxu0 %v643
    %1281 = vmatmul.mubr.bf16.gmra.mxu0 %v642
    %v1282 = vpop.f32.mrf.mxu0
    %v1283 = vadd.f32 %v230, %v1282
    %v1284 = vpop.f32.mrf.mxu0
    %v1285 = vadd.f32 %v234, %v1284
    %v1286 = vpop.f32.mrf.mxu0
    %v1287 = vadd.f32 %v230, %v1286
    %v1288 = vpop.f32.mrf.mxu0
    %v1289 = vadd.f32 %v234, %v1288
    %1290 = vmatprep.mubr.bf16.mxu0 %v646
    %1291 = vmatmul.mubr.bf16.gmra.mxu0 %v645
    %v1292 = vpop.f32.mrf.mxu0
    %v1293 = vadd.f32 %v230, %v1292
    %v1294 = vpop.f32.mrf.mxu0
    %v1295 = vadd.f32 %v234, %v1294
    %v1296 = vpop.f32.mrf.mxu0
    %v1297 = vadd.f32 %v230, %v1296
    %v1298 = vpop.f32.mrf.mxu0
    %v1299 = vadd.f32 %v234, %v1298
    %1300 = vmatprep.mubr.bf16.mxu0 %v649
    %1301 = vmatmul.mubr.bf16.gmra.mxu0 %v648
    %v1302 = vpop.f32.mrf.mxu0
    %v1303 = vadd.f32 %v230, %v1302
    %v1304 = vpop.f32.mrf.mxu0
    %v1305 = vadd.f32 %v234, %v1304
    %v1306 = vpop.f32.mrf.mxu0
    %v1307 = vadd.f32 %v230, %v1306
    %v1308 = vpop.f32.mrf.mxu0
    %v1309 = vadd.f32 %v234, %v1308
    %1310 = vmatprep.mubr.bf16.mxu0 %v652
    %1311 = vmatmul.mubr.bf16.gmra.mxu0 %v651
    %v1312 = vpop.f32.mrf.mxu0
    %v1313 = vadd.f32 %v230, %v1312
    %v1314 = vpop.f32.mrf.mxu0
    %v1315 = vadd.f32 %v234, %v1314
    %v1316 = vpop.f32.mrf.mxu0
    %v1317 = vadd.f32 %v230, %v1316
    %v1318 = vpop.f32.mrf.mxu0
    %v1319 = vadd.f32 %v234, %v1318
    %1320 = vmatprep.mubr.bf16.mxu0 %v655
    %1321 = vmatmul.mubr.bf16.gmra.mxu0 %v654
    %v1322 = vpop.f32.mrf.mxu0
    %v1323 = vadd.f32 %v230, %v1322
    %v1324 = vpop.f32.mrf.mxu0
    %v1325 = vadd.f32 %v234, %v1324
    %v1326 = vpop.f32.mrf.mxu0
    %v1327 = vadd.f32 %v230, %v1326
    %v1328 = vpop.f32.mrf.mxu0
    %v1329 = vadd.f32 %v234, %v1328
    %1330 = vmatprep.mubr.bf16.mxu0 %v658
    %1331 = vmatmul.mubr.bf16.gmra.mxu0 %v657
    %v1332 = vpop.f32.mrf.mxu0
    %v1333 = vadd.f32 %v230, %v1332
    %v1334 = vpop.f32.mrf.mxu0
    %v1335 = vadd.f32 %v234, %v1334
    %v1336 = vpop.f32.mrf.mxu0
    %v1337 = vadd.f32 %v230, %v1336
    %v1338 = vpop.f32.mrf.mxu0
    %v1339 = vadd.f32 %v234, %v1338
    %1340 = vmatprep.mubr.bf16.mxu0 %v661
    %1341 = vmatmul.mubr.bf16.gmra.mxu0 %v660
    %v1342 = vpop.f32.mrf.mxu0
    %v1343 = vadd.f32 %v230, %v1342
    %v1344 = vpop.f32.mrf.mxu0
    %v1345 = vadd.f32 %v234, %v1344
    %v1346 = vpop.f32.mrf.mxu0
    %v1347 = vadd.f32 %v230, %v1346
    %v1348 = vpop.f32.mrf.mxu0
    %v1349 = vadd.f32 %v234, %v1348
    %1350 = vmatprep.mubr.bf16.mxu0 %v664
    %1351 = vmatmul.mubr.bf16.gmra.mxu0 %v663
    %v1352 = vpop.f32.mrf.mxu0
    %v1353 = vadd.f32 %v230, %v1352
    %v1354 = vpop.f32.mrf.mxu0
    %v1355 = vadd.f32 %v234, %v1354
    %v1356 = vpop.f32.mrf.mxu0
    %v1357 = vadd.f32 %v230, %v1356
    %v1358 = vpop.f32.mrf.mxu0
    %v1359 = vadd.f32 %v234, %v1358
    %1360 = vmatprep.mubr.bf16.mxu0 %v667
    %1361 = vmatmul.mubr.bf16.gmra.mxu0 %v666
    %v1362 = vpop.f32.mrf.mxu0
    %v1363 = vadd.f32 %v230, %v1362
    %v1364 = vpop.f32.mrf.mxu0
    %v1365 = vadd.f32 %v234, %v1364
    %v1366 = vpop.f32.mrf.mxu0
    %v1367 = vadd.f32 %v230, %v1366
    %v1368 = vpop.f32.mrf.mxu0
    %v1369 = vadd.f32 %v234, %v1368
    %1370 = vmatprep.mubr.bf16.mxu0 %v670
    %1371 = vmatmul.mubr.bf16.gmra.mxu0 %v669
    %v1372 = vpop.f32.mrf.mxu0
    %v1373 = vadd.f32 %v230, %v1372
    %v1374 = vpop.f32.mrf.mxu0
    %v1375 = vadd.f32 %v234, %v1374
    %v1376 = vpop.f32.mrf.mxu0
    %v1377 = vadd.f32 %v230, %v1376
    %v1378 = vpop.f32.mrf.mxu0
    %v1379 = vadd.f32 %v234, %v1378
    %1380 = vmatprep.mubr.bf16.mxu0 %v673
    %1381 = vmatmul.mubr.bf16.gmra.mxu0 %v672
    %v1382 = vpop.f32.mrf.mxu0
    %v1383 = vadd.f32 %v230, %v1382
    %v1384 = vpop.f32.mrf.mxu0
    %v1385 = vadd.f32 %v234, %v1384
    %v1386 = vpop.f32.mrf.mxu0
    %v1387 = vadd.f32 %v230, %v1386
    %v1388 = vpop.f32.mrf.mxu0
    %v1389 = vadd.f32 %v234, %v1388
    %1390 = vmatprep.mubr.bf16.mxu0 %v676
    %1391 = vmatmul.mubr.bf16.gmra.mxu0 %v675
    %v1392 = vpop.f32.mrf.mxu0
    %v1393 = vadd.f32 %v230, %v1392
    %v1394 = vpop.f32.mrf.mxu0
    %v1395 = vadd.f32 %v234, %v1394
    %v1396 = vpop.f32.mrf.mxu0
    %v1397 = vadd.f32 %v230, %v1396
    %v1398 = vpop.f32.mrf.mxu0
    %v1399 = vadd.f32 %v234, %v1398
    %1400 = vmatprep.mubr.bf16.mxu0 %v679
    %1401 = vmatmul.mubr.bf16.gmra.mxu0 %v678
    %v1402 = vpop.f32.mrf.mxu0
    %v1403 = vadd.f32 %v230, %v1402
    %v1404 = vpop.f32.mrf.mxu0
    %v1405 = vadd.f32 %v234, %v1404
    %v1406 = vpop.f32.mrf.mxu0
    %v1407 = vadd.f32 %v230, %v1406
    %v1408 = vpop.f32.mrf.mxu0
    %v1409 = vadd.f32 %v234, %v1408
    %1410 = vmatprep.mubr.bf16.mxu0 %v682
    %1411 = vmatmul.mubr.bf16.gmra.mxu0 %v681
    %v1412 = vpop.f32.mrf.mxu0
    %v1413 = vadd.f32 %v230, %v1412
    %v1414 = vpop.f32.mrf.mxu0
    %v1415 = vadd.f32 %v234, %v1414
    %v1416 = vpop.f32.mrf.mxu0
    %v1417 = vadd.f32 %v230, %v1416
    %v1418 = vpop.f32.mrf.mxu0
    %v1419 = vadd.f32 %v234, %v1418
    %1420 = vmatprep.mubr.bf16.mxu0 %v685
    %1421 = vmatmul.mubr.bf16.gmra.mxu0 %v684
    %v1422 = vpop.f32.mrf.mxu0
    %v1423 = vadd.f32 %v230, %v1422
    %v1424 = vpop.f32.mrf.mxu0
    %v1425 = vadd.f32 %v234, %v1424
    %v1426 = vpop.f32.mrf.mxu0
    %v1427 = vadd.f32 %v230, %v1426
    %v1428 = vpop.f32.mrf.mxu0
    %v1429 = vadd.f32 %v234, %v1428
    %1430 = vmatprep.mubr.bf16.mxu0 %v688
    %1431 = vmatmul.mubr.bf16.gmra.mxu0 %v687
    %v1432 = vpop.f32.mrf.mxu0
    %v1433 = vadd.f32 %v230, %v1432
    %v1434 = vpop.f32.mrf.mxu0
    %v1435 = vadd.f32 %v234, %v1434
    %v1436 = vpop.f32.mrf.mxu0
    %v1437 = vadd.f32 %v230, %v1436
    %v1438 = vpop.f32.mrf.mxu0
    %v1439 = vadd.f32 %v234, %v1438
    %1440 = vmatprep.mubr.bf16.mxu0 %v691
    %1441 = vmatmul.mubr.bf16.gmra.mxu0 %v690
    %v1442 = vpop.f32.mrf.mxu0
    %v1443 = vadd.f32 %v230, %v1442
    %v1444 = vpop.f32.mrf.mxu0
    %v1445 = vadd.f32 %v234, %v1444
    %v1446 = vpop.f32.mrf.mxu0
    %v1447 = vadd.f32 %v230, %v1446
    %v1448 = vpop.f32.mrf.mxu0
    %v1449 = vadd.f32 %v234, %v1448
    %1450 = vmatprep.mubr.bf16.mxu0 %v694
    %1451 = vmatmul.mubr.bf16.gmra.mxu0 %v693
    %v1452 = vpop.f32.mrf.mxu0
    %v1453 = vadd.f32 %v230, %v1452
    %v1454 = vpop.f32.mrf.mxu0
    %v1455 = vadd.f32 %v234, %v1454
    %v1456 = vpop.f32.mrf.mxu0
    %v1457 = vadd.f32 %v230, %v1456
    %v1458 = vpop.f32.mrf.mxu0
    %v1459 = vadd.f32 %v234, %v1458
    %1460 = vmatprep.mubr.bf16.mxu0 %v697
    %1461 = vmatmul.mubr.bf16.gmra.mxu0 %v696
    %v1462 = vpop.f32.mrf.mxu0
    %v1463 = vadd.f32 %v230, %v1462
    %v1464 = vpop.f32.mrf.mxu0
    %v1465 = vadd.f32 %v234, %v1464
    %v1466 = vpop.f32.mrf.mxu0
    %v1467 = vadd.f32 %v230, %v1466
    %v1468 = vpop.f32.mrf.mxu0
    %v1469 = vadd.f32 %v234, %v1468
    %1470 = vmatprep.mubr.bf16.mxu0 %v700
    %1471 = vmatmul.mubr.bf16.gmra.mxu0 %v699
    %v1472 = vpop.f32.mrf.mxu0
    %v1473 = vadd.f32 %v230, %v1472
    %v1474 = vpop.f32.mrf.mxu0
    %v1475 = vadd.f32 %v234, %v1474
    %v1476 = vpop.f32.mrf.mxu0
    %v1477 = vadd.f32 %v230, %v1476
    %v1478 = vpop.f32.mrf.mxu0
    %v1479 = vadd.f32 %v234, %v1478
    %1480 = vmatprep.mubr.bf16.mxu0 %v703
    %1481 = vmatmul.mubr.bf16.gmra.mxu0 %v702
    %v1482 = vpop.f32.mrf.mxu0
    %v1483 = vadd.f32 %v230, %v1482
    %v1484 = vpop.f32.mrf.mxu0
    %v1485 = vadd.f32 %v234, %v1484
    %v1486 = vpop.f32.mrf.mxu0
    %v1487 = vadd.f32 %v230, %v1486
    %v1488 = vpop.f32.mrf.mxu0
    %v1489 = vadd.f32 %v234, %v1488
    %1490 = vdwg.mxu0
    %1491 = vmatprep.subr.bf16.mxu0 0
    %1492 = vmatpush1.bf16.msra.mxu0 0
    %1493 = vmatprep.subr.bf16.mxu0 0
    %1494 = vmatpush1.bf16.msra.mxu0 0
    %1495 = vmatprep.subr.bf16.mxu0 0
    %1496 = vmatpush1.bf16.msra.mxu0 0
    %1497 = vmatprep.subr.bf16.mxu0 %v1096
    %1498 = vmatpush1.bf16.msra.mxu0 %v1093
    %1499 = vmatprep.subr.bf16.mxu0 %v939
    %1500 = vmatpush1.bf16.msra.mxu0 %v938
    %1501 = vmatprep.subr.bf16.mxu0 %v937
    %1502 = vmatpush1.bf16.msra.mxu0 %v936
    %1503 = vmatprep.subr.bf16.mxu0 %v935
    %1504 = vmatpush1.bf16.msra.mxu0 %v934
    %1505 = vmatprep.subr.bf16.mxu0 %v933
    %1506 = vmatpush1.bf16.msra.mxu0 %v932
    %1507 = vmatprep.subr.bf16.mxu0 0
    %1508 = vmatpush2.bf16.msra.mxu0 0
    %1509 = vmatprep.subr.bf16.mxu0 0
    %1510 = vmatpush2.bf16.msra.mxu0 0
    %1511 = vmatprep.subr.bf16.mxu0 0
    %1512 = vmatpush2.bf16.msra.mxu0 0
    %1513 = vmatprep.subr.bf16.mxu0 0
    %1514 = vmatpush2.bf16.msra.mxu0 0
    %1515 = vmatprep.subr.bf16.mxu0 0
    %1516 = vmatpush2.bf16.msra.mxu0 0
    %1517 = vmatprep.subr.bf16.mxu0 0
    %1518 = vmatpush2.bf16.msra.mxu0 0
    %1519 = vmatprep.subr.bf16.mxu0 0
    %1520 = vmatpush2.bf16.msra.mxu0 0
    %1521 = vmatprep.subr.bf16.mxu0 0
    %1522 = vmatpush2.bf16.msra.mxu0 0
    %1523 = vmatprep.mubr.bf16.mxu0 0
    %1524 = vmatmul.mubr.bf16.gmra.mxu0 %v984
    %v1525 = vpop.f32.mrf.mxu0
    %v1526 = vadd.f32 %v1133, %v1525
    %v1527 = vpop.f32.mrf.mxu0
    %v1528 = vadd.f32 %v1135, %v1527
    %v1529 = vpop.f32.mrf.mxu0
    %v1530 = vadd.f32 %v1137, %v1529
    %v1531 = vpop.f32.mrf.mxu0
    %v1532 = vadd.f32 %v1139, %v1531
    %1533 = vmatprep.mubr.bf16.mxu0 0
    %1534 = vmatmul.mubr.bf16.gmra.mxu0 %v987
    %v1535 = vpop.f32.mrf.mxu0
    %v1536 = vadd.f32 %v1143, %v1535
    %v1537 = vpop.f32.mrf.mxu0
    %v1538 = vadd.f32 %v1145, %v1537
    %v1539 = vpop.f32.mrf.mxu0
    %v1540 = vadd.f32 %v1147, %v1539
    %v1541 = vpop.f32.mrf.mxu0
    %v1542 = vadd.f32 %v1149, %v1541
    %1543 = vmatprep.mubr.bf16.mxu0 0
    %1544 = vmatmul.mubr.bf16.gmra.mxu0 %v990
    %v1545 = vpop.f32.mrf.mxu0
    %v1546 = vadd.f32 %v1153, %v1545
    %v1547 = vpop.f32.mrf.mxu0
    %v1548 = vadd.f32 %v1155, %v1547
    %v1549 = vpop.f32.mrf.mxu0
    %v1550 = vadd.f32 %v1157, %v1549
    %v1551 = vpop.f32.mrf.mxu0
    %v1552 = vadd.f32 %v1159, %v1551
    %1553 = vmatprep.mubr.bf16.mxu0 0
    %1554 = vmatmul.mubr.bf16.gmra.mxu0 %v993
    %v1555 = vpop.f32.mrf.mxu0
    %v1556 = vadd.f32 %v1163, %v1555
    %v1557 = vpop.f32.mrf.mxu0
    %v1558 = vadd.f32 %v1165, %v1557
    %v1559 = vpop.f32.mrf.mxu0
    %v1560 = vadd.f32 %v1167, %v1559
    %v1561 = vpop.f32.mrf.mxu0
    %v1562 = vadd.f32 %v1169, %v1561
    %1563 = vmatprep.mubr.bf16.mxu0 0
    %1564 = vmatmul.mubr.bf16.gmra.mxu0 %v996
    %v1565 = vpop.f32.mrf.mxu0
    %v1566 = vadd.f32 %v1173, %v1565
    %v1567 = vpop.f32.mrf.mxu0
    %v1568 = vadd.f32 %v1175, %v1567
    %v1569 = vpop.f32.mrf.mxu0
    %v1570 = vadd.f32 %v1177, %v1569
    %v1571 = vpop.f32.mrf.mxu0
    %v1572 = vadd.f32 %v1179, %v1571
    %1573 = vmatprep.mubr.bf16.mxu0 0
    %1574 = vmatmul.mubr.bf16.gmra.mxu0 %v999
    %v1575 = vpop.f32.mrf.mxu0
    %v1576 = vadd.f32 %v1183, %v1575
    %v1577 = vpop.f32.mrf.mxu0
    %v1578 = vadd.f32 %v1185, %v1577
    %v1579 = vpop.f32.mrf.mxu0
    %v1580 = vadd.f32 %v1187, %v1579
    %v1581 = vpop.f32.mrf.mxu0
    %v1582 = vadd.f32 %v1189, %v1581
    %1583 = vmatprep.mubr.bf16.mxu0 0
    %1584 = vmatmul.mubr.bf16.gmra.mxu0 %v1002
    %v1585 = vpop.f32.mrf.mxu0
    %v1586 = vadd.f32 %v1193, %v1585
    %v1587 = vpop.f32.mrf.mxu0
    %v1588 = vadd.f32 %v1195, %v1587
    %v1589 = vpop.f32.mrf.mxu0
    %v1590 = vadd.f32 %v1197, %v1589
    %v1591 = vpop.f32.mrf.mxu0
    %v1592 = vadd.f32 %v1199, %v1591
    %1593 = vmatprep.mubr.bf16.mxu0 0
    %1594 = vmatmul.mubr.bf16.gmra.mxu0 %v1005
    %v1595 = vpop.f32.mrf.mxu0
    %v1596 = vadd.f32 %v1203, %v1595
    %v1597 = vpop.f32.mrf.mxu0
    %v1598 = vadd.f32 %v1205, %v1597
    %v1599 = vpop.f32.mrf.mxu0
    %v1600 = vadd.f32 %v1207, %v1599
    %v1601 = vpop.f32.mrf.mxu0
    %v1602 = vadd.f32 %v1209, %v1601
    %1603 = vmatprep.mubr.bf16.mxu0 0
    %1604 = vmatmul.mubr.bf16.gmra.mxu0 %v1008
    %v1605 = vpop.f32.mrf.mxu0
    %v1606 = vadd.f32 %v1213, %v1605
    %v1607 = vpop.f32.mrf.mxu0
    %v1608 = vadd.f32 %v1215, %v1607
    %v1609 = vpop.f32.mrf.mxu0
    %v1610 = vadd.f32 %v1217, %v1609
    %v1611 = vpop.f32.mrf.mxu0
    %v1612 = vadd.f32 %v1219, %v1611
    %1613 = vmatprep.mubr.bf16.mxu0 0
    %1614 = vmatmul.mubr.bf16.gmra.mxu0 %v1011
    %v1615 = vpop.f32.mrf.mxu0
    %v1616 = vadd.f32 %v1223, %v1615
    %v1617 = vpop.f32.mrf.mxu0
    %v1618 = vadd.f32 %v1225, %v1617
    %v1619 = vpop.f32.mrf.mxu0
    %v1620 = vadd.f32 %v1227, %v1619
    %v1621 = vpop.f32.mrf.mxu0
    %v1622 = vadd.f32 %v1229, %v1621
    %1623 = vmatprep.mubr.bf16.mxu0 0
    %1624 = vmatmul.mubr.bf16.gmra.mxu0 %v1014
    %v1625 = vpop.f32.mrf.mxu0
    %v1626 = vadd.f32 %v1233, %v1625
    %v1627 = vpop.f32.mrf.mxu0
    %v1628 = vadd.f32 %v1235, %v1627
    %v1629 = vpop.f32.mrf.mxu0
    %v1630 = vadd.f32 %v1237, %v1629
    %v1631 = vpop.f32.mrf.mxu0
    %v1632 = vadd.f32 %v1239, %v1631
    %1633 = vmatprep.mubr.bf16.mxu0 0
    %1634 = vmatmul.mubr.bf16.gmra.mxu0 %v1017
    %v1635 = vpop.f32.mrf.mxu0
    %v1636 = vadd.f32 %v1243, %v1635
    %v1637 = vpop.f32.mrf.mxu0
    %v1638 = vadd.f32 %v1245, %v1637
    %v1639 = vpop.f32.mrf.mxu0
    %v1640 = vadd.f32 %v1247, %v1639
    %v1641 = vpop.f32.mrf.mxu0
    %v1642 = vadd.f32 %v1249, %v1641
    %1643 = vmatprep.mubr.bf16.mxu0 0
    %1644 = vmatmul.mubr.bf16.gmra.mxu0 %v1020
    %v1645 = vpop.f32.mrf.mxu0
    %v1646 = vadd.f32 %v1253, %v1645
    %v1647 = vpop.f32.mrf.mxu0
    %v1648 = vadd.f32 %v1255, %v1647
    %v1649 = vpop.f32.mrf.mxu0
    %v1650 = vadd.f32 %v1257, %v1649
    %v1651 = vpop.f32.mrf.mxu0
    %v1652 = vadd.f32 %v1259, %v1651
    %1653 = vmatprep.mubr.bf16.mxu0 0
    %1654 = vmatmul.mubr.bf16.gmra.mxu0 %v1023
    %v1655 = vpop.f32.mrf.mxu0
    %v1656 = vadd.f32 %v1263, %v1655
    %v1657 = vpop.f32.mrf.mxu0
    %v1658 = vadd.f32 %v1265, %v1657
    %v1659 = vpop.f32.mrf.mxu0
    %v1660 = vadd.f32 %v1267, %v1659
    %v1661 = vpop.f32.mrf.mxu0
    %v1662 = vadd.f32 %v1269, %v1661
    %1663 = vmatprep.mubr.bf16.mxu0 0
    %1664 = vmatmul.mubr.bf16.gmra.mxu0 %v1026
    %v1665 = vpop.f32.mrf.mxu0
    %v1666 = vadd.f32 %v1273, %v1665
    %v1667 = vpop.f32.mrf.mxu0
    %v1668 = vadd.f32 %v1275, %v1667
    %v1669 = vpop.f32.mrf.mxu0
    %v1670 = vadd.f32 %v1277, %v1669
    %v1671 = vpop.f32.mrf.mxu0
    %v1672 = vadd.f32 %v1279, %v1671
    %1673 = vmatprep.mubr.bf16.mxu0 0
    %1674 = vmatmul.mubr.bf16.gmra.mxu0 %v1029
    %v1675 = vpop.f32.mrf.mxu0
    %v1676 = vadd.f32 %v1283, %v1675
    %v1677 = vpop.f32.mrf.mxu0
    %v1678 = vadd.f32 %v1285, %v1677
    %v1679 = vpop.f32.mrf.mxu0
    %v1680 = vadd.f32 %v1287, %v1679
    %v1681 = vpop.f32.mrf.mxu0
    %v1682 = vadd.f32 %v1289, %v1681
    %1683 = vmatprep.mubr.bf16.mxu0 0
    %1684 = vmatmul.mubr.bf16.gmra.mxu0 %v1032
    %v1685 = vpop.f32.mrf.mxu0
    %v1686 = vadd.f32 %v1293, %v1685
    %v1687 = vpop.f32.mrf.mxu0
    %v1688 = vadd.f32 %v1295, %v1687
    %v1689 = vpop.f32.mrf.mxu0
    %v1690 = vadd.f32 %v1297, %v1689
    %v1691 = vpop.f32.mrf.mxu0
    %v1692 = vadd.f32 %v1299, %v1691
    %1693 = vmatprep.mubr.bf16.mxu0 0
    %1694 = vmatmul.mubr.bf16.gmra.mxu0 %v1035
    %v1695 = vpop.f32.mrf.mxu0
    %v1696 = vadd.f32 %v1303, %v1695
    %v1697 = vpop.f32.mrf.mxu0
    %v1698 = vadd.f32 %v1305, %v1697
    %v1699 = vpop.f32.mrf.mxu0
    %v1700 = vadd.f32 %v1307, %v1699
    %v1701 = vpop.f32.mrf.mxu0
    %v1702 = vadd.f32 %v1309, %v1701
    %1703 = vmatprep.mubr.bf16.mxu0 0
    %1704 = vmatmul.mubr.bf16.gmra.mxu0 %v1038
    %v1705 = vpop.f32.mrf.mxu0
    %v1706 = vadd.f32 %v1313, %v1705
    %v1707 = vpop.f32.mrf.mxu0
    %v1708 = vadd.f32 %v1315, %v1707
    %v1709 = vpop.f32.mrf.mxu0
    %v1710 = vadd.f32 %v1317, %v1709
    %v1711 = vpop.f32.mrf.mxu0
    %v1712 = vadd.f32 %v1319, %v1711
    %1713 = vmatprep.mubr.bf16.mxu0 0
    %1714 = vmatmul.mubr.bf16.gmra.mxu0 %v1041
    %v1715 = vpop.f32.mrf.mxu0
    %v1716 = vadd.f32 %v1323, %v1715
    %v1717 = vpop.f32.mrf.mxu0
    %v1718 = vadd.f32 %v1325, %v1717
    %v1719 = vpop.f32.mrf.mxu0
    %v1720 = vadd.f32 %v1327, %v1719
    %v1721 = vpop.f32.mrf.mxu0
    %v1722 = vadd.f32 %v1329, %v1721
    %1723 = vmatprep.mubr.bf16.mxu0 0
    %1724 = vmatmul.mubr.bf16.gmra.mxu0 %v1044
    %v1725 = vpop.f32.mrf.mxu0
    %v1726 = vadd.f32 %v1333, %v1725
    %v1727 = vpop.f32.mrf.mxu0
    %v1728 = vadd.f32 %v1335, %v1727
    %v1729 = vpop.f32.mrf.mxu0
    %v1730 = vadd.f32 %v1337, %v1729
    %v1731 = vpop.f32.mrf.mxu0
    %v1732 = vadd.f32 %v1339, %v1731
    %1733 = vmatprep.mubr.bf16.mxu0 0
    %1734 = vmatmul.mubr.bf16.gmra.mxu0 %v1047
    %v1735 = vpop.f32.mrf.mxu0
    %v1736 = vadd.f32 %v1343, %v1735
    %v1737 = vpop.f32.mrf.mxu0
    %v1738 = vadd.f32 %v1345, %v1737
    %v1739 = vpop.f32.mrf.mxu0
    %v1740 = vadd.f32 %v1347, %v1739
    %v1741 = vpop.f32.mrf.mxu0
    %v1742 = vadd.f32 %v1349, %v1741
    %1743 = vmatprep.mubr.bf16.mxu0 0
    %1744 = vmatmul.mubr.bf16.gmra.mxu0 %v1050
    %v1745 = vpop.f32.mrf.mxu0
    %v1746 = vadd.f32 %v1353, %v1745
    %v1747 = vpop.f32.mrf.mxu0
    %v1748 = vadd.f32 %v1355, %v1747
    %v1749 = vpop.f32.mrf.mxu0
    %v1750 = vadd.f32 %v1357, %v1749
    %v1751 = vpop.f32.mrf.mxu0
    %v1752 = vadd.f32 %v1359, %v1751
    %1753 = vmatprep.mubr.bf16.mxu0 0
    %1754 = vmatmul.mubr.bf16.gmra.mxu0 %v1053
    %v1755 = vpop.f32.mrf.mxu0
    %v1756 = vadd.f32 %v1363, %v1755
    %v1757 = vpop.f32.mrf.mxu0
    %v1758 = vadd.f32 %v1365, %v1757
    %v1759 = vpop.f32.mrf.mxu0
    %v1760 = vadd.f32 %v1367, %v1759
    %v1761 = vpop.f32.mrf.mxu0
    %v1762 = vadd.f32 %v1369, %v1761
    %1763 = vmatprep.mubr.bf16.mxu0 0
    %1764 = vmatmul.mubr.bf16.gmra.mxu0 %v1056
    %v1765 = vpop.f32.mrf.mxu0
    %v1766 = vadd.f32 %v1373, %v1765
    %v1767 = vpop.f32.mrf.mxu0
    %v1768 = vadd.f32 %v1375, %v1767
    %v1769 = vpop.f32.mrf.mxu0
    %v1770 = vadd.f32 %v1377, %v1769
    %v1771 = vpop.f32.mrf.mxu0
    %v1772 = vadd.f32 %v1379, %v1771
    %1773 = vmatprep.mubr.bf16.mxu0 0
    %1774 = vmatmul.mubr.bf16.gmra.mxu0 %v1059
    %v1775 = vpop.f32.mrf.mxu0
    %v1776 = vadd.f32 %v1383, %v1775
    %v1777 = vpop.f32.mrf.mxu0
    %v1778 = vadd.f32 %v1385, %v1777
    %v1779 = vpop.f32.mrf.mxu0
    %v1780 = vadd.f32 %v1387, %v1779
    %v1781 = vpop.f32.mrf.mxu0
    %v1782 = vadd.f32 %v1389, %v1781
    %1783 = vmatprep.mubr.bf16.mxu0 0
    %1784 = vmatmul.mubr.bf16.gmra.mxu0 %v1062
    %v1785 = vpop.f32.mrf.mxu0
    %v1786 = vadd.f32 %v1393, %v1785
    %v1787 = vpop.f32.mrf.mxu0
    %v1788 = vadd.f32 %v1395, %v1787
    %v1789 = vpop.f32.mrf.mxu0
    %v1790 = vadd.f32 %v1397, %v1789
    %v1791 = vpop.f32.mrf.mxu0
    %v1792 = vadd.f32 %v1399, %v1791
    %1793 = vmatprep.mubr.bf16.mxu0 0
    %1794 = vmatmul.mubr.bf16.gmra.mxu0 %v1065
    %v1795 = vpop.f32.mrf.mxu0
    %v1796 = vadd.f32 %v1403, %v1795
    %v1797 = vpop.f32.mrf.mxu0
    %v1798 = vadd.f32 %v1405, %v1797
    %v1799 = vpop.f32.mrf.mxu0
    %v1800 = vadd.f32 %v1407, %v1799
    %v1801 = vpop.f32.mrf.mxu0
    %v1802 = vadd.f32 %v1409, %v1801
    %1803 = vmatprep.mubr.bf16.mxu0 0
    %1804 = vmatmul.mubr.bf16.gmra.mxu0 %v1068
    %v1805 = vpop.f32.mrf.mxu0
    %v1806 = vadd.f32 %v1413, %v1805
    %v1807 = vpop.f32.mrf.mxu0
    %v1808 = vadd.f32 %v1415, %v1807
    %v1809 = vpop.f32.mrf.mxu0
    %v1810 = vadd.f32 %v1417, %v1809
    %v1811 = vpop.f32.mrf.mxu0
    %v1812 = vadd.f32 %v1419, %v1811
    %1813 = vmatprep.mubr.bf16.mxu0 0
    %1814 = vmatmul.mubr.bf16.gmra.mxu0 %v1071
    %v1815 = vpop.f32.mrf.mxu0
    %v1816 = vadd.f32 %v1423, %v1815
    %v1817 = vpop.f32.mrf.mxu0
    %v1818 = vadd.f32 %v1425, %v1817
    %v1819 = vpop.f32.mrf.mxu0
    %v1820 = vadd.f32 %v1427, %v1819
    %v1821 = vpop.f32.mrf.mxu0
    %v1822 = vadd.f32 %v1429, %v1821
    %1823 = vmatprep.mubr.bf16.mxu0 0
    %1824 = vmatmul.mubr.bf16.gmra.mxu0 %v1074
    %v1825 = vpop.f32.mrf.mxu0
    %v1826 = vadd.f32 %v1433, %v1825
    %v1827 = vpop.f32.mrf.mxu0
    %v1828 = vadd.f32 %v1435, %v1827
    %v1829 = vpop.f32.mrf.mxu0
    %v1830 = vadd.f32 %v1437, %v1829
    %v1831 = vpop.f32.mrf.mxu0
    %v1832 = vadd.f32 %v1439, %v1831
    %1833 = vmatprep.mubr.bf16.mxu0 0
    %1834 = vmatmul.mubr.bf16.gmra.mxu0 %v1077
    %v1835 = vpop.f32.mrf.mxu0
    %v1836 = vadd.f32 %v1443, %v1835
    %v1837 = vpop.f32.mrf.mxu0
    %v1838 = vadd.f32 %v1445, %v1837
    %v1839 = vpop.f32.mrf.mxu0
    %v1840 = vadd.f32 %v1447, %v1839
    %v1841 = vpop.f32.mrf.mxu0
    %v1842 = vadd.f32 %v1449, %v1841
    %1843 = vmatprep.mubr.bf16.mxu0 0
    %1844 = vmatmul.mubr.bf16.gmra.mxu0 %v1080
    %v1845 = vpop.f32.mrf.mxu0
    %v1846 = vadd.f32 %v1453, %v1845
    %v1847 = vpop.f32.mrf.mxu0
    %v1848 = vadd.f32 %v1455, %v1847
    %v1849 = vpop.f32.mrf.mxu0
    %v1850 = vadd.f32 %v1457, %v1849
    %v1851 = vpop.f32.mrf.mxu0
    %v1852 = vadd.f32 %v1459, %v1851
    %1853 = vmatprep.mubr.bf16.mxu0 0
    %1854 = vmatmul.mubr.bf16.gmra.mxu0 %v1083
    %v1855 = vpop.f32.mrf.mxu0
    %v1856 = vadd.f32 %v1463, %v1855
    %v1857 = vpop.f32.mrf.mxu0
    %v1858 = vadd.f32 %v1465, %v1857
    %v1859 = vpop.f32.mrf.mxu0
    %v1860 = vadd.f32 %v1467, %v1859
    %v1861 = vpop.f32.mrf.mxu0
    %v1862 = vadd.f32 %v1469, %v1861
    %1863 = vmatprep.mubr.bf16.mxu0 0
    %1864 = vmatmul.mubr.bf16.gmra.mxu0 %v1086
    %v1865 = vpop.f32.mrf.mxu0
    %v1866 = vadd.f32 %v1473, %v1865
    %v1867 = vpop.f32.mrf.mxu0
    %v1868 = vadd.f32 %v1475, %v1867
    %v1869 = vpop.f32.mrf.mxu0
    %v1870 = vadd.f32 %v1477, %v1869
    %v1871 = vpop.f32.mrf.mxu0
    %v1872 = vadd.f32 %v1479, %v1871
    %1873 = vmatprep.mubr.bf16.mxu0 0
    %1874 = vmatmul.mubr.bf16.gmra.mxu0 %v1089
    %v1875 = vpop.f32.mrf.mxu0
    %v1876 = vadd.f32 %v1483, %v1875
    %v1877 = vpop.f32.mrf.mxu0
    %v1878 = vadd.f32 %v1485, %v1877
    %v1879 = vpop.f32.mrf.mxu0
    %v1880 = vadd.f32 %v1487, %v1879
    %v1881 = vpop.f32.mrf.mxu0
    %v1882 = vadd.f32 %v1489, %v1881
    %1883 = vdwg.mxu0
    %vm1884 = vcmp.gt.f32.partialorder %v1526, 0.0
    %vm1885 = vcmp.gt.f32.partialorder %v1528, 0.0
    %vm1886 = vcmp.gt.f32.partialorder %v1530, 0.0
    %vm1887 = vcmp.gt.f32.partialorder %v1532, 0.0
    %vm1888 = vcmp.gt.f32.partialorder %v1536, 0.0
    %vm1889 = vcmp.gt.f32.partialorder %v1538, 0.0
    %vm1890 = vcmp.gt.f32.partialorder %v1540, 0.0
    %vm1891 = vcmp.gt.f32.partialorder %v1542, 0.0
    %vm1892 = vcmp.gt.f32.partialorder %v1546, 0.0
    %vm1893 = vcmp.gt.f32.partialorder %v1548, 0.0
    %vm1894 = vcmp.gt.f32.partialorder %v1550, 0.0
    %vm1895 = vcmp.gt.f32.partialorder %v1552, 0.0
    %vm1896 = vcmp.gt.f32.partialorder %v1556, 0.0
    %vm1897 = vcmp.gt.f32.partialorder %v1558, 0.0
    %vm1898 = vcmp.gt.f32.partialorder %v1560, 0.0
    %vm1899 = vcmp.gt.f32.partialorder %v1562, 0.0
    %vm1900 = vcmp.gt.f32.partialorder %v1566, 0.0
    %vm1901 = vcmp.gt.f32.partialorder %v1568, 0.0
    %vm1902 = vcmp.gt.f32.partialorder %v1570, 0.0
    %vm1903 = vcmp.gt.f32.partialorder %v1572, 0.0
    %vm1904 = vcmp.gt.f32.partialorder %v1576, 0.0
    %vm1905 = vcmp.gt.f32.partialorder %v1578, 0.0
    %vm1906 = vcmp.gt.f32.partialorder %v1580, 0.0
    %vm1907 = vcmp.gt.f32.partialorder %v1582, 0.0
    %vm1908 = vcmp.gt.f32.partialorder %v1586, 0.0
    %vm1909 = vcmp.gt.f32.partialorder %v1588, 0.0
    %vm1910 = vcmp.gt.f32.partialorder %v1590, 0.0
    %vm1911 = vcmp.gt.f32.partialorder %v1592, 0.0
    %vm1912 = vcmp.gt.f32.partialorder %v1596, 0.0
    %vm1913 = vcmp.gt.f32.partialorder %v1598, 0.0
    %vm1914 = vcmp.gt.f32.partialorder %v1600, 0.0
    %vm1915 = vcmp.gt.f32.partialorder %v1602, 0.0
    %vm1916 = vcmp.gt.f32.partialorder %v1606, 0.0
    %vm1917 = vcmp.gt.f32.partialorder %v1608, 0.0
    %vm1918 = vcmp.gt.f32.partialorder %v1610, 0.0
    %vm1919 = vcmp.gt.f32.partialorder %v1612, 0.0
    %vm1920 = vcmp.gt.f32.partialorder %v1616, 0.0
    %vm1921 = vcmp.gt.f32.partialorder %v1618, 0.0
    %vm1922 = vcmp.gt.f32.partialorder %v1620, 0.0
    %vm1923 = vcmp.gt.f32.partialorder %v1622, 0.0
    %vm1924 = vcmp.gt.f32.partialorder %v1626, 0.0
    %vm1925 = vcmp.gt.f32.partialorder %v1628, 0.0
    %vm1926 = vcmp.gt.f32.partialorder %v1630, 0.0
    %vm1927 = vcmp.gt.f32.partialorder %v1632, 0.0
    %vm1928 = vcmp.gt.f32.partialorder %v1636, 0.0
    %vm1929 = vcmp.gt.f32.partialorder %v1638, 0.0
    %vm1930 = vcmp.gt.f32.partialorder %v1640, 0.0
    %vm1931 = vcmp.gt.f32.partialorder %v1642, 0.0
    %vm1932 = vcmp.gt.f32.partialorder %v1646, 0.0
    %vm1933 = vcmp.gt.f32.partialorder %v1648, 0.0
    %vm1934 = vcmp.gt.f32.partialorder %v1650, 0.0
    %vm1935 = vcmp.gt.f32.partialorder %v1652, 0.0
    %vm1936 = vcmp.gt.f32.partialorder %v1656, 0.0
    %vm1937 = vcmp.gt.f32.partialorder %v1658, 0.0
    %vm1938 = vcmp.gt.f32.partialorder %v1660, 0.0
    %vm1939 = vcmp.gt.f32.partialorder %v1662, 0.0
    %vm1940 = vcmp.gt.f32.partialorder %v1666, 0.0
    %vm1941 = vcmp.gt.f32.partialorder %v1668, 0.0
    %vm1942 = vcmp.gt.f32.partialorder %v1670, 0.0
    %vm1943 = vcmp.gt.f32.partialorder %v1672, 0.0
    %vm1944 = vcmp.gt.f32.partialorder %v1676, 0.0
    %vm1945 = vcmp.gt.f32.partialorder %v1678, 0.0
    %vm1946 = vcmp.gt.f32.partialorder %v1680, 0.0
    %vm1947 = vcmp.gt.f32.partialorder %v1682, 0.0
    %vm1948 = vcmp.gt.f32.partialorder %v1686, 0.0
    %vm1949 = vcmp.gt.f32.partialorder %v1688, 0.0
    %vm1950 = vcmp.gt.f32.partialorder %v1690, 0.0
    %vm1951 = vcmp.gt.f32.partialorder %v1692, 0.0
    %vm1952 = vcmp.gt.f32.partialorder %v1696, 0.0
    %vm1953 = vcmp.gt.f32.partialorder %v1698, 0.0
    %vm1954 = vcmp.gt.f32.partialorder %v1700, 0.0
    %vm1955 = vcmp.gt.f32.partialorder %v1702, 0.0
    %vm1956 = vcmp.gt.f32.partialorder %v1706, 0.0
    %vm1957 = vcmp.gt.f32.partialorder %v1708, 0.0
    %vm1958 = vcmp.gt.f32.partialorder %v1710, 0.0
    %vm1959 = vcmp.gt.f32.partialorder %v1712, 0.0
    %vm1960 = vcmp.gt.f32.partialorder %v1716, 0.0
    %vm1961 = vcmp.gt.f32.partialorder %v1718, 0.0
    %vm1962 = vcmp.gt.f32.partialorder %v1720, 0.0
    %vm1963 = vcmp.gt.f32.partialorder %v1722, 0.0
    %vm1964 = vcmp.gt.f32.partialorder %v1726, 0.0
    %vm1965 = vcmp.gt.f32.partialorder %v1728, 0.0
    %vm1966 = vcmp.gt.f32.partialorder %v1730, 0.0
    %vm1967 = vcmp.gt.f32.partialorder %v1732, 0.0
    %vm1968 = vcmp.gt.f32.partialorder %v1736, 0.0
    %vm1969 = vcmp.gt.f32.partialorder %v1738, 0.0
    %vm1970 = vcmp.gt.f32.partialorder %v1740, 0.0
    %vm1971 = vcmp.gt.f32.partialorder %v1742, 0.0
    %vm1972 = vcmp.gt.f32.partialorder %v1746, 0.0
    %vm1973 = vcmp.gt.f32.partialorder %v1748, 0.0
    %vm1974 = vcmp.gt.f32.partialorder %v1750, 0.0
    %vm1975 = vcmp.gt.f32.partialorder %v1752, 0.0
    %vm1976 = vcmp.gt.f32.partialorder %v1756, 0.0
    %vm1977 = vcmp.gt.f32.partialorder %v1758, 0.0
    %vm1978 = vcmp.gt.f32.partialorder %v1760, 0.0
    %vm1979 = vcmp.gt.f32.partialorder %v1762, 0.0
    %vm1980 = vcmp.gt.f32.partialorder %v1766, 0.0
    %vm1981 = vcmp.gt.f32.partialorder %v1768, 0.0
    %vm1982 = vcmp.gt.f32.partialorder %v1770, 0.0
    %vm1983 = vcmp.gt.f32.partialorder %v1772, 0.0
    %vm1984 = vcmp.gt.f32.partialorder %v1776, 0.0
    %vm1985 = vcmp.gt.f32.partialorder %v1778, 0.0
    %vm1986 = vcmp.gt.f32.partialorder %v1780, 0.0
    %vm1987 = vcmp.gt.f32.partialorder %v1782, 0.0
    %vm1988 = vcmp.gt.f32.partialorder %v1786, 0.0
    %vm1989 = vcmp.gt.f32.partialorder %v1788, 0.0
    %vm1990 = vcmp.gt.f32.partialorder %v1790, 0.0
    %vm1991 = vcmp.gt.f32.partialorder %v1792, 0.0
    %vm1992 = vcmp.gt.f32.partialorder %v1796, 0.0
    %vm1993 = vcmp.gt.f32.partialorder %v1798, 0.0
    %vm1994 = vcmp.gt.f32.partialorder %v1800, 0.0
    %vm1995 = vcmp.gt.f32.partialorder %v1802, 0.0
    %vm1996 = vcmp.gt.f32.partialorder %v1806, 0.0
    %vm1997 = vcmp.gt.f32.partialorder %v1808, 0.0
    %vm1998 = vcmp.gt.f32.partialorder %v1810, 0.0
    %vm1999 = vcmp.gt.f32.partialorder %v1812, 0.0
    %vm2000 = vcmp.gt.f32.partialorder %v1816, 0.0
    %vm2001 = vcmp.gt.f32.partialorder %v1818, 0.0
    %vm2002 = vcmp.gt.f32.partialorder %v1820, 0.0
    %vm2003 = vcmp.gt.f32.partialorder %v1822, 0.0
    %vm2004 = vcmp.gt.f32.partialorder %v1826, 0.0
    %vm2005 = vcmp.gt.f32.partialorder %v1828, 0.0
    %vm2006 = vcmp.gt.f32.partialorder %v1830, 0.0
    %vm2007 = vcmp.gt.f32.partialorder %v1832, 0.0
    %vm2008 = vcmp.gt.f32.partialorder %v1836, 0.0
    %vm2009 = vcmp.gt.f32.partialorder %v1838, 0.0
    %vm2010 = vcmp.gt.f32.partialorder %v1840, 0.0
    %vm2011 = vcmp.gt.f32.partialorder %v1842, 0.0
    %vm2012 = vcmp.gt.f32.partialorder %v1846, 0.0
    %vm2013 = vcmp.gt.f32.partialorder %v1848, 0.0
    %vm2014 = vcmp.gt.f32.partialorder %v1850, 0.0
    %vm2015 = vcmp.gt.f32.partialorder %v1852, 0.0
    %vm2016 = vcmp.gt.f32.partialorder %v1856, 0.0
    %vm2017 = vcmp.gt.f32.partialorder %v1858, 0.0
    %vm2018 = vcmp.gt.f32.partialorder %v1860, 0.0
    %vm2019 = vcmp.gt.f32.partialorder %v1862, 0.0
    %vm2020 = vcmp.gt.f32.partialorder %v1866, 0.0
    %vm2021 = vcmp.gt.f32.partialorder %v1868, 0.0
    %vm2022 = vcmp.gt.f32.partialorder %v1870, 0.0
    %vm2023 = vcmp.gt.f32.partialorder %v1872, 0.0
    %vm2024 = vcmp.gt.f32.partialorder %v1876, 0.0
    %vm2025 = vcmp.gt.f32.partialorder %v1878, 0.0
    %vm2026 = vcmp.gt.f32.partialorder %v1880, 0.0
    %vm2027 = vcmp.gt.f32.partialorder %v1882, 0.0
    %v2028 = vmul.f32 %v1526, 0.01
    %v2029 = vmul.f32 %v1528, 0.01
    %v2030 = vmul.f32 %v1530, 0.01
    %v2031 = vmul.f32 %v1532, 0.01
    %v2032 = vmul.f32 %v1536, 0.01
    %v2033 = vmul.f32 %v1538, 0.01
    %v2034 = vmul.f32 %v1540, 0.01
    %v2035 = vmul.f32 %v1542, 0.01
    %v2036 = vmul.f32 %v1546, 0.01
    %v2037 = vmul.f32 %v1548, 0.01
    %v2038 = vmul.f32 %v1550, 0.01
    %v2039 = vmul.f32 %v1552, 0.01
    %v2040 = vmul.f32 %v1556, 0.01
    %v2041 = vmul.f32 %v1558, 0.01
    %v2042 = vmul.f32 %v1560, 0.01
    %v2043 = vmul.f32 %v1562, 0.01
    %v2044 = vmul.f32 %v1566, 0.01
    %v2045 = vmul.f32 %v1568, 0.01
    %v2046 = vmul.f32 %v1570, 0.01
    %v2047 = vmul.f32 %v1572, 0.01
    %v2048 = vmul.f32 %v1576, 0.01
    %v2049 = vmul.f32 %v1578, 0.01
    %v2050 = vmul.f32 %v1580, 0.01
    %v2051 = vmul.f32 %v1582, 0.01
    %v2052 = vmul.f32 %v1586, 0.01
    %v2053 = vmul.f32 %v1588, 0.01
    %v2054 = vmul.f32 %v1590, 0.01
    %v2055 = vmul.f32 %v1592, 0.01
    %v2056 = vmul.f32 %v1596, 0.01
    %v2057 = vmul.f32 %v1598, 0.01
    %v2058 = vmul.f32 %v1600, 0.01
    %v2059 = vmul.f32 %v1602, 0.01
    %v2060 = vmul.f32 %v1606, 0.01
    %v2061 = vmul.f32 %v1608, 0.01
    %v2062 = vmul.f32 %v1610, 0.01
    %v2063 = vmul.f32 %v1612, 0.01
    %v2064 = vmul.f32 %v1616, 0.01
    %v2065 = vmul.f32 %v1618, 0.01
    %v2066 = vmul.f32 %v1620, 0.01
    %v2067 = vmul.f32 %v1622, 0.01
    %v2068 = vmul.f32 %v1626, 0.01
    %v2069 = vmul.f32 %v1628, 0.01
    %v2070 = vmul.f32 %v1630, 0.01
    %v2071 = vmul.f32 %v1632, 0.01
    %v2072 = vmul.f32 %v1636, 0.01
    %v2073 = vmul.f32 %v1638, 0.01
    %v2074 = vmul.f32 %v1640, 0.01
    %v2075 = vmul.f32 %v1642, 0.01
    %v2076 = vmul.f32 %v1646, 0.01
    %v2077 = vmul.f32 %v1648, 0.01
    %v2078 = vmul.f32 %v1650, 0.01
    %v2079 = vmul.f32 %v1652, 0.01
    %v2080 = vmul.f32 %v1656, 0.01
    %v2081 = vmul.f32 %v1658, 0.01
    %v2082 = vmul.f32 %v1660, 0.01
    %v2083 = vmul.f32 %v1662, 0.01
    %v2084 = vmul.f32 %v1666, 0.01
    %v2085 = vmul.f32 %v1668, 0.01
    %v2086 = vmul.f32 %v1670, 0.01
    %v2087 = vmul.f32 %v1672, 0.01
    %v2088 = vmul.f32 %v1676, 0.01
    %v2089 = vmul.f32 %v1678, 0.01
    %v2090 = vmul.f32 %v1680, 0.01
    %v2091 = vmul.f32 %v1682, 0.01
    %v2092 = vmul.f32 %v1686, 0.01
    %v2093 = vmul.f32 %v1688, 0.01
    %v2094 = vmul.f32 %v1690, 0.01
    %v2095 = vmul.f32 %v1692, 0.01
    %v2096 = vmul.f32 %v1696, 0.01
    %v2097 = vmul.f32 %v1698, 0.01
    %v2098 = vmul.f32 %v1700, 0.01
    %v2099 = vmul.f32 %v1702, 0.01
    %v2100 = vmul.f32 %v1706, 0.01
    %v2101 = vmul.f32 %v1708, 0.01
    %v2102 = vmul.f32 %v1710, 0.01
    %v2103 = vmul.f32 %v1712, 0.01
    %v2104 = vmul.f32 %v1716, 0.01
    %v2105 = vmul.f32 %v1718, 0.01
    %v2106 = vmul.f32 %v1720, 0.01
    %v2107 = vmul.f32 %v1722, 0.01
    %v2108 = vmul.f32 %v1726, 0.01
    %v2109 = vmul.f32 %v1728, 0.01
    %v2110 = vmul.f32 %v1730, 0.01
    %v2111 = vmul.f32 %v1732, 0.01
    %v2112 = vmul.f32 %v1736, 0.01
    %v2113 = vmul.f32 %v1738, 0.01
    %v2114 = vmul.f32 %v1740, 0.01
    %v2115 = vmul.f32 %v1742, 0.01
    %v2116 = vmul.f32 %v1746, 0.01
    %v2117 = vmul.f32 %v1748, 0.01
    %v2118 = vmul.f32 %v1750, 0.01
    %v2119 = vmul.f32 %v1752, 0.01
    %v2120 = vmul.f32 %v1756, 0.01
    %v2121 = vmul.f32 %v1758, 0.01
    %v2122 = vmul.f32 %v1760, 0.01
    %v2123 = vmul.f32 %v1762, 0.01
    %v2124 = vmul.f32 %v1766, 0.01
    %v2125 = vmul.f32 %v1768, 0.01
    %v2126 = vmul.f32 %v1770, 0.01
    %v2127 = vmul.f32 %v1772, 0.01
    %v2128 = vmul.f32 %v1776, 0.01
    %v2129 = vmul.f32 %v1778, 0.01
    %v2130 = vmul.f32 %v1780, 0.01
    %v2131 = vmul.f32 %v1782, 0.01
    %v2132 = vmul.f32 %v1786, 0.01
    %v2133 = vmul.f32 %v1788, 0.01
    %v2134 = vmul.f32 %v1790, 0.01
    %v2135 = vmul.f32 %v1792, 0.01
    %v2136 = vmul.f32 %v1796, 0.01
    %v2137 = vmul.f32 %v1798, 0.01
    %v2138 = vmul.f32 %v1800, 0.01
    %v2139 = vmul.f32 %v1802, 0.01
    %v2140 = vmul.f32 %v1806, 0.01
    %v2141 = vmul.f32 %v1808, 0.01
    %v2142 = vmul.f32 %v1810, 0.01
    %v2143 = vmul.f32 %v1812, 0.01
    %v2144 = vmul.f32 %v1816, 0.01
    %v2145 = vmul.f32 %v1818, 0.01
    %v2146 = vmul.f32 %v1820, 0.01
    %v2147 = vmul.f32 %v1822, 0.01
    %v2148 = vmul.f32 %v1826, 0.01
    %v2149 = vmul.f32 %v1828, 0.01
    %v2150 = vmul.f32 %v1830, 0.01
    %v2151 = vmul.f32 %v1832, 0.01
    %v2152 = vmul.f32 %v1836, 0.01
    %v2153 = vmul.f32 %v1838, 0.01
    %v2154 = vmul.f32 %v1840, 0.01
    %v2155 = vmul.f32 %v1842, 0.01
    %v2156 = vmul.f32 %v1846, 0.01
    %v2157 = vmul.f32 %v1848, 0.01
    %v2158 = vmul.f32 %v1850, 0.01
    %v2159 = vmul.f32 %v1852, 0.01
    %v2160 = vmul.f32 %v1856, 0.01
    %v2161 = vmul.f32 %v1858, 0.01
    %v2162 = vmul.f32 %v1860, 0.01
    %v2163 = vmul.f32 %v1862, 0.01
    %v2164 = vmul.f32 %v1866, 0.01
    %v2165 = vmul.f32 %v1868, 0.01
    %v2166 = vmul.f32 %v1870, 0.01
    %v2167 = vmul.f32 %v1872, 0.01
    %v2168 = vmul.f32 %v1876, 0.01
    %v2169 = vmul.f32 %v1878, 0.01
    %v2170 = vmul.f32 %v1880, 0.01
    %v2171 = vmul.f32 %v1882, 0.01
    %v2172 = vsel %vm1884, %v1526, %v2028
    %v2173 = vsel %vm1885, %v1528, %v2029
    %v2174 = vsel %vm1886, %v1530, %v2030
    %v2175 = vsel %vm1887, %v1532, %v2031
    %v2176 = vsel %vm1888, %v1536, %v2032
    %v2177 = vsel %vm1889, %v1538, %v2033
    %v2178 = vsel %vm1890, %v1540, %v2034
    %v2179 = vsel %vm1891, %v1542, %v2035
    %v2180 = vsel %vm1892, %v1546, %v2036
    %v2181 = vsel %vm1893, %v1548, %v2037
    %v2182 = vsel %vm1894, %v1550, %v2038
    %v2183 = vsel %vm1895, %v1552, %v2039
    %v2184 = vsel %vm1896, %v1556, %v2040
    %v2185 = vsel %vm1897, %v1558, %v2041
    %v2186 = vsel %vm1898, %v1560, %v2042
    %v2187 = vsel %vm1899, %v1562, %v2043
    %v2188 = vsel %vm1900, %v1566, %v2044
    %v2189 = vsel %vm1901, %v1568, %v2045
    %v2190 = vsel %vm1902, %v1570, %v2046
    %v2191 = vsel %vm1903, %v1572, %v2047
    %v2192 = vsel %vm1904, %v1576, %v2048
    %v2193 = vsel %vm1905, %v1578, %v2049
    %v2194 = vsel %vm1906, %v1580, %v2050
    %v2195 = vsel %vm1907, %v1582, %v2051
    %v2196 = vsel %vm1908, %v1586, %v2052
    %v2197 = vsel %vm1909, %v1588, %v2053
    %v2198 = vsel %vm1910, %v1590, %v2054
    %v2199 = vsel %vm1911, %v1592, %v2055
    %v2200 = vsel %vm1912, %v1596, %v2056
    %v2201 = vsel %vm1913, %v1598, %v2057
    %v2202 = vsel %vm1914, %v1600, %v2058
    %v2203 = vsel %vm1915, %v1602, %v2059
    %v2204 = vsel %vm1916, %v1606, %v2060
    %v2205 = vsel %vm1917, %v1608, %v2061
    %v2206 = vsel %vm1918, %v1610, %v2062
    %v2207 = vsel %vm1919, %v1612, %v2063
    %v2208 = vsel %vm1920, %v1616, %v2064
    %v2209 = vsel %vm1921, %v1618, %v2065
    %v2210 = vsel %vm1922, %v1620, %v2066
    %v2211 = vsel %vm1923, %v1622, %v2067
    %v2212 = vsel %vm1924, %v1626, %v2068
    %v2213 = vsel %vm1925, %v1628, %v2069
    %v2214 = vsel %vm1926, %v1630, %v2070
    %v2215 = vsel %vm1927, %v1632, %v2071
    %v2216 = vsel %vm1928, %v1636, %v2072
    %v2217 = vsel %vm1929, %v1638, %v2073
    %v2218 = vsel %vm1930, %v1640, %v2074
    %v2219 = vsel %vm1931, %v1642, %v2075
    %v2220 = vsel %vm1932, %v1646, %v2076
    %v2221 = vsel %vm1933, %v1648, %v2077
    %v2222 = vsel %vm1934, %v1650, %v2078
    %v2223 = vsel %vm1935, %v1652, %v2079
    %v2224 = vsel %vm1936, %v1656, %v2080
    %v2225 = vsel %vm1937, %v1658, %v2081
    %v2226 = vsel %vm1938, %v1660, %v2082
    %v2227 = vsel %vm1939, %v1662, %v2083
    %v2228 = vsel %vm1940, %v1666, %v2084
    %v2229 = vsel %vm1941, %v1668, %v2085
    %v2230 = vsel %vm1942, %v1670, %v2086
    %v2231 = vsel %vm1943, %v1672, %v2087
    %v2232 = vsel %vm1944, %v1676, %v2088
    %v2233 = vsel %vm1945, %v1678, %v2089
    %v2234 = vsel %vm1946, %v1680, %v2090
    %v2235 = vsel %vm1947, %v1682, %v2091
    %v2236 = vsel %vm1948, %v1686, %v2092
    %v2237 = vsel %vm1949, %v1688, %v2093
    %v2238 = vsel %vm1950, %v1690, %v2094
    %v2239 = vsel %vm1951, %v1692, %v2095
    %v2240 = vsel %vm1952, %v1696, %v2096
    %v2241 = vsel %vm1953, %v1698, %v2097
    %v2242 = vsel %vm1954, %v1700, %v2098
    %v2243 = vsel %vm1955, %v1702, %v2099
    %v2244 = vsel %vm1956, %v1706, %v2100
    %v2245 = vsel %vm1957, %v1708, %v2101
    %v2246 = vsel %vm1958, %v1710, %v2102
    %v2247 = vsel %vm1959, %v1712, %v2103
    %v2248 = vsel %vm1960, %v1716, %v2104
    %v2249 = vsel %vm1961, %v1718, %v2105
    %v2250 = vsel %vm1962, %v1720, %v2106
    %v2251 = vsel %vm1963, %v1722, %v2107
    %v2252 = vsel %vm1964, %v1726, %v2108
    %v2253 = vsel %vm1965, %v1728, %v2109
    %v2254 = vsel %vm1966, %v1730, %v2110
    %v2255 = vsel %vm1967, %v1732, %v2111
    %v2256 = vsel %vm1968, %v1736, %v2112
    %v2257 = vsel %vm1969, %v1738, %v2113
    %v2258 = vsel %vm1970, %v1740, %v2114
    %v2259 = vsel %vm1971, %v1742, %v2115
    %v2260 = vsel %vm1972, %v1746, %v2116
    %v2261 = vsel %vm1973, %v1748, %v2117
    %v2262 = vsel %vm1974, %v1750, %v2118
    %v2263 = vsel %vm1975, %v1752, %v2119
    %v2264 = vsel %vm1976, %v1756, %v2120
    %v2265 = vsel %vm1977, %v1758, %v2121
    %v2266 = vsel %vm1978, %v1760, %v2122
    %v2267 = vsel %vm1979, %v1762, %v2123
    %v2268 = vsel %vm1980, %v1766, %v2124
    %v2269 = vsel %vm1981, %v1768, %v2125
    %v2270 = vsel %vm1982, %v1770, %v2126
    %v2271 = vsel %vm1983, %v1772, %v2127
    %v2272 = vsel %vm1984, %v1776, %v2128
    %v2273 = vsel %vm1985, %v1778, %v2129
    %v2274 = vsel %vm1986, %v1780, %v2130
    %v2275 = vsel %vm1987, %v1782, %v2131
    %v2276 = vsel %vm1988, %v1786, %v2132
    %v2277 = vsel %vm1989, %v1788, %v2133
    %v2278 = vsel %vm1990, %v1790, %v2134
    %v2279 = vsel %vm1991, %v1792, %v2135
    %v2280 = vsel %vm1992, %v1796, %v2136
    %v2281 = vsel %vm1993, %v1798, %v2137
    %v2282 = vsel %vm1994, %v1800, %v2138
    %v2283 = vsel %vm1995, %v1802, %v2139
    %v2284 = vsel %vm1996, %v1806, %v2140
    %v2285 = vsel %vm1997, %v1808, %v2141
    %v2286 = vsel %vm1998, %v1810, %v2142
    %v2287 = vsel %vm1999, %v1812, %v2143
    %v2288 = vsel %vm2000, %v1816, %v2144
    %v2289 = vsel %vm2001, %v1818, %v2145
    %v2290 = vsel %vm2002, %v1820, %v2146
    %v2291 = vsel %vm2003, %v1822, %v2147
    %v2292 = vsel %vm2004, %v1826, %v2148
    %v2293 = vsel %vm2005, %v1828, %v2149
    %v2294 = vsel %vm2006, %v1830, %v2150
    %v2295 = vsel %vm2007, %v1832, %v2151
    %v2296 = vsel %vm2008, %v1836, %v2152
    %v2297 = vsel %vm2009, %v1838, %v2153
    %v2298 = vsel %vm2010, %v1840, %v2154
    %v2299 = vsel %vm2011, %v1842, %v2155
    %v2300 = vsel %vm2012, %v1846, %v2156
    %v2301 = vsel %vm2013, %v1848, %v2157
    %v2302 = vsel %vm2014, %v1850, %v2158
    %v2303 = vsel %vm2015, %v1852, %v2159
    %v2304 = vsel %vm2016, %v1856, %v2160
    %v2305 = vsel %vm2017, %v1858, %v2161
    %v2306 = vsel %vm2018, %v1860, %v2162
    %v2307 = vsel %vm2019, %v1862, %v2163
    %v2308 = vsel %vm2020, %v1866, %v2164
    %v2309 = vsel %vm2021, %v1868, %v2165
    %v2310 = vsel %vm2022, %v1870, %v2166
    %v2311 = vsel %vm2023, %v1872, %v2167
    %v2312 = vsel %vm2024, %v1876, %v2168
    %v2313 = vsel %vm2025, %v1878, %v2169
    %v2314 = vsel %vm2026, %v1880, %v2170
    %v2315 = vsel %vm2027, %v1882, %v2171
    %v2316 = vpack.c.bf16 %v2174, %v2172
    %v2317 = vpack.c.bf16 %v2175, %v2173
    %v2318 = vpack.c.bf16 %v2178, %v2176
    %v2319 = vpack.c.bf16 %v2179, %v2177
    %v2320 = vpack.c.bf16 %v2182, %v2180
    %v2321 = vpack.c.bf16 %v2183, %v2181
    %v2322 = vpack.c.bf16 %v2186, %v2184
    %v2323 = vpack.c.bf16 %v2187, %v2185
    %v2324 = vpack.c.bf16 %v2190, %v2188
    %v2325 = vpack.c.bf16 %v2191, %v2189
    %v2326 = vpack.c.bf16 %v2194, %v2192
    %v2327 = vpack.c.bf16 %v2195, %v2193
    %v2328 = vpack.c.bf16 %v2198, %v2196
    %v2329 = vpack.c.bf16 %v2199, %v2197
    %v2330 = vpack.c.bf16 %v2202, %v2200
    %v2331 = vpack.c.bf16 %v2203, %v2201
    %v2332 = vpack.c.bf16 %v2206, %v2204
    %v2333 = vpack.c.bf16 %v2207, %v2205
    %v2334 = vpack.c.bf16 %v2210, %v2208
    %v2335 = vpack.c.bf16 %v2211, %v2209
    %v2336 = vpack.c.bf16 %v2214, %v2212
    %v2337 = vpack.c.bf16 %v2215, %v2213
    %v2338 = vpack.c.bf16 %v2218, %v2216
    %v2339 = vpack.c.bf16 %v2219, %v2217
    %v2340 = vpack.c.bf16 %v2222, %v2220
    %v2341 = vpack.c.bf16 %v2223, %v2221
    %v2342 = vpack.c.bf16 %v2226, %v2224
    %v2343 = vpack.c.bf16 %v2227, %v2225
    %v2344 = vpack.c.bf16 %v2230, %v2228
    %v2345 = vpack.c.bf16 %v2231, %v2229
    %v2346 = vpack.c.bf16 %v2234, %v2232
    %v2347 = vpack.c.bf16 %v2235, %v2233
    %v2348 = vpack.c.bf16 %v2238, %v2236
    %v2349 = vpack.c.bf16 %v2239, %v2237
    %v2350 = vpack.c.bf16 %v2242, %v2240
    %v2351 = vpack.c.bf16 %v2243, %v2241
    %v2352 = vpack.c.bf16 %v2246, %v2244
    %v2353 = vpack.c.bf16 %v2247, %v2245
    %v2354 = vpack.c.bf16 %v2250, %v2248
    %v2355 = vpack.c.bf16 %v2251, %v2249
    %v2356 = vpack.c.bf16 %v2254, %v2252
    %v2357 = vpack.c.bf16 %v2255, %v2253
    %v2358 = vpack.c.bf16 %v2258, %v2256
    %v2359 = vpack.c.bf16 %v2259, %v2257
    %v2360 = vpack.c.bf16 %v2262, %v2260
    %v2361 = vpack.c.bf16 %v2263, %v2261
    %v2362 = vpack.c.bf16 %v2266, %v2264
    %v2363 = vpack.c.bf16 %v2267, %v2265
    %v2364 = vpack.c.bf16 %v2270, %v2268
    %v2365 = vpack.c.bf16 %v2271, %v2269
    %v2366 = vpack.c.bf16 %v2274, %v2272
    %v2367 = vpack.c.bf16 %v2275, %v2273
    %v2368 = vpack.c.bf16 %v2278, %v2276
    %v2369 = vpack.c.bf16 %v2279, %v2277
    %v2370 = vpack.c.bf16 %v2282, %v2280
    %v2371 = vpack.c.bf16 %v2283, %v2281
    %v2372 = vpack.c.bf16 %v2286, %v2284
    %v2373 = vpack.c.bf16 %v2287, %v2285
    %v2374 = vpack.c.bf16 %v2290, %v2288
    %v2375 = vpack.c.bf16 %v2291, %v2289
    %v2376 = vpack.c.bf16 %v2294, %v2292
    %v2377 = vpack.c.bf16 %v2295, %v2293
    %v2378 = vpack.c.bf16 %v2298, %v2296
    %v2379 = vpack.c.bf16 %v2299, %v2297
    %v2380 = vpack.c.bf16 %v2302, %v2300
    %v2381 = vpack.c.bf16 %v2303, %v2301
    %v2382 = vpack.c.bf16 %v2306, %v2304
    %v2383 = vpack.c.bf16 %v2307, %v2305
    %v2384 = vpack.c.bf16 %v2310, %v2308
    %v2385 = vpack.c.bf16 %v2311, %v2309
    %v2386 = vpack.c.bf16 %v2314, %v2312
    %v2387 = vpack.c.bf16 %v2315, %v2313
    %v2388 = vld [vmem:[%s3] sm:$0xf]
    %v2389 = vld [vmem:[%s3 + $0x4] sm:$0xf]
    %v2390 = vld [vmem:[%s3 + $0x8] sm:$0xf]
    %v2391 = vld [vmem:[%s3 + $0xc] sm:$0xf]
    %v2392 = vld [vmem:[%s3 + $0x10] sm:$0xf]
    %v2393 = vld [vmem:[%s3 + $0x14] sm:$0xf]
    %v2394 = vld [vmem:[%s3 + $0x18] sm:$0xf]
    %v2395 = vld [vmem:[%s3 + $0x1c] sm:$0xf]
    %v2396 = vld [vmem:[%s3 + $0x20] sm:$0xf]
    %v2397 = vld [vmem:[%s3 + $0x24] sm:$0xf]
    %v2398 = vld [vmem:[%s3 + $0x28] sm:$0xf]
    %v2399 = vld [vmem:[%s3 + $0x2c] sm:$0xf]
    %v2400 = vld [vmem:[%s3 + $0x30] sm:$0xf]
    %v2401 = vld [vmem:[%s3 + $0x34] sm:$0xf]
    %v2402 = vld [vmem:[%s3 + $0x38] sm:$0xf]
    %v2403 = vld [vmem:[%s3 + $0x3c] sm:$0xf]
    %v2404 = vld [vmem:[%s3 + $0x40] sm:$0xf]
    %v2405 = vld [vmem:[%s3 + $0x44] sm:$0xf]
    %v2406 = vld [vmem:[%s4] sm:$0x1]
    %v2408 = vlaneseq
    %v2409 = vshrl.u32 %v2408, 7
    %v2410 = vsub.s32 0, %v2409
    %v2411 = vrot.slane %v2406, %v2410
    %v2431 = vunpack.c.l.b16 %v2388
    %v2432 = vunpack.c.l.b16 %v2389
    %v2433 = vunpack.c.l.b16 %v2390
    %v2434 = vunpack.c.l.b16 %v2391
    %v2435 = vunpack.c.l.b16 %v2392
    %v2436 = vunpack.c.l.b16 %v2393
    %v2437 = vunpack.c.l.b16 %v2394
    %v2438 = vunpack.c.l.b16 %v2395
    %v2439 = vunpack.c.l.b16 %v2396
    %v2440 = vunpack.c.l.b16 %v2397
    %v2441 = vunpack.c.l.b16 %v2398
    %v2442 = vunpack.c.l.b16 %v2399
    %v2443 = vunpack.c.l.b16 %v2400
    %v2444 = vunpack.c.l.b16 %v2401
    %v2445 = vunpack.c.l.b16 %v2402
    %v2446 = vunpack.c.l.b16 %v2403
    %v2447 = vunpack.c.l.b16 %v2404
    %v2448 = vunpack.c.l.b16 %v2405
    %v2449 = vpack.c.b16 %v2432, %v2431
    %v2450 = vpack.c.b16 %v2434, %v2433
    %v2451 = vpack.c.b16 %v2436, %v2435
    %v2452 = vpack.c.b16 %v2438, %v2437
    %v2453 = vpack.c.b16 %v2440, %v2439
    %v2454 = vpack.c.b16 %v2442, %v2441
    %v2455 = vpack.c.b16 %v2444, %v2443
    %v2456 = vpack.c.b16 %v2446, %v2445
    %v2457 = vpack.c.b16 %v2448, %v2447
    %vm2467 = vcmask 130048
    %v2469 = vsel %vm2467, %v2317, 0
    %v2472 = vsel %vm2467, %v2319, 0
    %v2475 = vsel %vm2467, %v2321, 0
    %v2478 = vsel %vm2467, %v2323, 0
    %v2481 = vsel %vm2467, %v2325, 0
    %v2484 = vsel %vm2467, %v2327, 0
    %v2487 = vsel %vm2467, %v2329, 0
    %v2490 = vsel %vm2467, %v2331, 0
    %v2493 = vsel %vm2467, %v2333, 0
    %v2496 = vsel %vm2467, %v2335, 0
    %v2499 = vsel %vm2467, %v2337, 0
    %v2502 = vsel %vm2467, %v2339, 0
    %v2505 = vsel %vm2467, %v2341, 0
    %v2508 = vsel %vm2467, %v2343, 0
    %v2511 = vsel %vm2467, %v2345, 0
    %v2514 = vsel %vm2467, %v2347, 0
    %v2517 = vsel %vm2467, %v2349, 0
    %v2520 = vsel %vm2467, %v2351, 0
    %v2523 = vsel %vm2467, %v2353, 0
    %v2526 = vsel %vm2467, %v2355, 0
    %v2529 = vsel %vm2467, %v2357, 0
    %v2532 = vsel %vm2467, %v2359, 0
    %v2535 = vsel %vm2467, %v2361, 0
    %v2538 = vsel %vm2467, %v2363, 0
    %v2541 = vsel %vm2467, %v2365, 0
    %v2544 = vsel %vm2467, %v2367, 0
    %v2547 = vsel %vm2467, %v2369, 0
    %v2550 = vsel %vm2467, %v2371, 0
    %v2553 = vsel %vm2467, %v2373, 0
    %v2556 = vsel %vm2467, %v2375, 0
    %v2559 = vsel %vm2467, %v2377, 0
    %v2562 = vsel %vm2467, %v2379, 0
    %v2565 = vsel %vm2467, %v2381, 0
    %v2568 = vsel %vm2467, %v2383, 0
    %v2571 = vsel %vm2467, %v2385, 0
    %v2574 = vsel %vm2467, %v2387, 0
    %2576 = vmatprep.subr.bf16.mxu0 0
    %2577 = vmatpush1.bf16.msra.mxu0 %v2456
    %2578 = vmatprep.subr.bf16.mxu0 0
    %2579 = vmatpush1.bf16.msra.mxu0 %v2455
    %2580 = vmatprep.subr.bf16.mxu0 0
    %2581 = vmatpush1.bf16.msra.mxu0 %v2454
    %2582 = vmatprep.subr.bf16.mxu0 0
    %2583 = vmatpush1.bf16.msra.mxu0 %v2453
    %2584 = vmatprep.subr.bf16.mxu0 0
    %2585 = vmatpush1.bf16.msra.mxu0 %v2452
    %2586 = vmatprep.subr.bf16.mxu0 0
    %2587 = vmatpush1.bf16.msra.mxu0 %v2451
    %2588 = vmatprep.subr.bf16.mxu0 0
    %2589 = vmatpush1.bf16.msra.mxu0 %v2450
    %2590 = vmatprep.subr.bf16.mxu0 0
    %2591 = vmatpush1.bf16.msra.mxu0 %v2449
    %2592 = vmatprep.subr.bf16.mxu0 0
    %2593 = vmatpush2.bf16.msra.mxu0 0
    %2594 = vmatprep.subr.bf16.mxu0 0
    %2595 = vmatpush2.bf16.msra.mxu0 0
    %2596 = vmatprep.subr.bf16.mxu0 0
    %2597 = vmatpush2.bf16.msra.mxu0 0
    %2598 = vmatprep.subr.bf16.mxu0 0
    %2599 = vmatpush2.bf16.msra.mxu0 0
    %2600 = vmatprep.subr.bf16.mxu0 0
    %2601 = vmatpush2.bf16.msra.mxu0 0
    %2602 = vmatprep.subr.bf16.mxu0 0
    %2603 = vmatpush2.bf16.msra.mxu0 0
    %2604 = vmatprep.subr.bf16.mxu0 0
    %2605 = vmatpush2.bf16.msra.mxu0 0
    %2606 = vmatprep.subr.bf16.mxu0 0
    %2607 = vmatpush2.bf16.msra.mxu0 %v2457
    %2608 = vmatprep.mubr.bf16.mxu0 %v2469
    %2609 = vmatmul.mubr.bf16.gmra.mxu0 %v2316
    %v2610 = vpop.f32.mrf.mxu0
    %v2611 = vadd.f32 %v2411, %v2610
    %v2612 = vpop.f32.mrf.mxu0
    %v2613 = vpop.f32.mrf.mxu0
    %v2614 = vadd.f32 %v2411, %v2613
    %v2615 = vpop.f32.mrf.mxu0
    %2616 = vmatprep.mubr.bf16.mxu0 %v2472
    %2617 = vmatmul.mubr.bf16.gmra.mxu0 %v2318
    %v2618 = vpop.f32.mrf.mxu0
    %v2619 = vadd.f32 %v2411, %v2618
    %v2620 = vpop.f32.mrf.mxu0
    %v2621 = vpop.f32.mrf.mxu0
    %v2622 = vadd.f32 %v2411, %v2621
    %v2623 = vpop.f32.mrf.mxu0
    %2624 = vmatprep.mubr.bf16.mxu0 %v2475
    %2625 = vmatmul.mubr.bf16.gmra.mxu0 %v2320
    %v2626 = vpop.f32.mrf.mxu0
    %v2627 = vadd.f32 %v2411, %v2626
    %v2628 = vpop.f32.mrf.mxu0
    %v2629 = vpop.f32.mrf.mxu0
    %v2630 = vadd.f32 %v2411, %v2629
    %v2631 = vpop.f32.mrf.mxu0
    %2632 = vmatprep.mubr.bf16.mxu0 %v2478
    %2633 = vmatmul.mubr.bf16.gmra.mxu0 %v2322
    %v2634 = vpop.f32.mrf.mxu0
    %v2635 = vadd.f32 %v2411, %v2634
    %v2636 = vpop.f32.mrf.mxu0
    %v2637 = vpop.f32.mrf.mxu0
    %v2638 = vadd.f32 %v2411, %v2637
    %v2639 = vpop.f32.mrf.mxu0
    %2640 = vmatprep.mubr.bf16.mxu0 %v2481
    %2641 = vmatmul.mubr.bf16.gmra.mxu0 %v2324
    %v2642 = vpop.f32.mrf.mxu0
    %v2643 = vadd.f32 %v2411, %v2642
    %v2644 = vpop.f32.mrf.mxu0
    %v2645 = vpop.f32.mrf.mxu0
    %v2646 = vadd.f32 %v2411, %v2645
    %v2647 = vpop.f32.mrf.mxu0
    %2648 = vmatprep.mubr.bf16.mxu0 %v2484
    %2649 = vmatmul.mubr.bf16.gmra.mxu0 %v2326
    %v2650 = vpop.f32.mrf.mxu0
    %v2651 = vadd.f32 %v2411, %v2650
    %v2652 = vpop.f32.mrf.mxu0
    %v2653 = vpop.f32.mrf.mxu0
    %v2654 = vadd.f32 %v2411, %v2653
    %v2655 = vpop.f32.mrf.mxu0
    %2656 = vmatprep.mubr.bf16.mxu0 %v2487
    %2657 = vmatmul.mubr.bf16.gmra.mxu0 %v2328
    %v2658 = vpop.f32.mrf.mxu0
    %v2659 = vadd.f32 %v2411, %v2658
    %v2660 = vpop.f32.mrf.mxu0
    %v2661 = vpop.f32.mrf.mxu0
    %v2662 = vadd.f32 %v2411, %v2661
    %v2663 = vpop.f32.mrf.mxu0
    %2664 = vmatprep.mubr.bf16.mxu0 %v2490
    %2665 = vmatmul.mubr.bf16.gmra.mxu0 %v2330
    %v2666 = vpop.f32.mrf.mxu0
    %v2667 = vadd.f32 %v2411, %v2666
    %v2668 = vpop.f32.mrf.mxu0
    %v2669 = vpop.f32.mrf.mxu0
    %v2670 = vadd.f32 %v2411, %v2669
    %v2671 = vpop.f32.mrf.mxu0
    %2672 = vmatprep.mubr.bf16.mxu0 %v2493
    %2673 = vmatmul.mubr.bf16.gmra.mxu0 %v2332
    %v2674 = vpop.f32.mrf.mxu0
    %v2675 = vadd.f32 %v2411, %v2674
    %v2676 = vpop.f32.mrf.mxu0
    %v2677 = vpop.f32.mrf.mxu0
    %v2678 = vadd.f32 %v2411, %v2677
    %v2679 = vpop.f32.mrf.mxu0
    %2680 = vmatprep.mubr.bf16.mxu0 %v2496
    %2681 = vmatmul.mubr.bf16.gmra.mxu0 %v2334
    %v2682 = vpop.f32.mrf.mxu0
    %v2683 = vadd.f32 %v2411, %v2682
    %v2684 = vpop.f32.mrf.mxu0
    %v2685 = vpop.f32.mrf.mxu0
    %v2686 = vadd.f32 %v2411, %v2685
    %v2687 = vpop.f32.mrf.mxu0
    %2688 = vmatprep.mubr.bf16.mxu0 %v2499
    %2689 = vmatmul.mubr.bf16.gmra.mxu0 %v2336
    %v2690 = vpop.f32.mrf.mxu0
    %v2691 = vadd.f32 %v2411, %v2690
    %v2692 = vpop.f32.mrf.mxu0
    %v2693 = vpop.f32.mrf.mxu0
    %v2694 = vadd.f32 %v2411, %v2693
    %v2695 = vpop.f32.mrf.mxu0
    %2696 = vmatprep.mubr.bf16.mxu0 %v2502
    %2697 = vmatmul.mubr.bf16.gmra.mxu0 %v2338
    %v2698 = vpop.f32.mrf.mxu0
    %v2699 = vadd.f32 %v2411, %v2698
    %v2700 = vpop.f32.mrf.mxu0
    %v2701 = vpop.f32.mrf.mxu0
    %v2702 = vadd.f32 %v2411, %v2701
    %v2703 = vpop.f32.mrf.mxu0
    %2704 = vmatprep.mubr.bf16.mxu0 %v2505
    %2705 = vmatmul.mubr.bf16.gmra.mxu0 %v2340
    %v2706 = vpop.f32.mrf.mxu0
    %v2707 = vadd.f32 %v2411, %v2706
    %v2708 = vpop.f32.mrf.mxu0
    %v2709 = vpop.f32.mrf.mxu0
    %v2710 = vadd.f32 %v2411, %v2709
    %v2711 = vpop.f32.mrf.mxu0
    %2712 = vmatprep.mubr.bf16.mxu0 %v2508
    %2713 = vmatmul.mubr.bf16.gmra.mxu0 %v2342
    %v2714 = vpop.f32.mrf.mxu0
    %v2715 = vadd.f32 %v2411, %v2714
    %v2716 = vpop.f32.mrf.mxu0
    %v2717 = vpop.f32.mrf.mxu0
    %v2718 = vadd.f32 %v2411, %v2717
    %v2719 = vpop.f32.mrf.mxu0
    %2720 = vmatprep.mubr.bf16.mxu0 %v2511
    %2721 = vmatmul.mubr.bf16.gmra.mxu0 %v2344
    %v2722 = vpop.f32.mrf.mxu0
    %v2723 = vadd.f32 %v2411, %v2722
    %v2724 = vpop.f32.mrf.mxu0
    %v2725 = vpop.f32.mrf.mxu0
    %v2726 = vadd.f32 %v2411, %v2725
    %v2727 = vpop.f32.mrf.mxu0
    %2728 = vmatprep.mubr.bf16.mxu0 %v2514
    %2729 = vmatmul.mubr.bf16.gmra.mxu0 %v2346
    %v2730 = vpop.f32.mrf.mxu0
    %v2731 = vadd.f32 %v2411, %v2730
    %v2732 = vpop.f32.mrf.mxu0
    %v2733 = vpop.f32.mrf.mxu0
    %v2734 = vadd.f32 %v2411, %v2733
    %v2735 = vpop.f32.mrf.mxu0
    %2736 = vmatprep.mubr.bf16.mxu0 %v2517
    %2737 = vmatmul.mubr.bf16.gmra.mxu0 %v2348
    %v2738 = vpop.f32.mrf.mxu0
    %v2739 = vadd.f32 %v2411, %v2738
    %v2740 = vpop.f32.mrf.mxu0
    %v2741 = vpop.f32.mrf.mxu0
    %v2742 = vadd.f32 %v2411, %v2741
    %v2743 = vpop.f32.mrf.mxu0
    %2744 = vmatprep.mubr.bf16.mxu0 %v2520
    %2745 = vmatmul.mubr.bf16.gmra.mxu0 %v2350
    %v2746 = vpop.f32.mrf.mxu0
    %v2747 = vadd.f32 %v2411, %v2746
    %v2748 = vpop.f32.mrf.mxu0
    %v2749 = vpop.f32.mrf.mxu0
    %v2750 = vadd.f32 %v2411, %v2749
    %v2751 = vpop.f32.mrf.mxu0
    %2752 = vmatprep.mubr.bf16.mxu0 %v2523
    %2753 = vmatmul.mubr.bf16.gmra.mxu0 %v2352
    %v2754 = vpop.f32.mrf.mxu0
    %v2755 = vadd.f32 %v2411, %v2754
    %v2756 = vpop.f32.mrf.mxu0
    %v2757 = vpop.f32.mrf.mxu0
    %v2758 = vadd.f32 %v2411, %v2757
    %v2759 = vpop.f32.mrf.mxu0
    %2760 = vmatprep.mubr.bf16.mxu0 %v2526
    %2761 = vmatmul.mubr.bf16.gmra.mxu0 %v2354
    %v2762 = vpop.f32.mrf.mxu0
    %v2763 = vadd.f32 %v2411, %v2762
    %v2764 = vpop.f32.mrf.mxu0
    %v2765 = vpop.f32.mrf.mxu0
    %v2766 = vadd.f32 %v2411, %v2765
    %v2767 = vpop.f32.mrf.mxu0
    %2768 = vmatprep.mubr.bf16.mxu0 %v2529
    %2769 = vmatmul.mubr.bf16.gmra.mxu0 %v2356
    %v2770 = vpop.f32.mrf.mxu0
    %v2771 = vadd.f32 %v2411, %v2770
    %v2772 = vpop.f32.mrf.mxu0
    %v2773 = vpop.f32.mrf.mxu0
    %v2774 = vadd.f32 %v2411, %v2773
    %v2775 = vpop.f32.mrf.mxu0
    %2776 = vmatprep.mubr.bf16.mxu0 %v2532
    %2777 = vmatmul.mubr.bf16.gmra.mxu0 %v2358
    %v2778 = vpop.f32.mrf.mxu0
    %v2779 = vadd.f32 %v2411, %v2778
    %v2780 = vpop.f32.mrf.mxu0
    %v2781 = vpop.f32.mrf.mxu0
    %v2782 = vadd.f32 %v2411, %v2781
    %v2783 = vpop.f32.mrf.mxu0
    %2784 = vmatprep.mubr.bf16.mxu0 %v2535
    %2785 = vmatmul.mubr.bf16.gmra.mxu0 %v2360
    %v2786 = vpop.f32.mrf.mxu0
    %v2787 = vadd.f32 %v2411, %v2786
    %v2788 = vpop.f32.mrf.mxu0
    %v2789 = vpop.f32.mrf.mxu0
    %v2790 = vadd.f32 %v2411, %v2789
    %v2791 = vpop.f32.mrf.mxu0
    %2792 = vmatprep.mubr.bf16.mxu0 %v2538
    %2793 = vmatmul.mubr.bf16.gmra.mxu0 %v2362
    %v2794 = vpop.f32.mrf.mxu0
    %v2795 = vadd.f32 %v2411, %v2794
    %v2796 = vpop.f32.mrf.mxu0
    %v2797 = vpop.f32.mrf.mxu0
    %v2798 = vadd.f32 %v2411, %v2797
    %v2799 = vpop.f32.mrf.mxu0
    %2800 = vmatprep.mubr.bf16.mxu0 %v2541
    %2801 = vmatmul.mubr.bf16.gmra.mxu0 %v2364
    %v2802 = vpop.f32.mrf.mxu0
    %v2803 = vadd.f32 %v2411, %v2802
    %v2804 = vpop.f32.mrf.mxu0
    %v2805 = vpop.f32.mrf.mxu0
    %v2806 = vadd.f32 %v2411, %v2805
    %v2807 = vpop.f32.mrf.mxu0
    %2808 = vmatprep.mubr.bf16.mxu0 %v2544
    %2809 = vmatmul.mubr.bf16.gmra.mxu0 %v2366
    %v2810 = vpop.f32.mrf.mxu0
    %v2811 = vadd.f32 %v2411, %v2810
    %v2812 = vpop.f32.mrf.mxu0
    %v2813 = vpop.f32.mrf.mxu0
    %v2814 = vadd.f32 %v2411, %v2813
    %v2815 = vpop.f32.mrf.mxu0
    %2816 = vmatprep.mubr.bf16.mxu0 %v2547
    %2817 = vmatmul.mubr.bf16.gmra.mxu0 %v2368
    %v2818 = vpop.f32.mrf.mxu0
    %v2819 = vadd.f32 %v2411, %v2818
    %v2820 = vpop.f32.mrf.mxu0
    %v2821 = vpop.f32.mrf.mxu0
    %v2822 = vadd.f32 %v2411, %v2821
    %v2823 = vpop.f32.mrf.mxu0
    %2824 = vmatprep.mubr.bf16.mxu0 %v2550
    %2825 = vmatmul.mubr.bf16.gmra.mxu0 %v2370
    %v2826 = vpop.f32.mrf.mxu0
    %v2827 = vadd.f32 %v2411, %v2826
    %v2828 = vpop.f32.mrf.mxu0
    %v2829 = vpop.f32.mrf.mxu0
    %v2830 = vadd.f32 %v2411, %v2829
    %v2831 = vpop.f32.mrf.mxu0
    %2832 = vmatprep.mubr.bf16.mxu0 %v2553
    %2833 = vmatmul.mubr.bf16.gmra.mxu0 %v2372
    %v2834 = vpop.f32.mrf.mxu0
    %v2835 = vadd.f32 %v2411, %v2834
    %v2836 = vpop.f32.mrf.mxu0
    %v2837 = vpop.f32.mrf.mxu0
    %v2838 = vadd.f32 %v2411, %v2837
    %v2839 = vpop.f32.mrf.mxu0
    %2840 = vmatprep.mubr.bf16.mxu0 %v2556
    %2841 = vmatmul.mubr.bf16.gmra.mxu0 %v2374
    %v2842 = vpop.f32.mrf.mxu0
    %v2843 = vadd.f32 %v2411, %v2842
    %v2844 = vpop.f32.mrf.mxu0
    %v2845 = vpop.f32.mrf.mxu0
    %v2846 = vadd.f32 %v2411, %v2845
    %v2847 = vpop.f32.mrf.mxu0
    %2848 = vmatprep.mubr.bf16.mxu0 %v2559
    %2849 = vmatmul.mubr.bf16.gmra.mxu0 %v2376
    %v2850 = vpop.f32.mrf.mxu0
    %v2851 = vadd.f32 %v2411, %v2850
    %v2852 = vpop.f32.mrf.mxu0
    %v2853 = vpop.f32.mrf.mxu0
    %v2854 = vadd.f32 %v2411, %v2853
    %v2855 = vpop.f32.mrf.mxu0
    %2856 = vmatprep.mubr.bf16.mxu0 %v2562
    %2857 = vmatmul.mubr.bf16.gmra.mxu0 %v2378
    %v2858 = vpop.f32.mrf.mxu0
    %v2859 = vadd.f32 %v2411, %v2858
    %v2860 = vpop.f32.mrf.mxu0
    %v2861 = vpop.f32.mrf.mxu0
    %v2862 = vadd.f32 %v2411, %v2861
    %v2863 = vpop.f32.mrf.mxu0
    %2864 = vmatprep.mubr.bf16.mxu0 %v2565
    %2865 = vmatmul.mubr.bf16.gmra.mxu0 %v2380
    %v2866 = vpop.f32.mrf.mxu0
    %v2867 = vadd.f32 %v2411, %v2866
    %v2868 = vpop.f32.mrf.mxu0
    %v2869 = vpop.f32.mrf.mxu0
    %v2870 = vadd.f32 %v2411, %v2869
    %v2871 = vpop.f32.mrf.mxu0
    %2872 = vmatprep.mubr.bf16.mxu0 %v2568
    %2873 = vmatmul.mubr.bf16.gmra.mxu0 %v2382
    %v2874 = vpop.f32.mrf.mxu0
    %v2875 = vadd.f32 %v2411, %v2874
    %v2876 = vpop.f32.mrf.mxu0
    %v2877 = vpop.f32.mrf.mxu0
    %v2878 = vadd.f32 %v2411, %v2877
    %v2879 = vpop.f32.mrf.mxu0
    %2880 = vmatprep.mubr.bf16.mxu0 %v2571
    %2881 = vmatmul.mubr.bf16.gmra.mxu0 %v2384
    %v2882 = vpop.f32.mrf.mxu0
    %v2883 = vadd.f32 %v2411, %v2882
    %v2884 = vpop.f32.mrf.mxu0
    %v2885 = vpop.f32.mrf.mxu0
    %v2886 = vadd.f32 %v2411, %v2885
    %v2887 = vpop.f32.mrf.mxu0
    %2888 = vmatprep.mubr.bf16.mxu0 %v2574
    %2889 = vmatmul.mubr.bf16.gmra.mxu0 %v2386
    %v2890 = vpop.f32.mrf.mxu0
    %v2891 = vadd.f32 %v2411, %v2890
    %v2892 = vpop.f32.mrf.mxu0
    %v2893 = vpop.f32.mrf.mxu0
    %v2894 = vadd.f32 %v2411, %v2893
    %v2895 = vpop.f32.mrf.mxu0
    %2896 = vdwg.mxu0
    %vm2897 = vcmp.gt.f32.partialorder %v2611, 0.0
    %vm2898 = vcmp.gt.f32.partialorder %v2614, 0.0
    %vm2899 = vcmp.gt.f32.partialorder %v2619, 0.0
    %vm2900 = vcmp.gt.f32.partialorder %v2622, 0.0
    %vm2901 = vcmp.gt.f32.partialorder %v2627, 0.0
    %vm2902 = vcmp.gt.f32.partialorder %v2630, 0.0
    %vm2903 = vcmp.gt.f32.partialorder %v2635, 0.0
    %vm2904 = vcmp.gt.f32.partialorder %v2638, 0.0
    %vm2905 = vcmp.gt.f32.partialorder %v2643, 0.0
    %vm2906 = vcmp.gt.f32.partialorder %v2646, 0.0
    %vm2907 = vcmp.gt.f32.partialorder %v2651, 0.0
    %vm2908 = vcmp.gt.f32.partialorder %v2654, 0.0
    %vm2909 = vcmp.gt.f32.partialorder %v2659, 0.0
    %vm2910 = vcmp.gt.f32.partialorder %v2662, 0.0
    %vm2911 = vcmp.gt.f32.partialorder %v2667, 0.0
    %vm2912 = vcmp.gt.f32.partialorder %v2670, 0.0
    %vm2913 = vcmp.gt.f32.partialorder %v2675, 0.0
    %vm2914 = vcmp.gt.f32.partialorder %v2678, 0.0
    %vm2915 = vcmp.gt.f32.partialorder %v2683, 0.0
    %vm2916 = vcmp.gt.f32.partialorder %v2686, 0.0
    %vm2917 = vcmp.gt.f32.partialorder %v2691, 0.0
    %vm2918 = vcmp.gt.f32.partialorder %v2694, 0.0
    %vm2919 = vcmp.gt.f32.partialorder %v2699, 0.0
    %vm2920 = vcmp.gt.f32.partialorder %v2702, 0.0
    %vm2921 = vcmp.gt.f32.partialorder %v2707, 0.0
    %vm2922 = vcmp.gt.f32.partialorder %v2710, 0.0
    %vm2923 = vcmp.gt.f32.partialorder %v2715, 0.0
    %vm2924 = vcmp.gt.f32.partialorder %v2718, 0.0
    %vm2925 = vcmp.gt.f32.partialorder %v2723, 0.0
    %vm2926 = vcmp.gt.f32.partialorder %v2726, 0.0
    %vm2927 = vcmp.gt.f32.partialorder %v2731, 0.0
    %vm2928 = vcmp.gt.f32.partialorder %v2734, 0.0
    %vm2929 = vcmp.gt.f32.partialorder %v2739, 0.0
    %vm2930 = vcmp.gt.f32.partialorder %v2742, 0.0
    %vm2931 = vcmp.gt.f32.partialorder %v2747, 0.0
    %vm2932 = vcmp.gt.f32.partialorder %v2750, 0.0
    %vm2933 = vcmp.gt.f32.partialorder %v2755, 0.0
    %vm2934 = vcmp.gt.f32.partialorder %v2758, 0.0
    %vm2935 = vcmp.gt.f32.partialorder %v2763, 0.0
    %vm2936 = vcmp.gt.f32.partialorder %v2766, 0.0
    %vm2937 = vcmp.gt.f32.partialorder %v2771, 0.0
    %vm2938 = vcmp.gt.f32.partialorder %v2774, 0.0
    %vm2939 = vcmp.gt.f32.partialorder %v2779, 0.0
    %vm2940 = vcmp.gt.f32.partialorder %v2782, 0.0
    %vm2941 = vcmp.gt.f32.partialorder %v2787, 0.0
    %vm2942 = vcmp.gt.f32.partialorder %v2790, 0.0
    %vm2943 = vcmp.gt.f32.partialorder %v2795, 0.0
    %vm2944 = vcmp.gt.f32.partialorder %v2798, 0.0
    %vm2945 = vcmp.gt.f32.partialorder %v2803, 0.0
    %vm2946 = vcmp.gt.f32.partialorder %v2806, 0.0
    %vm2947 = vcmp.gt.f32.partialorder %v2811, 0.0
    %vm2948 = vcmp.gt.f32.partialorder %v2814, 0.0
    %vm2949 = vcmp.gt.f32.partialorder %v2819, 0.0
    %vm2950 = vcmp.gt.f32.partialorder %v2822, 0.0
    %vm2951 = vcmp.gt.f32.partialorder %v2827, 0.0
    %vm2952 = vcmp.gt.f32.partialorder %v2830, 0.0
    %vm2953 = vcmp.gt.f32.partialorder %v2835, 0.0
    %vm2954 = vcmp.gt.f32.partialorder %v2838, 0.0
    %vm2955 = vcmp.gt.f32.partialorder %v2843, 0.0
    %vm2956 = vcmp.gt.f32.partialorder %v2846, 0.0
    %vm2957 = vcmp.gt.f32.partialorder %v2851, 0.0
    %vm2958 = vcmp.gt.f32.partialorder %v2854, 0.0
    %vm2959 = vcmp.gt.f32.partialorder %v2859, 0.0
    %vm2960 = vcmp.gt.f32.partialorder %v2862, 0.0
    %vm2961 = vcmp.gt.f32.partialorder %v2867, 0.0
    %vm2962 = vcmp.gt.f32.partialorder %v2870, 0.0
    %vm2963 = vcmp.gt.f32.partialorder %v2875, 0.0
    %vm2964 = vcmp.gt.f32.partialorder %v2878, 0.0
    %vm2965 = vcmp.gt.f32.partialorder %v2883, 0.0
    %vm2966 = vcmp.gt.f32.partialorder %v2886, 0.0
    %vm2967 = vcmp.gt.f32.partialorder %v2891, 0.0
    %vm2968 = vcmp.gt.f32.partialorder %v2894, 0.0
    %v2969 = vmul.f32 %v2611, 0.01
    %v2970 = vmul.f32 %v2614, 0.01
    %v2971 = vmul.f32 %v2619, 0.01
    %v2972 = vmul.f32 %v2622, 0.01
    %v2973 = vmul.f32 %v2627, 0.01
    %v2974 = vmul.f32 %v2630, 0.01
    %v2975 = vmul.f32 %v2635, 0.01
    %v2976 = vmul.f32 %v2638, 0.01
    %v2977 = vmul.f32 %v2643, 0.01
    %v2978 = vmul.f32 %v2646, 0.01
    %v2979 = vmul.f32 %v2651, 0.01
    %v2980 = vmul.f32 %v2654, 0.01
    %v2981 = vmul.f32 %v2659, 0.01
    %v2982 = vmul.f32 %v2662, 0.01
    %v2983 = vmul.f32 %v2667, 0.01
    %v2984 = vmul.f32 %v2670, 0.01
    %v2985 = vmul.f32 %v2675, 0.01
    %v2986 = vmul.f32 %v2678, 0.01
    %v2987 = vmul.f32 %v2683, 0.01
    %v2988 = vmul.f32 %v2686, 0.01
    %v2989 = vmul.f32 %v2691, 0.01
    %v2990 = vmul.f32 %v2694, 0.01
    %v2991 = vmul.f32 %v2699, 0.01
    %v2992 = vmul.f32 %v2702, 0.01
    %v2993 = vmul.f32 %v2707, 0.01
    %v2994 = vmul.f32 %v2710, 0.01
    %v2995 = vmul.f32 %v2715, 0.01
    %v2996 = vmul.f32 %v2718, 0.01
    %v2997 = vmul.f32 %v2723, 0.01
    %v2998 = vmul.f32 %v2726, 0.01
    %v2999 = vmul.f32 %v2731, 0.01
    %v3000 = vmul.f32 %v2734, 0.01
    %v3001 = vmul.f32 %v2739, 0.01
    %v3002 = vmul.f32 %v2742, 0.01
    %v3003 = vmul.f32 %v2747, 0.01
    %v3004 = vmul.f32 %v2750, 0.01
    %v3005 = vmul.f32 %v2755, 0.01
    %v3006 = vmul.f32 %v2758, 0.01
    %v3007 = vmul.f32 %v2763, 0.01
    %v3008 = vmul.f32 %v2766, 0.01
    %v3009 = vmul.f32 %v2771, 0.01
    %v3010 = vmul.f32 %v2774, 0.01
    %v3011 = vmul.f32 %v2779, 0.01
    %v3012 = vmul.f32 %v2782, 0.01
    %v3013 = vmul.f32 %v2787, 0.01
    %v3014 = vmul.f32 %v2790, 0.01
    %v3015 = vmul.f32 %v2795, 0.01
    %v3016 = vmul.f32 %v2798, 0.01
    %v3017 = vmul.f32 %v2803, 0.01
    %v3018 = vmul.f32 %v2806, 0.01
    %v3019 = vmul.f32 %v2811, 0.01
    %v3020 = vmul.f32 %v2814, 0.01
    %v3021 = vmul.f32 %v2819, 0.01
    %v3022 = vmul.f32 %v2822, 0.01
    %v3023 = vmul.f32 %v2827, 0.01
    %v3024 = vmul.f32 %v2830, 0.01
    %v3025 = vmul.f32 %v2835, 0.01
    %v3026 = vmul.f32 %v2838, 0.01
    %v3027 = vmul.f32 %v2843, 0.01
    %v3028 = vmul.f32 %v2846, 0.01
    %v3029 = vmul.f32 %v2851, 0.01
    %v3030 = vmul.f32 %v2854, 0.01
    %v3031 = vmul.f32 %v2859, 0.01
    %v3032 = vmul.f32 %v2862, 0.01
    %v3033 = vmul.f32 %v2867, 0.01
    %v3034 = vmul.f32 %v2870, 0.01
    %v3035 = vmul.f32 %v2875, 0.01
    %v3036 = vmul.f32 %v2878, 0.01
    %v3037 = vmul.f32 %v2883, 0.01
    %v3038 = vmul.f32 %v2886, 0.01
    %v3039 = vmul.f32 %v2891, 0.01
    %v3040 = vmul.f32 %v2894, 0.01
    %v3041 = vsel %vm2897, %v2611, %v2969
    %v3042 = vsel %vm2898, %v2614, %v2970
    %v3043 = vsel %vm2899, %v2619, %v2971
    %v3044 = vsel %vm2900, %v2622, %v2972
    %v3045 = vsel %vm2901, %v2627, %v2973
    %v3046 = vsel %vm2902, %v2630, %v2974
    %v3047 = vsel %vm2903, %v2635, %v2975
    %v3048 = vsel %vm2904, %v2638, %v2976
    %v3049 = vsel %vm2905, %v2643, %v2977
    %v3050 = vsel %vm2906, %v2646, %v2978
    %v3051 = vsel %vm2907, %v2651, %v2979
    %v3052 = vsel %vm2908, %v2654, %v2980
    %v3053 = vsel %vm2909, %v2659, %v2981
    %v3054 = vsel %vm2910, %v2662, %v2982
    %v3055 = vsel %vm2911, %v2667, %v2983
    %v3056 = vsel %vm2912, %v2670, %v2984
    %v3057 = vsel %vm2913, %v2675, %v2985
    %v3058 = vsel %vm2914, %v2678, %v2986
    %v3059 = vsel %vm2915, %v2683, %v2987
    %v3060 = vsel %vm2916, %v2686, %v2988
    %v3061 = vsel %vm2917, %v2691, %v2989
    %v3062 = vsel %vm2918, %v2694, %v2990
    %v3063 = vsel %vm2919, %v2699, %v2991
    %v3064 = vsel %vm2920, %v2702, %v2992
    %v3065 = vsel %vm2921, %v2707, %v2993
    %v3066 = vsel %vm2922, %v2710, %v2994
    %v3067 = vsel %vm2923, %v2715, %v2995
    %v3068 = vsel %vm2924, %v2718, %v2996
    %v3069 = vsel %vm2925, %v2723, %v2997
    %v3070 = vsel %vm2926, %v2726, %v2998
    %v3071 = vsel %vm2927, %v2731, %v2999
    %v3072 = vsel %vm2928, %v2734, %v3000
    %v3073 = vsel %vm2929, %v2739, %v3001
    %v3074 = vsel %vm2930, %v2742, %v3002
    %v3075 = vsel %vm2931, %v2747, %v3003
    %v3076 = vsel %vm2932, %v2750, %v3004
    %v3077 = vsel %vm2933, %v2755, %v3005
    %v3078 = vsel %vm2934, %v2758, %v3006
    %v3079 = vsel %vm2935, %v2763, %v3007
    %v3080 = vsel %vm2936, %v2766, %v3008
    %v3081 = vsel %vm2937, %v2771, %v3009
    %v3082 = vsel %vm2938, %v2774, %v3010
    %v3083 = vsel %vm2939, %v2779, %v3011
    %v3084 = vsel %vm2940, %v2782, %v3012
    %v3085 = vsel %vm2941, %v2787, %v3013
    %v3086 = vsel %vm2942, %v2790, %v3014
    %v3087 = vsel %vm2943, %v2795, %v3015
    %v3088 = vsel %vm2944, %v2798, %v3016
    %v3089 = vsel %vm2945, %v2803, %v3017
    %v3090 = vsel %vm2946, %v2806, %v3018
    %v3091 = vsel %vm2947, %v2811, %v3019
    %v3092 = vsel %vm2948, %v2814, %v3020
    %v3093 = vsel %vm2949, %v2819, %v3021
    %v3094 = vsel %vm2950, %v2822, %v3022
    %v3095 = vsel %vm2951, %v2827, %v3023
    %v3096 = vsel %vm2952, %v2830, %v3024
    %v3097 = vsel %vm2953, %v2835, %v3025
    %v3098 = vsel %vm2954, %v2838, %v3026
    %v3099 = vsel %vm2955, %v2843, %v3027
    %v3100 = vsel %vm2956, %v2846, %v3028
    %v3101 = vsel %vm2957, %v2851, %v3029
    %v3102 = vsel %vm2958, %v2854, %v3030
    %v3103 = vsel %vm2959, %v2859, %v3031
    %v3104 = vsel %vm2960, %v2862, %v3032
    %v3105 = vsel %vm2961, %v2867, %v3033
    %v3106 = vsel %vm2962, %v2870, %v3034
    %v3107 = vsel %vm2963, %v2875, %v3035
    %v3108 = vsel %vm2964, %v2878, %v3036
    %v3109 = vsel %vm2965, %v2883, %v3037
    %v3110 = vsel %vm2966, %v2886, %v3038
    %v3111 = vsel %vm2967, %v2891, %v3039
    %v3112 = vsel %vm2968, %v2894, %v3040
    %3113 = vst.msk [vmem:[#allocation2] sm:$0xff] %vm2467, %v3041
    %3114 = vst.msk [vmem:[#allocation2 + $0x28] sm:$0xff] %vm2467, %v3042
    %3117 = vrot.lane.b32.xlu0 %v3043, 16
    %v3118 = vpop.permute.xlu0 %3117
    %3119 = vrot.lane.b32.xlu0 %v3044, 16
    %v3120 = vpop.permute.xlu0 %3119
    %vm3123 = vcmask 261248
    %3124 = vst.msk [vmem:[#allocation2] sm:$0xff] %vm3123, %v3118
    %3125 = vst.msk [vmem:[#allocation2 + $0x28] sm:$0xff] %vm3123, %v3120
    %3128 = vrot.lane.b32.xlu0 %v3045, 32
    %v3129 = vpop.permute.xlu0 %3128
    %3130 = vrot.lane.b32.xlu0 %v3046, 32
    %v3131 = vpop.permute.xlu0 %3130
    %vm3134 = vcmask 392448
    %3135 = vst.msk [vmem:[#allocation2] sm:$0xff] %vm3134, %v3129
    %3136 = vst.msk [vmem:[#allocation2 + $0x28] sm:$0xff] %vm3134, %v3131
    %3139 = vrot.lane.b32.xlu0 %v3047, 48
    %v3140 = vpop.permute.xlu0 %3139
    %3141 = vrot.lane.b32.xlu0 %v3048, 48
    %v3142 = vpop.permute.xlu0 %3141
    %vm3145 = vcmask 523648
    %3146 = vst.msk [vmem:[#allocation2] sm:$0xff] %vm3145, %v3140
    %3147 = vst.msk [vmem:[#allocation2 + $0x28] sm:$0xff] %vm3145, %v3142
    %3150 = vrot.lane.b32.xlu0 %v3049, 64
    %v3151 = vpop.permute.xlu0 %3150
    %3152 = vrot.lane.b32.xlu0 %v3050, 64
    %v3153 = vpop.permute.xlu0 %3152
    %vm3156 = vcmask 654848
    %3157 = vst.msk [vmem:[#allocation2] sm:$0xff] %vm3156, %v3151
    %3158 = vst.msk [vmem:[#allocation2 + $0x28] sm:$0xff] %vm3156, %v3153
    %3161 = vrot.lane.b32.xlu0 %v3051, 80
    %v3162 = vpop.permute.xlu0 %3161
    %3163 = vrot.lane.b32.xlu0 %v3052, 80
    %v3164 = vpop.permute.xlu0 %3163
    %vm3167 = vcmask 786048
    %3168 = vst.msk [vmem:[#allocation2] sm:$0xff] %vm3167, %v3162
    %3169 = vst.msk [vmem:[#allocation2 + $0x28] sm:$0xff] %vm3167, %v3164
    %3172 = vrot.lane.b32.xlu0 %v3053, 96
    %v3173 = vpop.permute.xlu0 %3172
    %3174 = vrot.lane.b32.xlu0 %v3054, 96
    %v3175 = vpop.permute.xlu0 %3174
    %vm3178 = vcmask 917248
    %3179 = vst.msk [vmem:[#allocation2] sm:$0xff] %vm3178, %v3173
    %3180 = vst.msk [vmem:[#allocation2 + $0x28] sm:$0xff] %vm3178, %v3175
    %3183 = vrot.lane.b32.xlu0 %v3055, 112
    %v3184 = vpop.permute.xlu0 %3183
    %3185 = vrot.lane.b32.xlu0 %v3056, 112
    %v3186 = vpop.permute.xlu0 %3185
    %vm3189 = vcmask 1048448
    %3190 = vst.msk [vmem:[#allocation2] sm:$0xff] %vm3189, %v3184
    %3191 = vst.msk [vmem:[#allocation2 + $0x28] sm:$0xff] %vm3189, %v3186
    %3192 = vst.msk [vmem:[#allocation2 + $0x8] sm:$0xff] %vm2467, %v3057
    %3193 = vst.msk [vmem:[#allocation2 + $0x30] sm:$0xff] %vm2467, %v3058
    %3196 = vrot.lane.b32.xlu0 %v3059, 16
    %v3197 = vpop.permute.xlu0 %3196
    %3198 = vrot.lane.b32.xlu0 %v3060, 16
    %v3199 = vpop.permute.xlu0 %3198
    %3202 = vst.msk [vmem:[#allocation2 + $0x8] sm:$0xff] %vm3123, %v3197
    %3203 = vst.msk [vmem:[#allocation2 + $0x30] sm:$0xff] %vm3123, %v3199
    %3206 = vrot.lane.b32.xlu0 %v3061, 32
    %v3207 = vpop.permute.xlu0 %3206
    %3208 = vrot.lane.b32.xlu0 %v3062, 32
    %v3209 = vpop.permute.xlu0 %3208
    %3212 = vst.msk [vmem:[#allocation2 + $0x8] sm:$0xff] %vm3134, %v3207
    %3213 = vst.msk [vmem:[#allocation2 + $0x30] sm:$0xff] %vm3134, %v3209
    %3216 = vrot.lane.b32.xlu0 %v3063, 48
    %v3217 = vpop.permute.xlu0 %3216
    %3218 = vrot.lane.b32.xlu0 %v3064, 48
    %v3219 = vpop.permute.xlu0 %3218
    %3222 = vst.msk [vmem:[#allocation2 + $0x8] sm:$0xff] %vm3145, %v3217
    %3223 = vst.msk [vmem:[#allocation2 + $0x30] sm:$0xff] %vm3145, %v3219
    %3226 = vrot.lane.b32.xlu0 %v3065, 64
    %v3227 = vpop.permute.xlu0 %3226
    %3228 = vrot.lane.b32.xlu0 %v3066, 64
    %v3229 = vpop.permute.xlu0 %3228
    %3232 = vst.msk [vmem:[#allocation2 + $0x8] sm:$0xff] %vm3156, %v3227
    %3233 = vst.msk [vmem:[#allocation2 + $0x30] sm:$0xff] %vm3156, %v3229
    %3236 = vrot.lane.b32.xlu0 %v3067, 80
    %v3237 = vpop.permute.xlu0 %3236
    %3238 = vrot.lane.b32.xlu0 %v3068, 80
    %v3239 = vpop.permute.xlu0 %3238
    %3242 = vst.msk [vmem:[#allocation2 + $0x8] sm:$0xff] %vm3167, %v3237
    %3243 = vst.msk [vmem:[#allocation2 + $0x30] sm:$0xff] %vm3167, %v3239
    %3246 = vrot.lane.b32.xlu0 %v3069, 96
    %v3247 = vpop.permute.xlu0 %3246
    %3248 = vrot.lane.b32.xlu0 %v3070, 96
    %v3249 = vpop.permute.xlu0 %3248
    %3252 = vst.msk [vmem:[#allocation2 + $0x8] sm:$0xff] %vm3178, %v3247
    %3253 = vst.msk [vmem:[#allocation2 + $0x30] sm:$0xff] %vm3178, %v3249
    %3256 = vrot.lane.b32.xlu0 %v3071, 112
    %v3257 = vpop.permute.xlu0 %3256
    %3258 = vrot.lane.b32.xlu0 %v3072, 112
    %v3259 = vpop.permute.xlu0 %3258
    %3262 = vst.msk [vmem:[#allocation2 + $0x8] sm:$0xff] %vm3189, %v3257
    %3263 = vst.msk [vmem:[#allocation2 + $0x30] sm:$0xff] %vm3189, %v3259
    %3264 = vst.msk [vmem:[#allocation2 + $0x10] sm:$0xff] %vm2467, %v3073
    %3265 = vst.msk [vmem:[#allocation2 + $0x38] sm:$0xff] %vm2467, %v3074
    %3268 = vrot.lane.b32.xlu0 %v3075, 16
    %v3269 = vpop.permute.xlu0 %3268
    %3270 = vrot.lane.b32.xlu0 %v3076, 16
    %v3271 = vpop.permute.xlu0 %3270
    %3274 = vst.msk [vmem:[#allocation2 + $0x10] sm:$0xff] %vm3123, %v3269
    %3275 = vst.msk [vmem:[#allocation2 + $0x38] sm:$0xff] %vm3123, %v3271
    %3278 = vrot.lane.b32.xlu0 %v3077, 32
    %v3279 = vpop.permute.xlu0 %3278
    %3280 = vrot.lane.b32.xlu0 %v3078, 32
    %v3281 = vpop.permute.xlu0 %3280
    %3284 = vst.msk [vmem:[#allocation2 + $0x10] sm:$0xff] %vm3134, %v3279
    %3285 = vst.msk [vmem:[#allocation2 + $0x38] sm:$0xff] %vm3134, %v3281
    %3288 = vrot.lane.b32.xlu0 %v3079, 48
    %v3289 = vpop.permute.xlu0 %3288
    %3290 = vrot.lane.b32.xlu0 %v3080, 48
    %v3291 = vpop.permute.xlu0 %3290
    %3294 = vst.msk [vmem:[#allocation2 + $0x10] sm:$0xff] %vm3145, %v3289
    %3295 = vst.msk [vmem:[#allocation2 + $0x38] sm:$0xff] %vm3145, %v3291
    %3298 = vrot.lane.b32.xlu0 %v3081, 64
    %v3299 = vpop.permute.xlu0 %3298
    %3300 = vrot.lane.b32.xlu0 %v3082, 64
    %v3301 = vpop.permute.xlu0 %3300
    %3304 = vst.msk [vmem:[#allocation2 + $0x10] sm:$0xff] %vm3156, %v3299
    %3305 = vst.msk [vmem:[#allocation2 + $0x38] sm:$0xff] %vm3156, %v3301
    %3308 = vrot.lane.b32.xlu0 %v3083, 80
    %v3309 = vpop.permute.xlu0 %3308
    %3310 = vrot.lane.b32.xlu0 %v3084, 80
    %v3311 = vpop.permute.xlu0 %3310
    %3314 = vst.msk [vmem:[#allocation2 + $0x10] sm:$0xff] %vm3167, %v3309
    %3315 = vst.msk [vmem:[#allocation2 + $0x38] sm:$0xff] %vm3167, %v3311
    %3318 = vrot.lane.b32.xlu0 %v3085, 96
    %v3319 = vpop.permute.xlu0 %3318
    %3320 = vrot.lane.b32.xlu0 %v3086, 96
    %v3321 = vpop.permute.xlu0 %3320
    %3324 = vst.msk [vmem:[#allocation2 + $0x10] sm:$0xff] %vm3178, %v3319
    %3325 = vst.msk [vmem:[#allocation2 + $0x38] sm:$0xff] %vm3178, %v3321
    %3328 = vrot.lane.b32.xlu0 %v3087, 112
    %v3329 = vpop.permute.xlu0 %3328
    %3330 = vrot.lane.b32.xlu0 %v3088, 112
    %v3331 = vpop.permute.xlu0 %3330
    %3334 = vst.msk [vmem:[#allocation2 + $0x10] sm:$0xff] %vm3189, %v3329
    %3335 = vst.msk [vmem:[#allocation2 + $0x38] sm:$0xff] %vm3189, %v3331
    %3336 = vst.msk [vmem:[#allocation2 + $0x18] sm:$0xff] %vm2467, %v3089
    %3337 = vst.msk [vmem:[#allocation2 + $0x40] sm:$0xff] %vm2467, %v3090
    %3340 = vrot.lane.b32.xlu0 %v3091, 16
    %v3341 = vpop.permute.xlu0 %3340
    %3342 = vrot.lane.b32.xlu0 %v3092, 16
    %v3343 = vpop.permute.xlu0 %3342
    %3346 = vst.msk [vmem:[#allocation2 + $0x18] sm:$0xff] %vm3123, %v3341
    %3347 = vst.msk [vmem:[#allocation2 + $0x40] sm:$0xff] %vm3123, %v3343
    %3350 = vrot.lane.b32.xlu0 %v3093, 32
    %v3351 = vpop.permute.xlu0 %3350
    %3352 = vrot.lane.b32.xlu0 %v3094, 32
    %v3353 = vpop.permute.xlu0 %3352
    %3356 = vst.msk [vmem:[#allocation2 + $0x18] sm:$0xff] %vm3134, %v3351
    %3357 = vst.msk [vmem:[#allocation2 + $0x40] sm:$0xff] %vm3134, %v3353
    %3360 = vrot.lane.b32.xlu0 %v3095, 48
    %v3361 = vpop.permute.xlu0 %3360
    %3362 = vrot.lane.b32.xlu0 %v3096, 48
    %v3363 = vpop.permute.xlu0 %3362
    %3366 = vst.msk [vmem:[#allocation2 + $0x18] sm:$0xff] %vm3145, %v3361
    %3367 = vst.msk [vmem:[#allocation2 + $0x40] sm:$0xff] %vm3145, %v3363
    %3370 = vrot.lane.b32.xlu0 %v3097, 64
    %v3371 = vpop.permute.xlu0 %3370
    %3372 = vrot.lane.b32.xlu0 %v3098, 64
    %v3373 = vpop.permute.xlu0 %3372
    %3376 = vst.msk [vmem:[#allocation2 + $0x18] sm:$0xff] %vm3156, %v3371
    %3377 = vst.msk [vmem:[#allocation2 + $0x40] sm:$0xff] %vm3156, %v3373
    %3380 = vrot.lane.b32.xlu0 %v3099, 80
    %v3381 = vpop.permute.xlu0 %3380
    %3382 = vrot.lane.b32.xlu0 %v3100, 80
    %v3383 = vpop.permute.xlu0 %3382
    %3386 = vst.msk [vmem:[#allocation2 + $0x18] sm:$0xff] %vm3167, %v3381
    %3387 = vst.msk [vmem:[#allocation2 + $0x40] sm:$0xff] %vm3167, %v3383
    %3390 = vrot.lane.b32.xlu0 %v3101, 96
    %v3391 = vpop.permute.xlu0 %3390
    %3392 = vrot.lane.b32.xlu0 %v3102, 96
    %v3393 = vpop.permute.xlu0 %3392
    %3396 = vst.msk [vmem:[#allocation2 + $0x18] sm:$0xff] %vm3178, %v3391
    %3397 = vst.msk [vmem:[#allocation2 + $0x40] sm:$0xff] %vm3178, %v3393
    %3400 = vrot.lane.b32.xlu0 %v3103, 112
    %v3401 = vpop.permute.xlu0 %3400
    %3402 = vrot.lane.b32.xlu0 %v3104, 112
    %v3403 = vpop.permute.xlu0 %3402
    %3406 = vst.msk [vmem:[#allocation2 + $0x18] sm:$0xff] %vm3189, %v3401
    %3407 = vst.msk [vmem:[#allocation2 + $0x40] sm:$0xff] %vm3189, %v3403
    %3408 = vst.msk [vmem:[#allocation2 + $0x20] sm:$0xff] %vm2467, %v3105
    %3409 = vst.msk [vmem:[#allocation2 + $0x48] sm:$0xff] %vm2467, %v3106
    %3412 = vrot.lane.b32.xlu0 %v3107, 16
    %v3413 = vpop.permute.xlu0 %3412
    %3414 = vrot.lane.b32.xlu0 %v3108, 16
    %v3415 = vpop.permute.xlu0 %3414
    %3418 = vst.msk [vmem:[#allocation2 + $0x20] sm:$0xff] %vm3123, %v3413
    %3419 = vst.msk [vmem:[#allocation2 + $0x48] sm:$0xff] %vm3123, %v3415
    %3422 = vrot.lane.b32.xlu0 %v3109, 32
    %v3423 = vpop.permute.xlu0 %3422
    %3424 = vrot.lane.b32.xlu0 %v3110, 32
    %v3425 = vpop.permute.xlu0 %3424
    %3428 = vst.msk [vmem:[#allocation2 + $0x20] sm:$0xff] %vm3134, %v3423
    %3429 = vst.msk [vmem:[#allocation2 + $0x48] sm:$0xff] %vm3134, %v3425
    %3432 = vrot.lane.b32.xlu0 %v3111, 48
    %v3433 = vpop.permute.xlu0 %3432
    %3434 = vrot.lane.b32.xlu0 %v3112, 48
    %v3435 = vpop.permute.xlu0 %3434
    %3438 = vst.msk [vmem:[#allocation2 + $0x20] sm:$0xff] %vm3145, %v3433
    %3439 = vst.msk [vmem:[#allocation2 + $0x48] sm:$0xff] %vm3145, %v3435
    %v3440 = vld [vmem:[#allocation2] sm:$0xff]
    %v3441 = vld [vmem:[#allocation2 + $0x8] sm:$0xff]
    %v3442 = vld [vmem:[#allocation2 + $0x10] sm:$0xff]
    %v3443 = vld [vmem:[#allocation2 + $0x18] sm:$0xff]
    %v3444 = vld [vmem:[#allocation2 + $0x20] sm:$0xff]
    %v3445 = vld [vmem:[#allocation2 + $0x28] sm:$0xff]
    %v3446 = vld [vmem:[#allocation2 + $0x30] sm:$0xff]
    %v3447 = vld [vmem:[#allocation2 + $0x38] sm:$0xff]
    %v3448 = vld [vmem:[#allocation2 + $0x40] sm:$0xff]
    %v3449 = vld [vmem:[#allocation2 + $0x48] sm:$0xff]
    %v3450 = vpack.c.bf16 %v3445, %v3440
    %v3451 = vpack.c.bf16 %v3446, %v3441
    %v3452 = vpack.c.bf16 %v3447, %v3442
    %v3453 = vpack.c.bf16 %v3448, %v3443
    %v3454 = vpack.c.bf16 %v3449, %v3444
    %v3455 = vld [vmem:[%s6] sm:$0xf]
    %v3456 = vld [vmem:[%s6 + $0x4] sm:$0xf]
    %v3457 = vld [vmem:[%s6 + $0x8] sm:$0xf]
    %v3458 = vld [vmem:[%s6 + $0xc] sm:$0xf]
    %v3459 = vld [vmem:[%s6 + $0x10] sm:$0xf]
    %v3460 = vld [vmem:[%s6 + $0x14] sm:$0xf]
    %v3461 = vld [vmem:[%s6 + $0x18] sm:$0xf]
    %v3462 = vld [vmem:[%s6 + $0x1c] sm:$0xf]
    %v3463 = vld [vmem:[%s6 + $0x20] sm:$0xf]
    %v3464 = vld [vmem:[%s6 + $0x24] sm:$0xf]
    %v3465 = vld [vmem:[%s6 + $0x28] sm:$0xf]
    %v3466 = vld [vmem:[%s6 + $0x2c] sm:$0xf]
    %v3467 = vld [vmem:[%s6 + $0x30] sm:$0xf]
    %v3468 = vld [vmem:[%s6 + $0x34] sm:$0xf]
    %v3469 = vld [vmem:[%s6 + $0x38] sm:$0xf]
    %v3470 = vld [vmem:[%s6 + $0x3c] sm:$0xf]
    %v3471 = vld [vmem:[%s6 + $0x40] sm:$0xf]
    %v3472 = vld [vmem:[%s6 + $0x44] sm:$0xf]
    %v3473 = vld [vmem:[%s6 + $0x48] sm:$0xf]
    %v3474 = vld [vmem:[%s6 + $0x4c] sm:$0xf]
    %v3475 = vld [vmem:[%s6 + $0x50] sm:$0xf]
    %v3476 = vld [vmem:[%s6 + $0x54] sm:$0xf]
    %v3477 = vld [vmem:[%s6 + $0x58] sm:$0xf]
    %v3478 = vld [vmem:[%s6 + $0x5c] sm:$0xf]
    %v3479 = vld [vmem:[%s6 + $0x60] sm:$0xf]
    %v3480 = vld [vmem:[%s6 + $0x64] sm:$0xf]
    %v3481 = vld [vmem:[%s6 + $0x68] sm:$0xf]
    %v3482 = vld [vmem:[%s6 + $0x6c] sm:$0xf]
    %v3483 = vld [vmem:[%s6 + $0x70] sm:$0xf]
    %v3484 = vld [vmem:[%s6 + $0x74] sm:$0xf]
    %v3485 = vld [vmem:[%s6 + $0x78] sm:$0xf]
    %v3486 = vld [vmem:[%s6 + $0x7c] sm:$0xf]
    %v3487 = vld [vmem:[%s6 + $0x80] sm:$0xf]
    %v3488 = vld [vmem:[%s6 + $0x84] sm:$0xf]
    %v3489 = vld [vmem:[%s6 + $0x88] sm:$0xf]
    %v3490 = vld [vmem:[%s6 + $0x8c] sm:$0xf]
    %v3491 = vld [vmem:[%s6 + $0x90] sm:$0xf]
    %v3492 = vld [vmem:[%s6 + $0x94] sm:$0xf]
    %v3493 = vld [vmem:[%s6 + $0x98] sm:$0xf]
    %v3494 = vld [vmem:[%s6 + $0x9c] sm:$0xf]
    %v3495 = vld [vmem:[%s6 + $0xa0] sm:$0xf]
    %v3496 = vld [vmem:[%s6 + $0xa4] sm:$0xf]
    %v3497 = vld [vmem:[%s6 + $0xa8] sm:$0xf]
    %v3498 = vld [vmem:[%s6 + $0xac] sm:$0xf]
    %v3499 = vld [vmem:[%s6 + $0xb0] sm:$0xf]
    %v3500 = vld [vmem:[%s6 + $0xb4] sm:$0xf]
    %v3501 = vld [vmem:[%s6 + $0xb8] sm:$0xf]
    %v3502 = vld [vmem:[%s6 + $0xbc] sm:$0xf]
    %v3503 = vld [vmem:[%s6 + $0xc0] sm:$0xf]
    %v3504 = vld [vmem:[%s6 + $0xc4] sm:$0xf]
    %v3505 = vld [vmem:[%s6 + $0xc8] sm:$0xf]
    %v3506 = vld [vmem:[%s6 + $0xcc] sm:$0xf]
    %v3507 = vld [vmem:[%s6 + $0xd0] sm:$0xf]
    %v3508 = vld [vmem:[%s6 + $0xd4] sm:$0xf]
    %v3509 = vld [vmem:[%s6 + $0xd8] sm:$0xf]
    %v3510 = vld [vmem:[%s6 + $0xdc] sm:$0xf]
    %v3511 = vld [vmem:[%s6 + $0xe0] sm:$0xf]
    %v3512 = vld [vmem:[%s6 + $0xe4] sm:$0xf]
    %v3513 = vld [vmem:[%s6 + $0xe8] sm:$0xf]
    %v3514 = vld [vmem:[%s6 + $0xec] sm:$0xf]
    %v3515 = vld [vmem:[%s6 + $0xf0] sm:$0xf]
    %v3516 = vld [vmem:[%s6 + $0xf4] sm:$0xf]
    %v3517 = vld [vmem:[%s6 + $0xf8] sm:$0xf]
    %v3518 = vld [vmem:[%s6 + $0xfc] sm:$0xf]
    %v3519 = vld [vmem:[%s6 + $0x100] sm:$0xf]
    %v3520 = vld [vmem:[%s6 + $0x104] sm:$0xf]
    %v3521 = vld [vmem:[%s6 + $0x108] sm:$0xf]
    %v3522 = vld [vmem:[%s6 + $0x10c] sm:$0xf]
    %v3523 = vld [vmem:[%s6 + $0x110] sm:$0xf]
    %v3524 = vld [vmem:[%s6 + $0x114] sm:$0xf]
    %v3525 = vld [vmem:[%s6 + $0x118] sm:$0xf]
    %v3526 = vld [vmem:[%s6 + $0x11c] sm:$0xf]
    %v3527 = vld [vmem:[%s8] sm:$0x1]
    %v3529 = vlaneseq
    %v3530 = vshrl.u32 %v3529, 7
    %v3531 = vsub.s32 0, %v3530
    %v3532 = vrot.slane %v3527, %v3531
    %v3606 = vunpack.c.l.b16 %v3455
    %v3607 = vunpack.c.l.b16 %v3456
    %v3608 = vunpack.c.l.b16 %v3457
    %v3609 = vunpack.c.l.b16 %v3458
    %v3610 = vunpack.c.l.b16 %v3459
    %v3611 = vunpack.c.l.b16 %v3460
    %v3612 = vunpack.c.l.b16 %v3461
    %v3613 = vunpack.c.l.b16 %v3462
    %v3614 = vunpack.c.l.b16 %v3463
    %v3615 = vunpack.c.l.b16 %v3464
    %v3616 = vunpack.c.l.b16 %v3465
    %v3617 = vunpack.c.l.b16 %v3466
    %v3618 = vunpack.c.l.b16 %v3467
    %v3619 = vunpack.c.l.b16 %v3468
    %v3620 = vunpack.c.l.b16 %v3469
    %v3621 = vunpack.c.l.b16 %v3470
    %v3622 = vunpack.c.l.b16 %v3471
    %v3623 = vunpack.c.l.b16 %v3472
    %v3624 = vunpack.c.l.b16 %v3473
    %v3625 = vunpack.c.l.b16 %v3474
    %v3626 = vunpack.c.l.b16 %v3475
    %v3627 = vunpack.c.l.b16 %v3476
    %v3628 = vunpack.c.l.b16 %v3477
    %v3629 = vunpack.c.l.b16 %v3478
    %v3630 = vunpack.c.l.b16 %v3479
    %v3631 = vunpack.c.l.b16 %v3480
    %v3632 = vunpack.c.l.b16 %v3481
    %v3633 = vunpack.c.l.b16 %v3482
    %v3634 = vunpack.c.l.b16 %v3483
    %v3635 = vunpack.c.l.b16 %v3484
    %v3636 = vunpack.c.l.b16 %v3485
    %v3637 = vunpack.c.l.b16 %v3486
    %v3638 = vunpack.c.l.b16 %v3487
    %v3639 = vunpack.c.l.b16 %v3488
    %v3640 = vunpack.c.l.b16 %v3489
    %v3641 = vunpack.c.l.b16 %v3490
    %v3642 = vunpack.c.l.b16 %v3491
    %v3643 = vunpack.c.l.b16 %v3492
    %v3644 = vunpack.c.l.b16 %v3493
    %v3645 = vunpack.c.l.b16 %v3494
    %v3646 = vunpack.c.l.b16 %v3495
    %v3647 = vunpack.c.l.b16 %v3496
    %v3648 = vunpack.c.l.b16 %v3497
    %v3649 = vunpack.c.l.b16 %v3498
    %v3650 = vunpack.c.l.b16 %v3499
    %v3651 = vunpack.c.l.b16 %v3500
    %v3652 = vunpack.c.l.b16 %v3501
    %v3653 = vunpack.c.l.b16 %v3502
    %v3654 = vunpack.c.l.b16 %v3503
    %v3655 = vunpack.c.l.b16 %v3504
    %v3656 = vunpack.c.l.b16 %v3505
    %v3657 = vunpack.c.l.b16 %v3506
    %v3658 = vunpack.c.l.b16 %v3507
    %v3659 = vunpack.c.l.b16 %v3508
    %v3660 = vunpack.c.l.b16 %v3509
    %v3661 = vunpack.c.l.b16 %v3510
    %v3662 = vunpack.c.l.b16 %v3511
    %v3663 = vunpack.c.l.b16 %v3512
    %v3664 = vunpack.c.l.b16 %v3513
    %v3665 = vunpack.c.l.b16 %v3514
    %v3666 = vunpack.c.l.b16 %v3515
    %v3667 = vunpack.c.l.b16 %v3516
    %v3668 = vunpack.c.l.b16 %v3517
    %v3669 = vunpack.c.l.b16 %v3518
    %v3670 = vunpack.c.l.b16 %v3519
    %v3671 = vunpack.c.l.b16 %v3520
    %v3672 = vunpack.c.l.b16 %v3521
    %v3673 = vunpack.c.l.b16 %v3522
    %v3674 = vunpack.c.l.b16 %v3523
    %v3675 = vunpack.c.l.b16 %v3524
    %v3676 = vunpack.c.l.b16 %v3525
    %v3677 = vunpack.c.l.b16 %v3526
    %v3678 = vpack.c.b16 %v3607, %v3606
    %v3679 = vpack.c.b16 %v3609, %v3608
    %v3680 = vpack.c.b16 %v3611, %v3610
    %v3681 = vpack.c.b16 %v3613, %v3612
    %v3682 = vpack.c.b16 %v3615, %v3614
    %v3683 = vpack.c.b16 %v3617, %v3616
    %v3684 = vpack.c.b16 %v3619, %v3618
    %v3685 = vpack.c.b16 %v3621, %v3620
    %v3686 = vpack.c.b16 %v3623, %v3622
    %v3687 = vpack.c.b16 %v3625, %v3624
    %v3688 = vpack.c.b16 %v3627, %v3626
    %v3689 = vpack.c.b16 %v3629, %v3628
    %v3690 = vpack.c.b16 %v3631, %v3630
    %v3691 = vpack.c.b16 %v3633, %v3632
    %v3692 = vpack.c.b16 %v3635, %v3634
    %v3693 = vpack.c.b16 %v3637, %v3636
    %v3694 = vpack.c.b16 %v3639, %v3638
    %v3695 = vpack.c.b16 %v3641, %v3640
    %v3696 = vpack.c.b16 %v3643, %v3642
    %v3697 = vpack.c.b16 %v3645, %v3644
    %v3698 = vpack.c.b16 %v3647, %v3646
    %v3699 = vpack.c.b16 %v3649, %v3648
    %v3700 = vpack.c.b16 %v3651, %v3650
    %v3701 = vpack.c.b16 %v3653, %v3652
    %v3702 = vpack.c.b16 %v3655, %v3654
    %v3703 = vpack.c.b16 %v3657, %v3656
    %v3704 = vpack.c.b16 %v3659, %v3658
    %v3705 = vpack.c.b16 %v3661, %v3660
    %v3706 = vpack.c.b16 %v3663, %v3662
    %v3707 = vpack.c.b16 %v3665, %v3664
    %v3708 = vpack.c.b16 %v3667, %v3666
    %v3709 = vpack.c.b16 %v3669, %v3668
    %v3710 = vpack.c.b16 %v3671, %v3670
    %v3711 = vpack.c.b16 %v3673, %v3672
    %v3712 = vpack.c.b16 %v3675, %v3674
    %v3713 = vpack.c.b16 %v3677, %v3676
    %vm3750 = vcmask 523264
    %v3752 = vsel %vm3750, %v3454, 0
    %3754 = vmatprep.subr.bf16.mxu0 0
    %3755 = vmatpush1.bf16.msra.mxu0 %v3685
    %3756 = vmatprep.subr.bf16.mxu0 0
    %3757 = vmatpush1.bf16.msra.mxu0 %v3684
    %3758 = vmatprep.subr.bf16.mxu0 0
    %3759 = vmatpush1.bf16.msra.mxu0 %v3683
    %3760 = vmatprep.subr.bf16.mxu0 0
    %3761 = vmatpush1.bf16.msra.mxu0 %v3682
    %3762 = vmatprep.subr.bf16.mxu0 0
    %3763 = vmatpush1.bf16.msra.mxu0 %v3681
    %3764 = vmatprep.subr.bf16.mxu0 0
    %3765 = vmatpush1.bf16.msra.mxu0 %v3680
    %3766 = vmatprep.subr.bf16.mxu0 0
    %3767 = vmatpush1.bf16.msra.mxu0 %v3679
    %3768 = vmatprep.subr.bf16.mxu0 0
    %3769 = vmatpush1.bf16.msra.mxu0 %v3678
    %3770 = vmatprep.subr.bf16.mxu0 0
    %3771 = vmatpush2.bf16.msra.mxu0 %v3693
    %3772 = vmatprep.subr.bf16.mxu0 0
    %3773 = vmatpush2.bf16.msra.mxu0 %v3692
    %3774 = vmatprep.subr.bf16.mxu0 0
    %3775 = vmatpush2.bf16.msra.mxu0 %v3691
    %3776 = vmatprep.subr.bf16.mxu0 0
    %3777 = vmatpush2.bf16.msra.mxu0 %v3690
    %3778 = vmatprep.subr.bf16.mxu0 0
    %3779 = vmatpush2.bf16.msra.mxu0 %v3689
    %3780 = vmatprep.subr.bf16.mxu0 0
    %3781 = vmatpush2.bf16.msra.mxu0 %v3688
    %3782 = vmatprep.subr.bf16.mxu0 0
    %3783 = vmatpush2.bf16.msra.mxu0 %v3687
    %3784 = vmatprep.subr.bf16.mxu0 0
    %3785 = vmatpush2.bf16.msra.mxu0 %v3686
    %3786 = vmatprep.mubr.bf16.mxu0 %v3451
    %3787 = vmatmul.mubr.bf16.gmra.mxu0 %v3450
    %v3788 = vpop.f32.mrf.mxu0
    %v3789 = vadd.f32 %v3532, %v3788
    %v3790 = vpop.f32.mrf.mxu0
    %v3791 = vpop.f32.mrf.mxu0
    %v3792 = vadd.f32 %v3532, %v3791
    %v3793 = vpop.f32.mrf.mxu0
    %3794 = vdwg.mxu0
    %3795 = vmatprep.subr.bf16.mxu0 0
    %3796 = vmatpush1.bf16.msra.mxu0 %v3701
    %3797 = vmatprep.subr.bf16.mxu0 0
    %3798 = vmatpush1.bf16.msra.mxu0 %v3700
    %3799 = vmatprep.subr.bf16.mxu0 0
    %3800 = vmatpush1.bf16.msra.mxu0 %v3699
    %3801 = vmatprep.subr.bf16.mxu0 0
    %3802 = vmatpush1.bf16.msra.mxu0 %v3698
    %3803 = vmatprep.subr.bf16.mxu0 0
    %3804 = vmatpush1.bf16.msra.mxu0 %v3697
    %3805 = vmatprep.subr.bf16.mxu0 0
    %3806 = vmatpush1.bf16.msra.mxu0 %v3696
    %3807 = vmatprep.subr.bf16.mxu0 0
    %3808 = vmatpush1.bf16.msra.mxu0 %v3695
    %3809 = vmatprep.subr.bf16.mxu0 0
    %3810 = vmatpush1.bf16.msra.mxu0 %v3694
    %3811 = vmatprep.subr.bf16.mxu0 0
    %3812 = vmatpush2.bf16.msra.mxu0 %v3709
    %3813 = vmatprep.subr.bf16.mxu0 0
    %3814 = vmatpush2.bf16.msra.mxu0 %v3708
    %3815 = vmatprep.subr.bf16.mxu0 0
    %3816 = vmatpush2.bf16.msra.mxu0 %v3707
    %3817 = vmatprep.subr.bf16.mxu0 0
    %3818 = vmatpush2.bf16.msra.mxu0 %v3706
    %3819 = vmatprep.subr.bf16.mxu0 0
    %3820 = vmatpush2.bf16.msra.mxu0 %v3705
    %3821 = vmatprep.subr.bf16.mxu0 0
    %3822 = vmatpush2.bf16.msra.mxu0 %v3704
    %3823 = vmatprep.subr.bf16.mxu0 0
    %3824 = vmatpush2.bf16.msra.mxu0 %v3703
    %3825 = vmatprep.subr.bf16.mxu0 0
    %3826 = vmatpush2.bf16.msra.mxu0 %v3702
    %3827 = vmatprep.mubr.bf16.mxu0 %v3453
    %3828 = vmatmul.mubr.bf16.gmra.mxu0 %v3452
    %v3829 = vpop.f32.mrf.mxu0
    %v3830 = vadd.f32 %v3789, %v3829
    %v3831 = vpop.f32.mrf.mxu0
    %v3832 = vpop.f32.mrf.mxu0
    %v3833 = vadd.f32 %v3792, %v3832
    %v3834 = vpop.f32.mrf.mxu0
    %3835 = vdwg.mxu0
    %3836 = vmatprep.subr.bf16.mxu0 0
    %3837 = vmatpush1.bf16.msra.mxu0 0
    %3838 = vmatprep.subr.bf16.mxu0 0
    %3839 = vmatpush1.bf16.msra.mxu0 0
    %3840 = vmatprep.subr.bf16.mxu0 0
    %3841 = vmatpush1.bf16.msra.mxu0 0
    %3842 = vmatprep.subr.bf16.mxu0 0
    %3843 = vmatpush1.bf16.msra.mxu0 0
    %3844 = vmatprep.subr.bf16.mxu0 0
    %3845 = vmatpush1.bf16.msra.mxu0 %v3713
    %3846 = vmatprep.subr.bf16.mxu0 0
    %3847 = vmatpush1.bf16.msra.mxu0 %v3712
    %3848 = vmatprep.subr.bf16.mxu0 0
    %3849 = vmatpush1.bf16.msra.mxu0 %v3711
    %3850 = vmatprep.subr.bf16.mxu0 0
    %3851 = vmatpush1.bf16.msra.mxu0 %v3710
    %3852 = vmatprep.subr.bf16.mxu0 0
    %3853 = vmatpush2.bf16.msra.mxu0 0
    %3854 = vmatprep.subr.bf16.mxu0 0
    %3855 = vmatpush2.bf16.msra.mxu0 0
    %3856 = vmatprep.subr.bf16.mxu0 0
    %3857 = vmatpush2.bf16.msra.mxu0 0
    %3858 = vmatprep.subr.bf16.mxu0 0
    %3859 = vmatpush2.bf16.msra.mxu0 0
    %3860 = vmatprep.subr.bf16.mxu0 0
    %3861 = vmatpush2.bf16.msra.mxu0 0
    %3862 = vmatprep.subr.bf16.mxu0 0
    %3863 = vmatpush2.bf16.msra.mxu0 0
    %3864 = vmatprep.subr.bf16.mxu0 0
    %3865 = vmatpush2.bf16.msra.mxu0 0
    %3866 = vmatprep.subr.bf16.mxu0 0
    %3867 = vmatpush2.bf16.msra.mxu0 0
    %3868 = vmatprep.mubr.bf16.mxu0 0
    %3869 = vmatmul.mubr.bf16.gmra.mxu0 %v3752
    %v3870 = vpop.f32.mrf.mxu0
    %v3871 = vadd.f32 %v3830, %v3870
    %v3872 = vpop.f32.mrf.mxu0
    %v3873 = vpop.f32.mrf.mxu0
    %v3874 = vadd.f32 %v3833, %v3873
    %v3875 = vpop.f32.mrf.mxu0
    %3876 = vdwg.mxu0
    %v3877 = vld [vmem:[%s5] sm:$0xff]
    %v3878 = vld [vmem:[%s5 + $0x8] sm:$0xff]
    %v3879 = vld [vmem:[%s7] sm:$0x1]
    %3881 = vset.pattern.permute.xlu0 0
    %3882 = vperm.xlu0 %3881, %v3877
    %v3883 = vpop.permute.xlu0 %3882
    %3886 = vset.pattern.permute.xlu0 0
    %3887 = vperm.xlu0 %3886, %v3878
    %v3888 = vpop.permute.xlu0 %3887
    %v3891 = vlaneseq
    %v3892 = vshrl.u32 %v3891, 7
    %v3893 = vsub.s32 0, %v3892
    %v3894 = vrot.slane %v3879, %v3893
    %v3896 = vmul.f32 %v3883, %v3894
    %v3897 = vmul.f32 %v3888, %v3894
    %v3898 = vadd.f32 %v3871, %v3896
    %v3899 = vadd.f32 %v3874, %v3897
    %v3900 = vld [vmem:[%s9] sm:$0xff]
    %v3901 = vld [vmem:[%s9 + $0x8] sm:$0xff]
    %v3902 = vld [vmem:[%s9 + $0x10] sm:$0xff]
    %v3903 = vld [vmem:[%s9 + $0x18] sm:$0xff]
    %v3904 = vld [vmem:[%s10] sm:$0x1]
    %v3906 = vlaneseq
    %v3907 = vshrl.u32 %v3906, 7
    %v3908 = vsub.s32 0, %v3907
    %v3909 = vrot.slane %v3904, %v3908
    %vm3911 = vcmask 261120
    %v3913 = vsel %vm3911, 0.0, 0
    %3915 = vmatprep.subr.mxu0 0.0
    %3916 = vmatpush1.msra.mxu0 0.0
    %3917 = vmatprep.subr.mxu0 0.0
    %3918 = vmatpush1.msra.mxu0 0.0
    %3919 = vmatprep.subr.mxu0 0.0
    %3920 = vmatpush1.msra.mxu0 0.0
    %3921 = vmatprep.subr.mxu0 0.0
    %3922 = vmatpush1.msra.mxu0 0.0
    %3923 = vmatprep.subr.mxu0 0.0
    %3924 = vmatpush1.msra.mxu0 0.0
    %3925 = vmatprep.subr.mxu0 0.0
    %3926 = vmatpush1.msra.mxu0 0.0
    %3927 = vmatprep.subr.mxu0 0.0
    %3928 = vmatpush1.msra.mxu0 0.0
    %3929 = vmatprep.subr.mxu0 0.0
    %3930 = vmatpush1.msra.mxu0 0.0
    %3931 = vmatprep.subr.mxu0 0.0
    %3932 = vmatpush1.msra.mxu0 0.0
    %3933 = vmatprep.subr.mxu0 0.0
    %3934 = vmatpush1.msra.mxu0 0.0
    %3935 = vmatprep.subr.mxu0 0.0
    %3936 = vmatpush1.msra.mxu0 0.0
    %3937 = vmatprep.subr.mxu0 0.0
    %3938 = vmatpush1.msra.mxu0 0.0
    %3939 = vmatprep.subr.mxu0 0.0
    %3940 = vmatpush1.msra.mxu0 %v3903
    %3941 = vmatprep.subr.mxu0 0.0
    %3942 = vmatpush1.msra.mxu0 %v3902
    %3943 = vmatprep.subr.mxu0 0.0
    %3944 = vmatpush1.msra.mxu0 %v3901
    %3945 = vmatprep.subr.mxu0 0.0
    %3946 = vmatpush1.msra.mxu0 %v3900
    %3947 = vmatprep.subr.mxu0 0.0
    %3948 = vmatpush2.msra.mxu0 0.0
    %3949 = vmatprep.subr.mxu0 0.0
    %3950 = vmatpush2.msra.mxu0 0.0
    %3951 = vmatprep.subr.mxu0 0.0
    %3952 = vmatpush2.msra.mxu0 0.0
    %3953 = vmatprep.subr.mxu0 0.0
    %3954 = vmatpush2.msra.mxu0 0.0
    %3955 = vmatprep.subr.mxu0 0.0
    %3956 = vmatpush2.msra.mxu0 0.0
    %3957 = vmatprep.subr.mxu0 0.0
    %3958 = vmatpush2.msra.mxu0 0.0
    %3959 = vmatprep.subr.mxu0 0.0
    %3960 = vmatpush2.msra.mxu0 0.0
    %3961 = vmatprep.subr.mxu0 0.0
    %3962 = vmatpush2.msra.mxu0 0.0
    %3963 = vmatprep.subr.mxu0 0.0
    %3964 = vmatpush2.msra.mxu0 0.0
    %3965 = vmatprep.subr.mxu0 0.0
    %3966 = vmatpush2.msra.mxu0 0.0
    %3967 = vmatprep.subr.mxu0 0.0
    %3968 = vmatpush2.msra.mxu0 0.0
    %3969 = vmatprep.subr.mxu0 0.0
    %3970 = vmatpush2.msra.mxu0 0.0
    %3971 = vmatprep.subr.mxu0 0.0
    %3972 = vmatpush2.msra.mxu0 0.0
    %3973 = vmatprep.subr.mxu0 0.0
    %3974 = vmatpush2.msra.mxu0 0.0
    %3975 = vmatprep.subr.mxu0 0.0
    %3976 = vmatpush2.msra.mxu0 0.0
    %3977 = vmatprep.subr.mxu0 0.0
    %3978 = vmatpush2.msra.mxu0 0.0
    %3979 = vmatprep.mubr.f32.mxu0 0.0
    %3980 = vmatmul.mubr.f32.gmra.mxu0 %v3913
    %v3981 = vpop.f32.mrf.mxu0
    %v3982 = vadd.f32 %v3909, %v3981
    %v3983 = vpop.f32.mrf.mxu0
    %3984 = vdwg.mxu0
    %v3985 = vadd.f32 %v3898, %v3982
    %v3986 = vsub.f32 0.0, %v3985
    %v3987 = vmul.f32 %v3986, 1.442695
    %v3988 = vpow.pop %v3987
    %v3989 = vadd.f32 %v3988, 1.0
    %v3990 = vrcp.pop %v3989
    %v3991 = vmul.f32 1.0, %v3990
    %3993 = vrot.lane.b32.xlu0 %v3982, 64
    %v3994 = vpop.permute.xlu0 %3993
    %v3996 = vmul.f32 %v3991, %v3994
    %3998 = vrot.lane.b32.xlu0 %v3996, 64
    %v3999 = vpop.permute.xlu0 %3998
    %v4001 = vadd.f32 %v3898, %v3999
    %v4002 = vtanh.pop %v4001
    %v4003 = vsub.f32 1.0, %v3991
    %4005 = vrot.lane.b32.xlu0 %v4002, 96
    %v4006 = vpop.permute.xlu0 %4005
    %v4008 = vmul.f32 %v4003, %v4006
    %v4009 = vmul.f32 %v3991, 0.0
    %v4010 = vadd.f32 %v4008, %v4009
    %4012 = vrot.lane.b32.xlu0 %v4010, 96
    %v4013 = vpop.permute.xlu0 %4012
    %v4014 = vsel %vm3911, %v4013, 0
    %4016 = vmatprep.subr.mxu0 0.0
    %4017 = vmatpush1.msra.mxu0 0.0
    %4018 = vmatprep.subr.mxu0 0.0
    %4019 = vmatpush1.msra.mxu0 0.0
    %4020 = vmatprep.subr.mxu0 0.0
    %4021 = vmatpush1.msra.mxu0 0.0
    %4022 = vmatprep.subr.mxu0 0.0
    %4023 = vmatpush1.msra.mxu0 0.0
    %4024 = vmatprep.subr.mxu0 0.0
    %4025 = vmatpush1.msra.mxu0 0.0
    %4026 = vmatprep.subr.mxu0 0.0
    %4027 = vmatpush1.msra.mxu0 0.0
    %4028 = vmatprep.subr.mxu0 0.0
    %4029 = vmatpush1.msra.mxu0 0.0
    %4030 = vmatprep.subr.mxu0 0.0
    %4031 = vmatpush1.msra.mxu0 0.0
    %4032 = vmatprep.subr.mxu0 0.0
    %4033 = vmatpush1.msra.mxu0 0.0
    %4034 = vmatprep.subr.mxu0 0.0
    %4035 = vmatpush1.msra.mxu0 0.0
    %4036 = vmatprep.subr.mxu0 0.0
    %4037 = vmatpush1.msra.mxu0 0.0
    %4038 = vmatprep.subr.mxu0 0.0
    %4039 = vmatpush1.msra.mxu0 0.0
    %4040 = vmatprep.subr.mxu0 0.0
    %4041 = vmatpush1.msra.mxu0 %v3903
    %4042 = vmatprep.subr.mxu0 0.0
    %4043 = vmatpush1.msra.mxu0 %v3902
    %4044 = vmatprep.subr.mxu0 0.0
    %4045 = vmatpush1.msra.mxu0 %v3901
    %4046 = vmatprep.subr.mxu0 0.0
    %4047 = vmatpush1.msra.mxu0 %v3900
    %4048 = vmatprep.subr.mxu0 0.0
    %4049 = vmatpush2.msra.mxu0 0.0
    %4050 = vmatprep.subr.mxu0 0.0
    %4051 = vmatpush2.msra.mxu0 0.0
    %4052 = vmatprep.subr.mxu0 0.0
    %4053 = vmatpush2.msra.mxu0 0.0
    %4054 = vmatprep.subr.mxu0 0.0
    %4055 = vmatpush2.msra.mxu0 0.0
    %4056 = vmatprep.subr.mxu0 0.0
    %4057 = vmatpush2.msra.mxu0 0.0
    %4058 = vmatprep.subr.mxu0 0.0
    %4059 = vmatpush2.msra.mxu0 0.0
    %4060 = vmatprep.subr.mxu0 0.0
    %4061 = vmatpush2.msra.mxu0 0.0
    %4062 = vmatprep.subr.mxu0 0.0
    %4063 = vmatpush2.msra.mxu0 0.0
    %4064 = vmatprep.subr.mxu0 0.0
    %4065 = vmatpush2.msra.mxu0 0.0
    %4066 = vmatprep.subr.mxu0 0.0
    %4067 = vmatpush2.msra.mxu0 0.0
    %4068 = vmatprep.subr.mxu0 0.0
    %4069 = vmatpush2.msra.mxu0 0.0
    %4070 = vmatprep.subr.mxu0 0.0
    %4071 = vmatpush2.msra.mxu0 0.0
    %4072 = vmatprep.subr.mxu0 0.0
    %4073 = vmatpush2.msra.mxu0 0.0
    %4074 = vmatprep.subr.mxu0 0.0
    %4075 = vmatpush2.msra.mxu0 0.0
    %4076 = vmatprep.subr.mxu0 0.0
    %4077 = vmatpush2.msra.mxu0 0.0
    %4078 = vmatprep.subr.mxu0 0.0
    %4079 = vmatpush2.msra.mxu0 0.0
    %4080 = vmatprep.mubr.f32.mxu0 0.0
    %4081 = vmatmul.mubr.f32.gmra.mxu0 %v4014
    %v4082 = vpop.f32.mrf.mxu0
    %v4083 = vadd.f32 %v3909, %v4082
    %v4084 = vpop.f32.mrf.mxu0
    %4085 = vdwg.mxu0
    %v4087 = vrot.slane %v4083, 6
    %v4089 = vadd.f32 %v3898, %v4087
    %v4090 = vsub.f32 0.0, %v4089
    %v4091 = vmul.f32 %v4090, 1.442695
    %v4092 = vpow.pop %v4091
    %v4093 = vadd.f32 %v4092, 1.0
    %v4094 = vrcp.pop %v4093
    %v4095 = vmul.f32 1.0, %v4094
    %4096 = vrot.lane.b32.xlu0 %v4087, 64
    %v4097 = vpop.permute.xlu0 %4096
    %v4099 = vmul.f32 %v4095, %v4097
    %4101 = vrot.lane.b32.xlu0 %v4099, 64
    %v4102 = vpop.permute.xlu0 %4101
    %v4104 = vadd.f32 %v3898, %v4102
    %v4105 = vtanh.pop %v4104
    %v4106 = vsub.f32 1.0, %v4095
    %4108 = vrot.lane.b32.xlu0 %v4105, 96
    %v4109 = vpop.permute.xlu0 %4108
    %v4111 = vmul.f32 %v4106, %v4109
    %v4112 = vrot.slane %v4010, 6
    %v4114 = vmul.f32 %v4095, %v4112
    %v4115 = vadd.f32 %v4111, %v4114
    %v4117 = vrot.slane %v4115, 2
    %4118 = vrot.lane.b32.xlu0 %v4117, 96
    %v4119 = vpop.permute.xlu0 %4118
    %v4120 = vsel %vm3911, %v4119, 0
    %4122 = vmatprep.subr.mxu0 0.0
    %4123 = vmatpush1.msra.mxu0 0.0
    %4124 = vmatprep.subr.mxu0 0.0
    %4125 = vmatpush1.msra.mxu0 0.0
    %4126 = vmatprep.subr.mxu0 0.0
    %4127 = vmatpush1.msra.mxu0 0.0
    %4128 = vmatprep.subr.mxu0 0.0
    %4129 = vmatpush1.msra.mxu0 0.0
    %4130 = vmatprep.subr.mxu0 0.0
    %4131 = vmatpush1.msra.mxu0 0.0
    %4132 = vmatprep.subr.mxu0 0.0
    %4133 = vmatpush1.msra.mxu0 0.0
    %4134 = vmatprep.subr.mxu0 0.0
    %4135 = vmatpush1.msra.mxu0 0.0
    %4136 = vmatprep.subr.mxu0 0.0
    %4137 = vmatpush1.msra.mxu0 0.0
    %4138 = vmatprep.subr.mxu0 0.0
    %4139 = vmatpush1.msra.mxu0 0.0
    %4140 = vmatprep.subr.mxu0 0.0
    %4141 = vmatpush1.msra.mxu0 0.0
    %4142 = vmatprep.subr.mxu0 0.0
    %4143 = vmatpush1.msra.mxu0 0.0
    %4144 = vmatprep.subr.mxu0 0.0
    %4145 = vmatpush1.msra.mxu0 0.0
    %4146 = vmatprep.subr.mxu0 0.0
    %4147 = vmatpush1.msra.mxu0 %v3903
    %4148 = vmatprep.subr.mxu0 0.0
    %4149 = vmatpush1.msra.mxu0 %v3902
    %4150 = vmatprep.subr.mxu0 0.0
    %4151 = vmatpush1.msra.mxu0 %v3901
    %4152 = vmatprep.subr.mxu0 0.0
    %4153 = vmatpush1.msra.mxu0 %v3900
    %4154 = vmatprep.subr.mxu0 0.0
    %4155 = vmatpush2.msra.mxu0 0.0
    %4156 = vmatprep.subr.mxu0 0.0
    %4157 = vmatpush2.msra.mxu0 0.0
    %4158 = vmatprep.subr.mxu0 0.0
    %4159 = vmatpush2.msra.mxu0 0.0
    %4160 = vmatprep.subr.mxu0 0.0
    %4161 = vmatpush2.msra.mxu0 0.0
    %4162 = vmatprep.subr.mxu0 0.0
    %4163 = vmatpush2.msra.mxu0 0.0
    %4164 = vmatprep.subr.mxu0 0.0
    %4165 = vmatpush2.msra.mxu0 0.0
    %4166 = vmatprep.subr.mxu0 0.0
    %4167 = vmatpush2.msra.mxu0 0.0
    %4168 = vmatprep.subr.mxu0 0.0
    %4169 = vmatpush2.msra.mxu0 0.0
    %4170 = vmatprep.subr.mxu0 0.0
    %4171 = vmatpush2.msra.mxu0 0.0
    %4172 = vmatprep.subr.mxu0 0.0
    %4173 = vmatpush2.msra.mxu0 0.0
    %4174 = vmatprep.subr.mxu0 0.0
    %4175 = vmatpush2.msra.mxu0 0.0
    %4176 = vmatprep.subr.mxu0 0.0
    %4177 = vmatpush2.msra.mxu0 0.0
    %4178 = vmatprep.subr.mxu0 0.0
    %4179 = vmatpush2.msra.mxu0 0.0
    %4180 = vmatprep.subr.mxu0 0.0
    %4181 = vmatpush2.msra.mxu0 0.0
    %4182 = vmatprep.subr.mxu0 0.0
    %4183 = vmatpush2.msra.mxu0 0.0
    %4184 = vmatprep.subr.mxu0 0.0
    %4185 = vmatpush2.msra.mxu0 0.0
    %4186 = vmatprep.mubr.f32.mxu0 0.0
    %4187 = vmatmul.mubr.f32.gmra.mxu0 %v4120
    %v4188 = vpop.f32.mrf.mxu0
    %v4189 = vadd.f32 %v3909, %v4188
    %v4190 = vpop.f32.mrf.mxu0
    %4191 = vdwg.mxu0
    %v4193 = vrot.slane %v4189, 4
    %v4195 = vadd.f32 %v3898, %v4193
    %v4196 = vsub.f32 0.0, %v4195
    %v4197 = vmul.f32 %v4196, 1.442695
    %v4198 = vpow.pop %v4197
    %v4199 = vadd.f32 %v4198, 1.0
    %v4200 = vrcp.pop %v4199
    %v4201 = vmul.f32 1.0, %v4200
    %4202 = vrot.lane.b32.xlu0 %v4193, 64
    %v4203 = vpop.permute.xlu0 %4202
    %v4205 = vmul.f32 %v4201, %v4203
    %4207 = vrot.lane.b32.xlu0 %v4205, 64
    %v4208 = vpop.permute.xlu0 %4207
    %v4210 = vadd.f32 %v3898, %v4208
    %v4211 = vtanh.pop %v4210
    %v4212 = vsub.f32 1.0, %v4201
    %4214 = vrot.lane.b32.xlu0 %v4211, 96
    %v4215 = vpop.permute.xlu0 %4214
    %v4217 = vmul.f32 %v4212, %v4215
    %v4218 = vrot.slane %v4115, 6
    %v4220 = vmul.f32 %v4201, %v4218
    %v4221 = vadd.f32 %v4217, %v4220
    %v4223 = vrot.slane %v4221, 4
    %4224 = vrot.lane.b32.xlu0 %v4223, 96
    %v4225 = vpop.permute.xlu0 %4224
    %v4226 = vsel %vm3911, %v4225, 0
    %4228 = vmatprep.subr.mxu0 0.0
    %4229 = vmatpush1.msra.mxu0 0.0
    %4230 = vmatprep.subr.mxu0 0.0
    %4231 = vmatpush1.msra.mxu0 0.0
    %4232 = vmatprep.subr.mxu0 0.0
    %4233 = vmatpush1.msra.mxu0 0.0
    %4234 = vmatprep.subr.mxu0 0.0
    %4235 = vmatpush1.msra.mxu0 0.0
    %4236 = vmatprep.subr.mxu0 0.0
    %4237 = vmatpush1.msra.mxu0 0.0
    %4238 = vmatprep.subr.mxu0 0.0
    %4239 = vmatpush1.msra.mxu0 0.0
    %4240 = vmatprep.subr.mxu0 0.0
    %4241 = vmatpush1.msra.mxu0 0.0
    %4242 = vmatprep.subr.mxu0 0.0
    %4243 = vmatpush1.msra.mxu0 0.0
    %4244 = vmatprep.subr.mxu0 0.0
    %4245 = vmatpush1.msra.mxu0 0.0
    %4246 = vmatprep.subr.mxu0 0.0
    %4247 = vmatpush1.msra.mxu0 0.0
    %4248 = vmatprep.subr.mxu0 0.0
    %4249 = vmatpush1.msra.mxu0 0.0
    %4250 = vmatprep.subr.mxu0 0.0
    %4251 = vmatpush1.msra.mxu0 0.0
    %4252 = vmatprep.subr.mxu0 0.0
    %4253 = vmatpush1.msra.mxu0 %v3903
    %4254 = vmatprep.subr.mxu0 0.0
    %4255 = vmatpush1.msra.mxu0 %v3902
    %4256 = vmatprep.subr.mxu0 0.0
    %4257 = vmatpush1.msra.mxu0 %v3901
    %4258 = vmatprep.subr.mxu0 0.0
    %4259 = vmatpush1.msra.mxu0 %v3900
    %4260 = vmatprep.subr.mxu0 0.0
    %4261 = vmatpush2.msra.mxu0 0.0
    %4262 = vmatprep.subr.mxu0 0.0
    %4263 = vmatpush2.msra.mxu0 0.0
    %4264 = vmatprep.subr.mxu0 0.0
    %4265 = vmatpush2.msra.mxu0 0.0
    %4266 = vmatprep.subr.mxu0 0.0
    %4267 = vmatpush2.msra.mxu0 0.0
    %4268 = vmatprep.subr.mxu0 0.0
    %4269 = vmatpush2.msra.mxu0 0.0
    %4270 = vmatprep.subr.mxu0 0.0
    %4271 = vmatpush2.msra.mxu0 0.0
    %4272 = vmatprep.subr.mxu0 0.0
    %4273 = vmatpush2.msra.mxu0 0.0
    %4274 = vmatprep.subr.mxu0 0.0
    %4275 = vmatpush2.msra.mxu0 0.0
    %4276 = vmatprep.subr.mxu0 0.0
    %4277 = vmatpush2.msra.mxu0 0.0
    %4278 = vmatprep.subr.mxu0 0.0
    %4279 = vmatpush2.msra.mxu0 0.0
    %4280 = vmatprep.subr.mxu0 0.0
    %4281 = vmatpush2.msra.mxu0 0.0
    %4282 = vmatprep.subr.mxu0 0.0
    %4283 = vmatpush2.msra.mxu0 0.0
    %4284 = vmatprep.subr.mxu0 0.0
    %4285 = vmatpush2.msra.mxu0 0.0
    %4286 = vmatprep.subr.mxu0 0.0
    %4287 = vmatpush2.msra.mxu0 0.0
    %4288 = vmatprep.subr.mxu0 0.0
    %4289 = vmatpush2.msra.mxu0 0.0
    %4290 = vmatprep.subr.mxu0 0.0
    %4291 = vmatpush2.msra.mxu0 0.0
    %4292 = vmatprep.mubr.f32.mxu0 0.0
    %4293 = vmatmul.mubr.f32.gmra.mxu0 %v4226
    %v4294 = vpop.f32.mrf.mxu0
    %v4295 = vadd.f32 %v3909, %v4294
    %v4296 = vpop.f32.mrf.mxu0
    %4297 = vdwg.mxu0
    %v4299 = vrot.slane %v4295, 2
    %v4301 = vadd.f32 %v3898, %v4299
    %v4302 = vsub.f32 0.0, %v4301
    %v4303 = vmul.f32 %v4302, 1.442695
    %v4304 = vpow.pop %v4303
    %v4305 = vadd.f32 %v4304, 1.0
    %v4306 = vrcp.pop %v4305
    %v4307 = vmul.f32 1.0, %v4306
    %4308 = vrot.lane.b32.xlu0 %v4299, 64
    %v4309 = vpop.permute.xlu0 %4308
    %v4311 = vmul.f32 %v4307, %v4309
    %4313 = vrot.lane.b32.xlu0 %v4311, 64
    %v4314 = vpop.permute.xlu0 %4313
    %v4316 = vadd.f32 %v3898, %v4314
    %v4317 = vtanh.pop %v4316
    %v4318 = vsub.f32 1.0, %v4307
    %4320 = vrot.lane.b32.xlu0 %v4317, 96
    %v4321 = vpop.permute.xlu0 %4320
    %v4323 = vmul.f32 %v4318, %v4321
    %v4324 = vrot.slane %v4221, 6
    %v4326 = vmul.f32 %v4307, %v4324
    %v4327 = vadd.f32 %v4323, %v4326
    %v4329 = vrot.slane %v4327, 6
    %4330 = vrot.lane.b32.xlu0 %v4329, 96
    %v4331 = vpop.permute.xlu0 %4330
    %v4332 = vsel %vm3911, %v4331, 0
    %4334 = vmatprep.subr.mxu0 0.0
    %4335 = vmatpush1.msra.mxu0 0.0
    %4336 = vmatprep.subr.mxu0 0.0
    %4337 = vmatpush1.msra.mxu0 0.0
    %4338 = vmatprep.subr.mxu0 0.0
    %4339 = vmatpush1.msra.mxu0 0.0
    %4340 = vmatprep.subr.mxu0 0.0
    %4341 = vmatpush1.msra.mxu0 0.0
    %4342 = vmatprep.subr.mxu0 0.0
    %4343 = vmatpush1.msra.mxu0 0.0
    %4344 = vmatprep.subr.mxu0 0.0
    %4345 = vmatpush1.msra.mxu0 0.0
    %4346 = vmatprep.subr.mxu0 0.0
    %4347 = vmatpush1.msra.mxu0 0.0
    %4348 = vmatprep.subr.mxu0 0.0
    %4349 = vmatpush1.msra.mxu0 0.0
    %4350 = vmatprep.subr.mxu0 0.0
    %4351 = vmatpush1.msra.mxu0 0.0
    %4352 = vmatprep.subr.mxu0 0.0
    %4353 = vmatpush1.msra.mxu0 0.0
    %4354 = vmatprep.subr.mxu0 0.0
    %4355 = vmatpush1.msra.mxu0 0.0
    %4356 = vmatprep.subr.mxu0 0.0
    %4357 = vmatpush1.msra.mxu0 0.0
    %4358 = vmatprep.subr.mxu0 0.0
    %4359 = vmatpush1.msra.mxu0 %v3903
    %4360 = vmatprep.subr.mxu0 0.0
    %4361 = vmatpush1.msra.mxu0 %v3902
    %4362 = vmatprep.subr.mxu0 0.0
    %4363 = vmatpush1.msra.mxu0 %v3901
    %4364 = vmatprep.subr.mxu0 0.0
    %4365 = vmatpush1.msra.mxu0 %v3900
    %4366 = vmatprep.subr.mxu0 0.0
    %4367 = vmatpush2.msra.mxu0 0.0
    %4368 = vmatprep.subr.mxu0 0.0
    %4369 = vmatpush2.msra.mxu0 0.0
    %4370 = vmatprep.subr.mxu0 0.0
    %4371 = vmatpush2.msra.mxu0 0.0
    %4372 = vmatprep.subr.mxu0 0.0
    %4373 = vmatpush2.msra.mxu0 0.0
    %4374 = vmatprep.subr.mxu0 0.0
    %4375 = vmatpush2.msra.mxu0 0.0
    %4376 = vmatprep.subr.mxu0 0.0
    %4377 = vmatpush2.msra.mxu0 0.0
    %4378 = vmatprep.subr.mxu0 0.0
    %4379 = vmatpush2.msra.mxu0 0.0
    %4380 = vmatprep.subr.mxu0 0.0
    %4381 = vmatpush2.msra.mxu0 0.0
    %4382 = vmatprep.subr.mxu0 0.0
    %4383 = vmatpush2.msra.mxu0 0.0
    %4384 = vmatprep.subr.mxu0 0.0
    %4385 = vmatpush2.msra.mxu0 0.0
    %4386 = vmatprep.subr.mxu0 0.0
    %4387 = vmatpush2.msra.mxu0 0.0
    %4388 = vmatprep.subr.mxu0 0.0
    %4389 = vmatpush2.msra.mxu0 0.0
    %4390 = vmatprep.subr.mxu0 0.0
    %4391 = vmatpush2.msra.mxu0 0.0
    %4392 = vmatprep.subr.mxu0 0.0
    %4393 = vmatpush2.msra.mxu0 0.0
    %4394 = vmatprep.subr.mxu0 0.0
    %4395 = vmatpush2.msra.mxu0 0.0
    %4396 = vmatprep.subr.mxu0 0.0
    %4397 = vmatpush2.msra.mxu0 0.0
    %4398 = vmatprep.mubr.f32.mxu0 0.0
    %4399 = vmatmul.mubr.f32.gmra.mxu0 %v4332
    %v4400 = vpop.f32.mrf.mxu0
    %v4401 = vadd.f32 %v3909, %v4400
    %v4402 = vpop.f32.mrf.mxu0
    %4403 = vdwg.mxu0
    %v4404 = vadd.f32 %v3899, %v4401
    %v4405 = vsub.f32 0.0, %v4404
    %v4406 = vmul.f32 %v4405, 1.442695
    %v4407 = vpow.pop %v4406
    %v4408 = vadd.f32 %v4407, 1.0
    %v4409 = vrcp.pop %v4408
    %v4410 = vmul.f32 1.0, %v4409
    %4412 = vrot.lane.b32.xlu0 %v4401, 64
    %v4413 = vpop.permute.xlu0 %4412
    %v4415 = vmul.f32 %v4410, %v4413
    %4417 = vrot.lane.b32.xlu0 %v4415, 64
    %v4418 = vpop.permute.xlu0 %4417
    %v4420 = vadd.f32 %v3899, %v4418
    %v4421 = vtanh.pop %v4420
    %v4422 = vsub.f32 1.0, %v4410
    %4424 = vrot.lane.b32.xlu0 %v4421, 96
    %v4425 = vpop.permute.xlu0 %4424
    %v4427 = vmul.f32 %v4422, %v4425
    %v4429 = vmul.f32 %v4410, %v4329
    %v4430 = vadd.f32 %v4427, %v4429
    %4432 = vrot.lane.b32.xlu0 %v4430, 96
    %v4433 = vpop.permute.xlu0 %4432
    %v4434 = vsel %vm3911, %v4433, 0
    %4436 = vmatprep.subr.mxu0 0.0
    %4437 = vmatpush1.msra.mxu0 0.0
    %4438 = vmatprep.subr.mxu0 0.0
    %4439 = vmatpush1.msra.mxu0 0.0
    %4440 = vmatprep.subr.mxu0 0.0
    %4441 = vmatpush1.msra.mxu0 0.0
    %4442 = vmatprep.subr.mxu0 0.0
    %4443 = vmatpush1.msra.mxu0 0.0
    %4444 = vmatprep.subr.mxu0 0.0
    %4445 = vmatpush1.msra.mxu0 0.0
    %4446 = vmatprep.subr.mxu0 0.0
    %4447 = vmatpush1.msra.mxu0 0.0
    %4448 = vmatprep.subr.mxu0 0.0
    %4449 = vmatpush1.msra.mxu0 0.0
    %4450 = vmatprep.subr.mxu0 0.0
    %4451 = vmatpush1.msra.mxu0 0.0
    %4452 = vmatprep.subr.mxu0 0.0
    %4453 = vmatpush1.msra.mxu0 0.0
    %4454 = vmatprep.subr.mxu0 0.0
    %4455 = vmatpush1.msra.mxu0 0.0
    %4456 = vmatprep.subr.mxu0 0.0
    %4457 = vmatpush1.msra.mxu0 0.0
    %4458 = vmatprep.subr.mxu0 0.0
    %4459 = vmatpush1.msra.mxu0 0.0
    %4460 = vmatprep.subr.mxu0 0.0
    %4461 = vmatpush1.msra.mxu0 %v3903
    %4462 = vmatprep.subr.mxu0 0.0
    %4463 = vmatpush1.msra.mxu0 %v3902
    %4464 = vmatprep.subr.mxu0 0.0
    %4465 = vmatpush1.msra.mxu0 %v3901
    %4466 = vmatprep.subr.mxu0 0.0
    %4467 = vmatpush1.msra.mxu0 %v3900
    %4468 = vmatprep.subr.mxu0 0.0
    %4469 = vmatpush2.msra.mxu0 0.0
    %4470 = vmatprep.subr.mxu0 0.0
    %4471 = vmatpush2.msra.mxu0 0.0
    %4472 = vmatprep.subr.mxu0 0.0
    %4473 = vmatpush2.msra.mxu0 0.0
    %4474 = vmatprep.subr.mxu0 0.0
    %4475 = vmatpush2.msra.mxu0 0.0
    %4476 = vmatprep.subr.mxu0 0.0
    %4477 = vmatpush2.msra.mxu0 0.0
    %4478 = vmatprep.subr.mxu0 0.0
    %4479 = vmatpush2.msra.mxu0 0.0
    %4480 = vmatprep.subr.mxu0 0.0
    %4481 = vmatpush2.msra.mxu0 0.0
    %4482 = vmatprep.subr.mxu0 0.0
    %4483 = vmatpush2.msra.mxu0 0.0
    %4484 = vmatprep.subr.mxu0 0.0
    %4485 = vmatpush2.msra.mxu0 0.0
    %4486 = vmatprep.subr.mxu0 0.0
    %4487 = vmatpush2.msra.mxu0 0.0
    %4488 = vmatprep.subr.mxu0 0.0
    %4489 = vmatpush2.msra.mxu0 0.0
    %4490 = vmatprep.subr.mxu0 0.0
    %4491 = vmatpush2.msra.mxu0 0.0
    %4492 = vmatprep.subr.mxu0 0.0
    %4493 = vmatpush2.msra.mxu0 0.0
    %4494 = vmatprep.subr.mxu0 0.0
    %4495 = vmatpush2.msra.mxu0 0.0
    %4496 = vmatprep.subr.mxu0 0.0
    %4497 = vmatpush2.msra.mxu0 0.0
    %4498 = vmatprep.subr.mxu0 0.0
    %4499 = vmatpush2.msra.mxu0 0.0
    %4500 = vmatprep.mubr.f32.mxu0 0.0
    %4501 = vmatmul.mubr.f32.gmra.mxu0 %v4434
    %v4502 = vpop.f32.mrf.mxu0
    %v4503 = vadd.f32 %v3909, %v4502
    %v4504 = vpop.f32.mrf.mxu0
    %4505 = vdwg.mxu0
    %v4507 = vrot.slane %v4503, 6
    %v4509 = vadd.f32 %v3899, %v4507
    %v4510 = vsub.f32 0.0, %v4509
    %v4511 = vmul.f32 %v4510, 1.442695
    %v4512 = vpow.pop %v4511
    %v4513 = vadd.f32 %v4512, 1.0
    %v4514 = vrcp.pop %v4513
    %v4515 = vmul.f32 1.0, %v4514
    %4516 = vrot.lane.b32.xlu0 %v4507, 64
    %v4517 = vpop.permute.xlu0 %4516
    %v4519 = vmul.f32 %v4515, %v4517
    %4521 = vrot.lane.b32.xlu0 %v4519, 64
    %v4522 = vpop.permute.xlu0 %4521
    %v4524 = vadd.f32 %v3899, %v4522
    %v4525 = vtanh.pop %v4524
    %v4526 = vsub.f32 1.0, %v4515
    %4528 = vrot.lane.b32.xlu0 %v4525, 96
    %v4529 = vpop.permute.xlu0 %4528
    %v4531 = vmul.f32 %v4526, %v4529
    %v4532 = vrot.slane %v4430, 6
    %v4534 = vmul.f32 %v4515, %v4532
    %v4535 = vadd.f32 %v4531, %v4534
    %v4537 = vrot.slane %v4535, 2
    %4538 = vrot.lane.b32.xlu0 %v4537, 96
    %v4539 = vpop.permute.xlu0 %4538
    %v4540 = vsel %vm3911, %v4539, 0
    %4542 = vmatprep.subr.mxu0 0.0
    %4543 = vmatpush1.msra.mxu0 0.0
    %4544 = vmatprep.subr.mxu0 0.0
    %4545 = vmatpush1.msra.mxu0 0.0
    %4546 = vmatprep.subr.mxu0 0.0
    %4547 = vmatpush1.msra.mxu0 0.0
    %4548 = vmatprep.subr.mxu0 0.0
    %4549 = vmatpush1.msra.mxu0 0.0
    %4550 = vmatprep.subr.mxu0 0.0
    %4551 = vmatpush1.msra.mxu0 0.0
    %4552 = vmatprep.subr.mxu0 0.0
    %4553 = vmatpush1.msra.mxu0 0.0
    %4554 = vmatprep.subr.mxu0 0.0
    %4555 = vmatpush1.msra.mxu0 0.0
    %4556 = vmatprep.subr.mxu0 0.0
    %4557 = vmatpush1.msra.mxu0 0.0
    %4558 = vmatprep.subr.mxu0 0.0
    %4559 = vmatpush1.msra.mxu0 0.0
    %4560 = vmatprep.subr.mxu0 0.0
    %4561 = vmatpush1.msra.mxu0 0.0
    %4562 = vmatprep.subr.mxu0 0.0
    %4563 = vmatpush1.msra.mxu0 0.0
    %4564 = vmatprep.subr.mxu0 0.0
    %4565 = vmatpush1.msra.mxu0 0.0
    %4566 = vmatprep.subr.mxu0 0.0
    %4567 = vmatpush1.msra.mxu0 %v3903
    %4568 = vmatprep.subr.mxu0 0.0
    %4569 = vmatpush1.msra.mxu0 %v3902
    %4570 = vmatprep.subr.mxu0 0.0
    %4571 = vmatpush1.msra.mxu0 %v3901
    %4572 = vmatprep.subr.mxu0 0.0
    %4573 = vmatpush1.msra.mxu0 %v3900
    %4574 = vmatprep.subr.mxu0 0.0
    %4575 = vmatpush2.msra.mxu0 0.0
    %4576 = vmatprep.subr.mxu0 0.0
    %4577 = vmatpush2.msra.mxu0 0.0
    %4578 = vmatprep.subr.mxu0 0.0
    %4579 = vmatpush2.msra.mxu0 0.0
    %4580 = vmatprep.subr.mxu0 0.0
    %4581 = vmatpush2.msra.mxu0 0.0
    %4582 = vmatprep.subr.mxu0 0.0
    %4583 = vmatpush2.msra.mxu0 0.0
    %4584 = vmatprep.subr.mxu0 0.0
    %4585 = vmatpush2.msra.mxu0 0.0
    %4586 = vmatprep.subr.mxu0 0.0
    %4587 = vmatpush2.msra.mxu0 0.0
    %4588 = vmatprep.subr.mxu0 0.0
    %4589 = vmatpush2.msra.mxu0 0.0
    %4590 = vmatprep.subr.mxu0 0.0
    %4591 = vmatpush2.msra.mxu0 0.0
    %4592 = vmatprep.subr.mxu0 0.0
    %4593 = vmatpush2.msra.mxu0 0.0
    %4594 = vmatprep.subr.mxu0 0.0
    %4595 = vmatpush2.msra.mxu0 0.0
    %4596 = vmatprep.subr.mxu0 0.0
    %4597 = vmatpush2.msra.mxu0 0.0
    %4598 = vmatprep.subr.mxu0 0.0
    %4599 = vmatpush2.msra.mxu0 0.0
    %4600 = vmatprep.subr.mxu0 0.0
    %4601 = vmatpush2.msra.mxu0 0.0
    %4602 = vmatprep.subr.mxu0 0.0
    %4603 = vmatpush2.msra.mxu0 0.0
    %4604 = vmatprep.subr.mxu0 0.0
    %4605 = vmatpush2.msra.mxu0 0.0
    %4606 = vmatprep.mubr.f32.mxu0 0.0
    %4607 = vmatmul.mubr.f32.gmra.mxu0 %v4540
    %v4608 = vpop.f32.mrf.mxu0
    %v4609 = vadd.f32 %v3909, %v4608
    %v4610 = vpop.f32.mrf.mxu0
    %4611 = vdwg.mxu0
    %v4613 = vrot.slane %v4609, 4
    %v4615 = vadd.f32 %v3899, %v4613
    %v4616 = vsub.f32 0.0, %v4615
    %v4617 = vmul.f32 %v4616, 1.442695
    %v4618 = vpow.pop %v4617
    %v4619 = vadd.f32 %v4618, 1.0
    %v4620 = vrcp.pop %v4619
    %v4621 = vmul.f32 1.0, %v4620
    %4622 = vrot.lane.b32.xlu0 %v4613, 64
    %v4623 = vpop.permute.xlu0 %4622
    %v4625 = vmul.f32 %v4621, %v4623
    %4627 = vrot.lane.b32.xlu0 %v4625, 64
    %v4628 = vpop.permute.xlu0 %4627
    %v4630 = vadd.f32 %v3899, %v4628
    %v4631 = vtanh.pop %v4630
    %v4632 = vsub.f32 1.0, %v4621
    %4634 = vrot.lane.b32.xlu0 %v4631, 96
    %v4635 = vpop.permute.xlu0 %4634
    %v4637 = vmul.f32 %v4632, %v4635
    %v4638 = vrot.slane %v4535, 6
    %v4640 = vmul.f32 %v4621, %v4638
    %v4641 = vadd.f32 %v4637, %v4640
    %v4643 = vrot.slane %v4641, 4
    %4644 = vrot.lane.b32.xlu0 %v4643, 96
    %v4645 = vpop.permute.xlu0 %4644
    %v4646 = vsel %vm3911, %v4645, 0
    %4648 = vmatprep.subr.mxu0 0.0
    %4649 = vmatpush1.msra.mxu0 0.0
    %4650 = vmatprep.subr.mxu0 0.0
    %4651 = vmatpush1.msra.mxu0 0.0
    %4652 = vmatprep.subr.mxu0 0.0
    %4653 = vmatpush1.msra.mxu0 0.0
    %4654 = vmatprep.subr.mxu0 0.0
    %4655 = vmatpush1.msra.mxu0 0.0
    %4656 = vmatprep.subr.mxu0 0.0
    %4657 = vmatpush1.msra.mxu0 0.0
    %4658 = vmatprep.subr.mxu0 0.0
    %4659 = vmatpush1.msra.mxu0 0.0
    %4660 = vmatprep.subr.mxu0 0.0
    %4661 = vmatpush1.msra.mxu0 0.0
    %4662 = vmatprep.subr.mxu0 0.0
    %4663 = vmatpush1.msra.mxu0 0.0
    %4664 = vmatprep.subr.mxu0 0.0
    %4665 = vmatpush1.msra.mxu0 0.0
    %4666 = vmatprep.subr.mxu0 0.0
    %4667 = vmatpush1.msra.mxu0 0.0
    %4668 = vmatprep.subr.mxu0 0.0
    %4669 = vmatpush1.msra.mxu0 0.0
    %4670 = vmatprep.subr.mxu0 0.0
    %4671 = vmatpush1.msra.mxu0 0.0
    %4672 = vmatprep.subr.mxu0 0.0
    %4673 = vmatpush1.msra.mxu0 %v3903
    %4674 = vmatprep.subr.mxu0 0.0
    %4675 = vmatpush1.msra.mxu0 %v3902
    %4676 = vmatprep.subr.mxu0 0.0
    %4677 = vmatpush1.msra.mxu0 %v3901
    %4678 = vmatprep.subr.mxu0 0.0
    %4679 = vmatpush1.msra.mxu0 %v3900
    %4680 = vmatprep.subr.mxu0 0.0
    %4681 = vmatpush2.msra.mxu0 0.0
    %4682 = vmatprep.subr.mxu0 0.0
    %4683 = vmatpush2.msra.mxu0 0.0
    %4684 = vmatprep.subr.mxu0 0.0
    %4685 = vmatpush2.msra.mxu0 0.0
    %4686 = vmatprep.subr.mxu0 0.0
    %4687 = vmatpush2.msra.mxu0 0.0
    %4688 = vmatprep.subr.mxu0 0.0
    %4689 = vmatpush2.msra.mxu0 0.0
    %4690 = vmatprep.subr.mxu0 0.0
    %4691 = vmatpush2.msra.mxu0 0.0
    %4692 = vmatprep.subr.mxu0 0.0
    %4693 = vmatpush2.msra.mxu0 0.0
    %4694 = vmatprep.subr.mxu0 0.0
    %4695 = vmatpush2.msra.mxu0 0.0
    %4696 = vmatprep.subr.mxu0 0.0
    %4697 = vmatpush2.msra.mxu0 0.0
    %4698 = vmatprep.subr.mxu0 0.0
    %4699 = vmatpush2.msra.mxu0 0.0
    %4700 = vmatprep.subr.mxu0 0.0
    %4701 = vmatpush2.msra.mxu0 0.0
    %4702 = vmatprep.subr.mxu0 0.0
    %4703 = vmatpush2.msra.mxu0 0.0
    %4704 = vmatprep.subr.mxu0 0.0
    %4705 = vmatpush2.msra.mxu0 0.0
    %4706 = vmatprep.subr.mxu0 0.0
    %4707 = vmatpush2.msra.mxu0 0.0
    %4708 = vmatprep.subr.mxu0 0.0
    %4709 = vmatpush2.msra.mxu0 0.0
    %4710 = vmatprep.subr.mxu0 0.0
    %4711 = vmatpush2.msra.mxu0 0.0
    %4712 = vmatprep.mubr.f32.mxu0 0.0
    %4713 = vmatmul.mubr.f32.gmra.mxu0 %v4646
    %v4714 = vpop.f32.mrf.mxu0
    %v4715 = vadd.f32 %v3909, %v4714
    %v4716 = vpop.f32.mrf.mxu0
    %4717 = vdwg.mxu0
    %v4719 = vrot.slane %v4715, 2
    %v4721 = vadd.f32 %v3899, %v4719
    %v4722 = vsub.f32 0.0, %v4721
    %v4723 = vmul.f32 %v4722, 1.442695
    %v4724 = vpow.pop %v4723
    %v4725 = vadd.f32 %v4724, 1.0
    %v4726 = vrcp.pop %v4725
    %v4727 = vmul.f32 1.0, %v4726
    %4728 = vrot.lane.b32.xlu0 %v4719, 64
    %v4729 = vpop.permute.xlu0 %4728
    %v4731 = vmul.f32 %v4727, %v4729
    %4733 = vrot.lane.b32.xlu0 %v4731, 64
    %v4734 = vpop.permute.xlu0 %4733
    %v4736 = vadd.f32 %v3899, %v4734
    %v4737 = vtanh.pop %v4736
    %v4738 = vsub.f32 1.0, %v4727
    %4740 = vrot.lane.b32.xlu0 %v4737, 96
    %v4741 = vpop.permute.xlu0 %4740
    %v4743 = vmul.f32 %v4738, %v4741
    %v4744 = vrot.slane %v4641, 6
    %v4746 = vmul.f32 %v4727, %v4744
    %v4747 = vadd.f32 %v4743, %v4746
    %4749 = vrot.lane.b32.xlu0 %v4747, 96
    %v4750 = vpop.permute.xlu0 %4749
    %vm4752 = vcmask 261126
    %4753 = vst.msk [vmem:[#allocation3 - $0x6] sm:$0xc0] %vm4752, %v4750
    // Predicated region
    $region46: #{rollout_encoder_forward.1} parent=1 // pred_check
      _
    $region47: #{rollout_encoder_forward.1} parent=1 // pred_check_branch
      %4755 = sbr.rel (0) target = $region49
    $region48: #{rollout_encoder_forward.1} parent=1 // pred_region
      %s4757 = ssub.s32 32, 32
      %4758 = vsyncadd [#allocation4], %s4757
      %s4760 = sshll.u32 [#allocation3], 4
      %s4761 = int_to_ptr.vmem [resolvable:$true] %s4760
      %4763 = dma.vmem_to_hbm [thread:$0]  %s4761, 32, %s11, [#allocation4]
    $region49: #{rollout_encoder_forward.1} parent=1 // pred_fallthru
      _
    // Predicated region
    $region50: #{rollout_encoder_forward.1} parent=1 // pred_check
      _
    $region51: #{rollout_encoder_forward.1} parent=1 // pred_check_branch
      %4765 = sbr.rel (0) target = $region53
    $region52: #{rollout_encoder_forward.1} parent=1 // pred_region
      %4766 = dma.done [#allocation4], 32
    $region53: #{rollout_encoder_forward.1} parent=1 // pred_fallthru
      _
    %4767 = vsyncpa [#allocation4], 1

</llo_original>
